<compile_context>
chip_gen: v6e
topology: v6e:2x2x1
jax: 0.10.0
libtpu: 0.0.40
codegen_flags: <defaults>
</compile_context>

<pallas_src>
import math
from functools import partial

import jax
import jax.numpy as jnp
import numpy as np
from jax.experimental import pallas as pl
from jax.experimental.pallas import tpu as pltpu


# --------------------------------------------------------------------------- kernel

def _residual_block_kernel(x_ref, w1_ref, s1_ref, b1_ref, w2_ref, s2_ref, b2_ref,
                           *rest, stride, has_downsample):
    """Whole residual block for one batch element, fully fused.

    conv1(3x3, stride) + BN1 + ReLU -> VMEM scratch (never touches HBM)
    conv2(3x3, 1)      + BN2
    (+ 1x1 strided downsample + BN | identity) -> ReLU -> out

    Each 3x3 conv is 9 accumulating MXU matmuls into acc_ref (f32).  For stride 2 the
    padded input is deinterleaved once into even/odd-column planes so every tap read
    is a contiguous (stride-1) sublane read.
    """
    if has_downsample:
        wd_ref, sd_ref, bd_ref = rest[0], rest[1], rest[2]
        rest = rest[3:]
    else:
        wd_ref = sd_ref = bd_ref = None

    if stride == 2:
        out_ref, xpad_ref, mid_ref, acc_ref, xe_ref, xo_ref = rest
    else:
        out_ref, xpad_ref, mid_ref, acc_ref = rest
        xe_ref = xo_ref = None

    Hp, Wp, Cin = xpad_ref.shape          # zero-padded input scratch
    H, W = Hp - 2, Wp - 2
    Hop, Wop, Cout = mid_ref.shape        # zero-padded intermediate scratch
    Ho, Wo = Hop - 2, Wop - 2
    xdt = xpad_ref.dtype
    mdt = mid_ref.dtype

    # ---- zero only the 1-pixel borders (interiors are fully overwritten each step;
    #      re-zeroed every step so megacore-sharded cores never see stale garbage).
    xpad_ref[pl.ds(0, 1), :, :] = jnp.zeros((1, Wp, Cin), xdt)
    xpad_ref[pl.ds(Hp - 1, 1), :, :] = jnp.zeros((1, Wp, Cin), xdt)
    xpad_ref[:, pl.ds(0, 1), :] = jnp.zeros((Hp, 1, Cin), xdt)
    xpad_ref[:, pl.ds(Wp - 1, 1), :] = jnp.zeros((Hp, 1, Cin), xdt)
    mid_ref[pl.ds(0, 1), :, :] = jnp.zeros((1, Wop, Cout), mdt)
    mid_ref[pl.ds(Hop - 1, 1), :, :] = jnp.zeros((1, Wop, Cout), mdt)
    mid_ref[:, pl.ds(0, 1), :] = jnp.zeros((Hop, 1, Cout), mdt)
    mid_ref[:, pl.ds(Wop - 1, 1), :] = jnp.zeros((Hop, 1, Cout), mdt)

    # ---- load input tile into the padded scratch interior
    xpad_ref[pl.ds(1, H), pl.ds(1, W), :] = x_ref[0]

    # ---- stride-2: deinterleave W once so every conv tap / downsample read is stride-1
    if stride == 2:
        n_even = (Wp + 1) // 2
        n_odd = Wp // 2
        xe_ref[...] = xpad_ref[:, pl.ds(0, n_even, 2), :]
        xo_ref[...] = xpad_ref[:, pl.ds(1, n_odd, 2), :]

    def conv1_tap(kh, kw):
        if stride == 1:
            return xpad_ref[pl.ds(kh, Ho), pl.ds(kw, Wo), :]
        if stride == 2:
            rows = pl.ds(kh, Ho, 2)
            if kw == 1:
                return xo_ref[rows, pl.ds(0, Wo), :]
            return xe_ref[rows, pl.ds(kw // 2, Wo), :]
        # general-stride fallback (rarely used): direct strided reads
        return xpad_ref[pl.ds(kh, Ho, stride), pl.ds(kw, Wo, stride), :]

    # ---- conv1 + BN1 + ReLU: 9 accumulating matmuls; first tap assigns (no zero-fill)
    t = 0
    for kh in range(3):
        for kw in range(3):
            tap = conv1_tap(kh, kw).reshape(Ho * Wo, Cin)
            part = jnp.dot(tap, w1_ref[t], preferred_element_type=jnp.float32)
            if t == 0:
                acc_ref[...] = part
            else:
                acc_ref[...] += part
            t += 1
    y1 = jnp.maximum(acc_ref[...] * s1_ref[...] + b1_ref[...], 0.0)
    mid_ref[pl.ds(1, Ho), pl.ds(1, Wo), :] = y1.astype(mdt).reshape(Ho, Wo, Cout)

    # ---- residual branch (computed from the padded input scratch)
    if has_downsample:
        if stride == 1:
            xs = xpad_ref[pl.ds(1, Ho), pl.ds(1, Wo), :]
        elif stride == 2:
            # output (i, j) <- padded (2i+1, 2j+1): odd-column plane, rows 1,3,...
            xs = xo_ref[pl.ds(1, Ho, 2), pl.ds(0, Wo), :]
        else:
            xs = xpad_ref[pl.ds(1, Ho, stride), pl.ds(1, Wo, stride), :]
        ident = jnp.dot(xs.reshape(Ho * Wo, Cin), wd_ref[...],
                        preferred_element_type=jnp.float32)
        ident = ident * sd_ref[...] + bd_ref[...]
    else:
        # valid only when stride == 1 and Cin == Cout, guaranteed by has_downsample
        ident = x_ref[0].reshape(Ho * Wo, Cout).astype(jnp.float32)

    # ---- conv2 + BN2 + add + ReLU
    t = 0
    for kh in range(3):
        for kw in range(3):
            tap = mid_ref[pl.ds(kh, Ho), pl.ds(kw, Wo), :].reshape(Ho * Wo, Cout)
            part = jnp.dot(tap, w2_ref[t], preferred_element_type=jnp.float32)
            if t == 0:
                acc_ref[...] = part
            else:
                acc_ref[...] += part
            t += 1
    y2 = acc_ref[...] * s2_ref[...] + b2_ref[...]

    out_ref[0] = jnp.maximum(y2 + ident, 0.0).astype(out_ref.dtype)


# --------------------------------------------------------------------------- wrapper

def residual_block_forward(x_nchw, p, stride, *, compute_dtype=jnp.bfloat16):
    """NCHW in / NCHW out (matches the PyTorch module).  compute_dtype defaults to
    bfloat16 (MXU-native on v5e/v6e/v7x, f32 accumulation inside); pass jnp.float32
    for bit-accurate comparison against an f32 reference."""
    N, Cin, H, W = x_nchw.shape
    Cout = p['w1'].shape[-1]
    Ho = (H + 2 - 3) // stride + 1
    Wo = (W + 2 - 3) // stride + 1
    out_dtype = x_nchw.dtype

    # boundary-only layout ops; pre-cast ONCE (halves input/weight DMA bytes for bf16)
    x = jnp.transpose(x_nchw, (0, 2, 3, 1)).astype(compute_dtype)   # NCHW -> NHWC
    w1 = p['w1'].reshape(9, Cin, Cout).astype(compute_dtype)        # (kh*3+kw, Cin, Cout)
    w2 = p['w2'].reshape(9, Cout, Cout).astype(compute_dtype)
    s1 = p['s1'].reshape(1, Cout); b1 = p['b1'].reshape(1, Cout)    # f32 folded BN affine
    s2 = p['s2'].reshape(1, Cout); b2 = p['b2'].reshape(1, Cout)

    args = [x, w1, s1, b1, w2, s2, b2]
    in_specs = [
        pl.BlockSpec((1, H, W, Cin), lambda b: (b, 0, 0, 0)),
        pl.BlockSpec((9, Cin, Cout), lambda b: (0, 0, 0)),
        pl.BlockSpec((1, Cout), lambda b: (0, 0)),
        pl.BlockSpec((1, Cout), lambda b: (0, 0)),
        pl.BlockSpec((9, Cout, Cout), lambda b: (0, 0, 0)),
        pl.BlockSpec((1, Cout), lambda b: (0, 0)),
        pl.BlockSpec((1, Cout), lambda b: (0, 0)),
    ]
    if p['has_downsample']:
        args += [p['wd'].astype(compute_dtype),
                 p['sd'].reshape(1, Cout), p['bd'].reshape(1, Cout)]
        in_specs += [
            pl.BlockSpec((Cin, Cout), lambda b: (0, 0)),
            pl.BlockSpec((1, Cout), lambda b: (0, 0)),
            pl.BlockSpec((1, Cout), lambda b: (0, 0)),
        ]

    scratch_shapes = [
        pltpu.VMEM((H + 2, W + 2, Cin), compute_dtype),       # zero-padded input
        pltpu.VMEM((Ho + 2, Wo + 2, Cout), compute_dtype),    # zero-padded conv1 output
        pltpu.VMEM((Ho * Wo, Cout), jnp.float32),             # MXU f32 accumulator
    ]
    if stride == 2:
        n_even = (W + 2 + 1) // 2
        n_odd = (W + 2) // 2
        scratch_shapes += [
            pltpu.VMEM((H + 2, n_even, Cin), compute_dtype),  # even-column plane
            pltpu.VMEM((H + 2, n_odd, Cin), compute_dtype),   # odd-column plane
        ]

    kernel = partial(_residual_block_kernel, stride=stride,
                     has_downsample=p['has_downsample'])

    # Output stored as (N, Ho*Wo, Cout) — the natural matmul layout; the wrapper
    # reshape below is a free row-major reinterpretation.
    out_flat = pl.pallas_call(
        kernel,
        out_shape=jax.ShapeDtypeStruct((N, Ho * Wo, Cout), out_dtype),
        grid=(N,),
        in_specs=in_specs,
        out_specs=pl.BlockSpec((1, Ho * Wo, Cout), lambda b: (b, 0, 0)),
        scratch_shapes=scratch_shapes,
        compiler_params=pltpu.CompilerParams(
            dimension_semantics=("parallel",),                 # batch across megacore TCs
            vmem_limit_bytes=48 * 1024 * 1024),                # <= v7x 64 MiB physical
    )(*args)

    out = out_flat.reshape(N, Ho, Wo, Cout)                    # free (contiguous)
    return jnp.transpose(out, (0, 3, 1, 2))                    # NHWC -> NCHW boundary


# --------------------------------------------------------------------------- params

def _bn_fold(gamma, beta, mean, var, eps=1e-5):
    scale = gamma / jnp.sqrt(var + eps)
    bias = beta - mean * scale
    return scale, bias


def init_params(key, cin, cout, stride):
    ks = list(jax.random.split(key, 12))

    def conv_w(k, shape):
        fan_in = shape[0] * shape[1] * shape[2] if len(shape) == 4 else shape[0]
        bound = 1.0 / math.sqrt(fan_in)
        return jax.random.uniform(k, shape, jnp.float32, -bound, bound)

    def bn(k, c):
        k1, k2, k3, k4 = jax.random.split(k, 4)
        gamma = jax.random.uniform(k1, (c,), jnp.float32, 0.5, 1.5)
        beta = 0.1 * jax.random.normal(k2, (c,), jnp.float32)
        mean = 0.1 * jax.random.normal(k3, (c,), jnp.float32)
        var = jax.random.uniform(k4, (c,), jnp.float32, 0.5, 1.5)
        return _bn_fold(gamma, beta, mean, var)

    p = {}
    p['w1'] = conv_w(ks[0], (3, 3, cin, cout))                 # HWIO
    p['s1'], p['b1'] = bn(ks[1], cout)
    p['w2'] = conv_w(ks[2], (3, 3, cout, cout))
    p['s2'], p['b2'] = bn(ks[3], cout)
    p['has_downsample'] = (stride != 1 or cin != cout)
    if p['has_downsample']:
        p['wd'] = conv_w(ks[4], (cin, cout))                   # 1x1 conv as (Cin, Cout)
        p['sd'], p['bd'] = bn(ks[5], cout)
    return p


# --------------------------------------------------------------------------- reference

def reference_forward(x_nchw, p, stride):
    x = jnp.transpose(x_nchw, (0, 2, 3, 1))

    def conv(a, w, s, pad):
        return jax.lax.conv_general_dilated(
            a, w, (s, s), pad, dimension_numbers=('NHWC', 'HWIO', 'NHWC'))

    out = conv(x, p['w1'], stride, [(1, 1), (1, 1)]) * p['s1'] + p['b1']
    out = jnp.maximum(out, 0.0)
    out = conv(out, p['w2'], 1, [(1, 1), (1, 1)]) * p['s2'] + p['b2']
    if p['has_downsample']:
        cin, cout = p['wd'].shape
        identity = conv(x, p['wd'].reshape(1, 1, cin, cout), stride,
                        [(0, 0), (0, 0)]) * p['sd'] + p['bd']
    else:
        identity = x
    out = jnp.maximum(out + identity, 0.0)
    return jnp.transpose(out, (0, 3, 1, 2))


# --------------------------------------------------------------------------- main

if __name__ == "__main__":
    key = jax.random.PRNGKey(0)
    kx, kp, kx2, kp2 = jax.random.split(key, 4)

    # config 1: stride 2 + channel change -> exercises the 1x1 downsample branch and
    # the even/odd column deinterleave.  f32 compute for an exact check vs reference.
    N, Cin, H, W = 2, 4, 16, 16
    Cout, stride = 8, 2
    x = jax.random.normal(kx, (N, Cin, H, W), jnp.float32)
    params = init_params(kp, Cin, Cout, stride)
    ref = jax.block_until_ready(reference_forward(x, params, stride))

    out_f32 = jax.block_until_ready(
        residual_block_forward(x, params, stride, compute_dtype=jnp.float32))
    assert out_f32.shape == (N, Cout, H // stride, W // stride)
    np.testing.assert_allclose(np.asarray(out_f32), np.asarray(ref), rtol=1e-4, atol=1e-4)

    # same config with the default bf16 compute path (MXU-native everywhere); the
    # looser tolerance accounts for bf16 input/weight rounding (f32 accumulation).
    out_bf16 = jax.block_until_ready(residual_block_forward(x, params, stride))
    np.testing.assert_allclose(np.asarray(out_bf16), np.asarray(ref), rtol=5e-2, atol=5e-2)

    # config 2: stride 1, Cin == Cout -> plain identity branch (no downsample)
    x2 = jax.random.normal(kx2, (N, 8, H, W), jnp.float32)
    params2 = init_params(kp2, 8, 8, 1)
    out2 = jax.block_until_ready(
        residual_block_forward(x2, params2, 1, compute_dtype=jnp.float32))
    ref2 = jax.block_until_ready(reference_forward(x2, params2, 1))
    assert out2.shape == (N, 8, H, W)
    np.testing.assert_allclose(np.asarray(out2), np.asarray(ref2), rtol=1e-4, atol=1e-4)

    print("KERNEL_OK")
</pallas_src>

<mosaic_0001>
module attributes {stable_mosaic.version = 11 : i64} {
  func.func @_residual_block_kernel(%arg0: i32, %arg1: memref<1x16x16x4xf32, #tpu.memory_space<vmem>>, %arg2: memref<9x4x8xf32, #tpu.memory_space<vmem>>, %arg3: memref<1x8xf32, #tpu.memory_space<vmem>>, %arg4: memref<1x8xf32, #tpu.memory_space<vmem>>, %arg5: memref<9x8x8xf32, #tpu.memory_space<vmem>>, %arg6: memref<1x8xf32, #tpu.memory_space<vmem>>, %arg7: memref<1x8xf32, #tpu.memory_space<vmem>>, %arg8: memref<4x8xf32, #tpu.memory_space<vmem>>, %arg9: memref<1x8xf32, #tpu.memory_space<vmem>>, %arg10: memref<1x8xf32, #tpu.memory_space<vmem>>, %arg11: memref<1x64x8xf32, #tpu.memory_space<vmem>>, %arg12: memref<18x18x4xf32, #tpu.memory_space<vmem>>, %arg13: memref<10x10x8xf32, #tpu.memory_space<vmem>>, %arg14: memref<64x8xf32, #tpu.memory_space<vmem>>, %arg15: memref<18x9x4xf32, #tpu.memory_space<vmem>>, %arg16: memref<18x9x4xf32, #tpu.memory_space<vmem>>) attributes {dimension_semantics = [#tpu.dimension_semantics<parallel>], iteration_bounds = array<i64: 2>, scalar_prefetch = 0 : i64, scratch_operands = 5 : i64, tpu.core_type = #tpu.core_type<tc>, window_params = [{transform_indices = @transform_0, window_bounds = array<i64: 1, 16, 16, 4>}, {pipeline_mode = #tpu.pipeline_mode<synchronous>, transform_indices = @transform_1, window_bounds = array<i64: 9, 4, 8>}, {pipeline_mode = #tpu.pipeline_mode<synchronous>, transform_indices = @transform_2, window_bounds = array<i64: 1, 8>}, {pipeline_mode = #tpu.pipeline_mode<synchronous>, transform_indices = @transform_3, window_bounds = array<i64: 1, 8>}, {pipeline_mode = #tpu.pipeline_mode<synchronous>, transform_indices = @transform_4, window_bounds = array<i64: 9, 8, 8>}, {pipeline_mode = #tpu.pipeline_mode<synchronous>, transform_indices = @transform_5, window_bounds = array<i64: 1, 8>}, {pipeline_mode = #tpu.pipeline_mode<synchronous>, transform_indices = @transform_6, window_bounds = array<i64: 1, 8>}, {pipeline_mode = #tpu.pipeline_mode<synchronous>, transform_indices = @transform_7, window_bounds = array<i64: 4, 8>}, {pipeline_mode = #tpu.pipeline_mode<synchronous>, transform_indices = @transform_8, window_bounds = array<i64: 1, 8>}, {pipeline_mode = #tpu.pipeline_mode<synchronous>, transform_indices = @transform_9, window_bounds = array<i64: 1, 8>}, {transform_indices = @transform_10, window_bounds = array<i64: 1, 64, 8>}]} {
    %cst = arith.constant 0.000000e+00 : f32
    %0 = vector.broadcast %cst : f32 to vector<1x18x4xf32>
    %c0 = arith.constant 0 : index
    %c0_0 = arith.constant 0 : index
    %c0_1 = arith.constant 0 : index
    %1 = vector.load %arg12[%c0, %c0_0, %c0_1] : memref<18x18x4xf32, #tpu.memory_space<vmem>>, vector<1x18x4xf32>
    tpu.vector_store %arg12[%c0, %c0_0, %c0_1], %0 {strides = array<i32>} : memref<18x18x4xf32, #tpu.memory_space<vmem>>, vector<1x18x4xf32>,
    %cst_2 = arith.constant 0.000000e+00 : f32
    %2 = vector.broadcast %cst_2 : f32 to vector<1x18x4xf32>
    %c17 = arith.constant 17 : index
    %c0_3 = arith.constant 0 : index
    %c0_4 = arith.constant 0 : index
    %3 = vector.load %arg12[%c17, %c0_3, %c0_4] : memref<18x18x4xf32, #tpu.memory_space<vmem>>, vector<1x18x4xf32>
    tpu.vector_store %arg12[%c17, %c0_3, %c0_4], %2 {strides = array<i32>} : memref<18x18x4xf32, #tpu.memory_space<vmem>>, vector<1x18x4xf32>,
    %cst_5 = arith.constant 0.000000e+00 : f32
    %4 = vector.broadcast %cst_5 : f32 to vector<18x1x4xf32>
    %c0_6 = arith.constant 0 : index
    %c0_7 = arith.constant 0 : index
    %c0_8 = arith.constant 0 : index
    %5 = vector.load %arg12[%c0_6, %c0_7, %c0_8] : memref<18x18x4xf32, #tpu.memory_space<vmem>>, vector<18x1x4xf32>
    tpu.vector_store %arg12[%c0_6, %c0_7, %c0_8], %4 {strides = array<i32>} : memref<18x18x4xf32, #tpu.memory_space<vmem>>, vector<18x1x4xf32>,
    %cst_9 = arith.constant 0.000000e+00 : f32
    %6 = vector.broadcast %cst_9 : f32 to vector<18x1x4xf32>
    %c0_10 = arith.constant 0 : index
    %c17_11 = arith.constant 17 : index
    %c0_12 = arith.constant 0 : index
    %7 = vector.load %arg12[%c0_10, %c17_11, %c0_12] : memref<18x18x4xf32, #tpu.memory_space<vmem>>, vector<18x1x4xf32>
    tpu.vector_store %arg12[%c0_10, %c17_11, %c0_12], %6 {strides = array<i32>} : memref<18x18x4xf32, #tpu.memory_space<vmem>>, vector<18x1x4xf32>,
    %cst_13 = arith.constant 0.000000e+00 : f32
    %8 = vector.broadcast %cst_13 : f32 to vector<1x10x8xf32>
    %c0_14 = arith.constant 0 : index
    %c0_15 = arith.constant 0 : index
    %c0_16 = arith.constant 0 : index
    %9 = vector.load %arg13[%c0_14, %c0_15, %c0_16] : memref<10x10x8xf32, #tpu.memory_space<vmem>>, vector<1x10x8xf32>
    tpu.vector_store %arg13[%c0_14, %c0_15, %c0_16], %8 {strides = array<i32>} : memref<10x10x8xf32, #tpu.memory_space<vmem>>, vector<1x10x8xf32>,
    %cst_17 = arith.constant 0.000000e+00 : f32
    %10 = vector.broadcast %cst_17 : f32 to vector<1x10x8xf32>
    %c9 = arith.constant 9 : index
    %c0_18 = arith.constant 0 : index
    %c0_19 = arith.constant 0 : index
    %11 = vector.load %arg13[%c9, %c0_18, %c0_19] : memref<10x10x8xf32, #tpu.memory_space<vmem>>, vector<1x10x8xf32>
    tpu.vector_store %arg13[%c9, %c0_18, %c0_19], %10 {strides = array<i32>} : memref<10x10x8xf32, #tpu.memory_space<vmem>>, vector<1x10x8xf32>,
    %cst_20 = arith.constant 0.000000e+00 : f32
    %12 = vector.broadcast %cst_20 : f32 to vector<10x1x8xf32>
    %c0_21 = arith.constant 0 : index
    %c0_22 = arith.constant 0 : index
    %c0_23 = arith.constant 0 : index
    %13 = vector.load %arg13[%c0_21, %c0_22, %c0_23] : memref<10x10x8xf32, #tpu.memory_space<vmem>>, vector<10x1x8xf32>
    tpu.vector_store %arg13[%c0_21, %c0_22, %c0_23], %12 {strides = array<i32>} : memref<10x10x8xf32, #tpu.memory_space<vmem>>, vector<10x1x8xf32>,
    %cst_24 = arith.constant 0.000000e+00 : f32
    %14 = vector.broadcast %cst_24 : f32 to vector<10x1x8xf32>
    %c0_25 = arith.constant 0 : index
    %c9_26 = arith.constant 9 : index
    %c0_27 = arith.constant 0 : index
    %15 = vector.load %arg13[%c0_25, %c9_26, %c0_27] : memref<10x10x8xf32, #tpu.memory_space<vmem>>, vector<10x1x8xf32>
    tpu.vector_store %arg13[%c0_25, %c9_26, %c0_27], %14 {strides = array<i32>} : memref<10x10x8xf32, #tpu.memory_space<vmem>>, vector<10x1x8xf32>,
    %c0_28 = arith.constant 0 : index
    %c0_29 = arith.constant 0 : index
    %c0_30 = arith.constant 0 : index
    %c0_31 = arith.constant 0 : index
    %16 = vector.load %arg1[%c0_28, %c0_29, %c0_30, %c0_31] : memref<1x16x16x4xf32, #tpu.memory_space<vmem>>, vector<1x16x16x4xf32>
    %17 = vector.shape_cast %16 : vector<1x16x16x4xf32> to vector<16x16x4xf32>
    %c1 = arith.constant 1 : index
    %c1_32 = arith.constant 1 : index
    %c0_33 = arith.constant 0 : index
    %18 = vector.load %arg12[%c1, %c1_32, %c0_33] : memref<18x18x4xf32, #tpu.memory_space<vmem>>, vector<16x16x4xf32>
    tpu.vector_store %arg12[%c1, %c1_32, %c0_33], %17 {strides = array<i32>} : memref<18x18x4xf32, #tpu.memory_space<vmem>>, vector<16x16x4xf32>,
    %c0_34 = arith.constant 0 : index
    %c0_35 = arith.constant 0 : index
    %c0_36 = arith.constant 0 : index
    %19 = tpu.strided_load %arg12[%c0_34, %c0_35, %c0_36] {strides = array<i32: 1, 2, 1>} : memref<18x18x4xf32, #tpu.memory_space<vmem>>, vector<18x9x4xf32>
    %c0_37 = arith.constant 0 : index
    %c0_38 = arith.constant 0 : index
    %c0_39 = arith.constant 0 : index
    %20 = vector.load %arg15[%c0_37, %c0_38, %c0_39] : memref<18x9x4xf32, #tpu.memory_space<vmem>>, vector<18x9x4xf32>
    tpu.vector_store %arg15[%c0_37, %c0_38, %c0_39], %19 {strides = array<i32>} : memref<18x9x4xf32, #tpu.memory_space<vmem>>, vector<18x9x4xf32>,
    %c0_40 = arith.constant 0 : index
    %c1_41 = arith.constant 1 : index
    %c0_42 = arith.constant 0 : index
    %21 = tpu.strided_load %arg12[%c0_40, %c1_41, %c0_42] {strides = array<i32: 1, 2, 1>} : memref<18x18x4xf32, #tpu.memory_space<vmem>>, vector<18x9x4xf32>
    %c0_43 = arith.constant 0 : index
    %c0_44 = arith.constant 0 : index
    %c0_45 = arith.constant 0 : index
    %22 = vector.load %arg16[%c0_43, %c0_44, %c0_45] : memref<18x9x4xf32, #tpu.memory_space<vmem>>, vector<18x9x4xf32>
    tpu.vector_store %arg16[%c0_43, %c0_44, %c0_45], %21 {strides = array<i32>} : memref<18x9x4xf32, #tpu.memory_space<vmem>>, vector<18x9x4xf32>,
    %c0_46 = arith.constant 0 : index
    %c0_47 = arith.constant 0 : index
    %c0_48 = arith.constant 0 : index
    %23 = tpu.strided_load %arg15[%c0_46, %c0_47, %c0_48] {strides = array<i32: 2, 1, 1>} : memref<18x9x4xf32, #tpu.memory_space<vmem>>, vector<8x8x4xf32>
    %24 = vector.shape_cast %23 : vector<8x8x4xf32> to vector<64x4xf32>
    %c0_49 = arith.constant 0 : index
    %c0_50 = arith.constant 0 : index
    %c0_51 = arith.constant 0 : index
    %25 = vector.load %arg2[%c0_49, %c0_50, %c0_51] : memref<9x4x8xf32, #tpu.memory_space<vmem>>, vector<1x4x8xf32>
    %26 = vector.shape_cast %25 : vector<1x4x8xf32> to vector<4x8xf32>
    %cst_52 = arith.constant dense<0.000000e+00> : vector<64x8xf32>
    %27 = tpu.matmul %24, %26, %cst_52 {dimension_numbers = #tpu.dot_dimension_numbers<[1], [0], [0], [1], [0, 0, 1, 1], [], []>} : vector<64x4xf32>, vector<4x8xf32>, vector<64x8xf32> -> vector<64x8xf32>
    %c0_53 = arith.constant 0 : index
    %c0_54 = arith.constant 0 : index
    %28 = vector.load %arg14[%c0_53, %c0_54] : memref<64x8xf32, #tpu.memory_space<vmem>>, vector<64x8xf32>
    tpu.vector_store %arg14[%c0_53, %c0_54], %27 {strides = array<i32>} : memref<64x8xf32, #tpu.memory_space<vmem>>, vector<64x8xf32>,
    %c0_55 = arith.constant 0 : index
    %c0_56 = arith.constant 0 : index
    %c0_57 = arith.constant 0 : index
    %29 = tpu.strided_load %arg16[%c0_55, %c0_56, %c0_57] {strides = array<i32: 2, 1, 1>} : memref<18x9x4xf32, #tpu.memory_space<vmem>>, vector<8x8x4xf32>
    %30 = vector.shape_cast %29 : vector<8x8x4xf32> to vector<64x4xf32>
    %c1_58 = arith.constant 1 : index
    %c0_59 = arith.constant 0 : index
    %c0_60 = arith.constant 0 : index
    %31 = vector.load %arg2[%c1_58, %c0_59, %c0_60] : memref<9x4x8xf32, #tpu.memory_space<vmem>>, vector<1x4x8xf32>
    %32 = vector.shape_cast %31 : vector<1x4x8xf32> to vector<4x8xf32>
    %cst_61 = arith.constant dense<0.000000e+00> : vector<64x8xf32>
    %33 = tpu.matmul %30, %32, %cst_61 {dimension_numbers = #tpu.dot_dimension_numbers<[1], [0], [0], [1], [0, 0, 1, 1], [], []>} : vector<64x4xf32>, vector<4x8xf32>, vector<64x8xf32> -> vector<64x8xf32>
    %c0_62 = arith.constant 0 : index
    %c0_63 = arith.constant 0 : index
    %34 = vector.load %arg14[%c0_62, %c0_63] : memref<64x8xf32, #tpu.memory_space<vmem>>, vector<64x8xf32>
    %35 = arith.addf %34, %33 : vector<64x8xf32>
    %c0_64 = arith.constant 0 : index
    %c0_65 = arith.constant 0 : index
    %36 = vector.load %arg14[%c0_64, %c0_65] : memref<64x8xf32, #tpu.memory_space<vmem>>, vector<64x8xf32>
    tpu.vector_store %arg14[%c0_64, %c0_65], %35 {strides = array<i32>} : memref<64x8xf32, #tpu.memory_space<vmem>>, vector<64x8xf32>,
    %c0_66 = arith.constant 0 : index
    %c1_67 = arith.constant 1 : index
    %c0_68 = arith.constant 0 : index
    %37 = tpu.strided_load %arg15[%c0_66, %c1_67, %c0_68] {strides = array<i32: 2, 1, 1>} : memref<18x9x4xf32, #tpu.memory_space<vmem>>, vector<8x8x4xf32>
    %38 = vector.shape_cast %37 : vector<8x8x4xf32> to vector<64x4xf32>
    %c2 = arith.constant 2 : index
    %c0_69 = arith.constant 0 : index
    %c0_70 = arith.constant 0 : index
    %39 = vector.load %arg2[%c2, %c0_69, %c0_70] : memref<9x4x8xf32, #tpu.memory_space<vmem>>, vector<1x4x8xf32>
    %40 = vector.shape_cast %39 : vector<1x4x8xf32> to vector<4x8xf32>
    %cst_71 = arith.constant dense<0.000000e+00> : vector<64x8xf32>
    %41 = tpu.matmul %38, %40, %cst_71 {dimension_numbers = #tpu.dot_dimension_numbers<[1], [0], [0], [1], [0, 0, 1, 1], [], []>} : vector<64x4xf32>, vector<4x8xf32>, vector<64x8xf32> -> vector<64x8xf32>
    %c0_72 = arith.constant 0 : index
    %c0_73 = arith.constant 0 : index
    %42 = vector.load %arg14[%c0_72, %c0_73] : memref<64x8xf32, #tpu.memory_space<vmem>>, vector<64x8xf32>
    %43 = arith.addf %42, %41 : vector<64x8xf32>
    %c0_74 = arith.constant 0 : index
    %c0_75 = arith.constant 0 : index
    %44 = vector.load %arg14[%c0_74, %c0_75] : memref<64x8xf32, #tpu.memory_space<vmem>>, vector<64x8xf32>
    tpu.vector_store %arg14[%c0_74, %c0_75], %43 {strides = array<i32>} : memref<64x8xf32, #tpu.memory_space<vmem>>, vector<64x8xf32>,
    %c1_76 = arith.constant 1 : index
    %c0_77 = arith.constant 0 : index
    %c0_78 = arith.constant 0 : index
    %45 = tpu.strided_load %arg15[%c1_76, %c0_77, %c0_78] {strides = array<i32: 2, 1, 1>} : memref<18x9x4xf32, #tpu.memory_space<vmem>>, vector<8x8x4xf32>
    %46 = vector.shape_cast %45 : vector<8x8x4xf32> to vector<64x4xf32>
    %c3 = arith.constant 3 : index
    %c0_79 = arith.constant 0 : index
    %c0_80 = arith.constant 0 : index
    %47 = vector.load %arg2[%c3, %c0_79, %c0_80] : memref<9x4x8xf32, #tpu.memory_space<vmem>>, vector<1x4x8xf32>
    %48 = vector.shape_cast %47 : vector<1x4x8xf32> to vector<4x8xf32>
    %cst_81 = arith.constant dense<0.000000e+00> : vector<64x8xf32>
    %49 = tpu.matmul %46, %48, %cst_81 {dimension_numbers = #tpu.dot_dimension_numbers<[1], [0], [0], [1], [0, 0, 1, 1], [], []>} : vector<64x4xf32>, vector<4x8xf32>, vector<64x8xf32> -> vector<64x8xf32>
    %c0_82 = arith.constant 0 : index
    %c0_83 = arith.constant 0 : index
    %50 = vector.load %arg14[%c0_82, %c0_83] : memref<64x8xf32, #tpu.memory_space<vmem>>, vector<64x8xf32>
    %51 = arith.addf %50, %49 : vector<64x8xf32>
    %c0_84 = arith.constant 0 : index
    %c0_85 = arith.constant 0 : index
    %52 = vector.load %arg14[%c0_84, %c0_85] : memref<64x8xf32, #tpu.memory_space<vmem>>, vector<64x8xf32>
    tpu.vector_store %arg14[%c0_84, %c0_85], %51 {strides = array<i32>} : memref<64x8xf32, #tpu.memory_space<vmem>>, vector<64x8xf32>,
    %c1_86 = arith.constant 1 : index
    %c0_87 = arith.constant 0 : index
    %c0_88 = arith.constant 0 : index
    %53 = tpu.strided_load %arg16[%c1_86, %c0_87, %c0_88] {strides = array<i32: 2, 1, 1>} : memref<18x9x4xf32, #tpu.memory_space<vmem>>, vector<8x8x4xf32>
    %54 = vector.shape_cast %53 : vector<8x8x4xf32> to vector<64x4xf32>
    %c4 = arith.constant 4 : index
    %c0_89 = arith.constant 0 : index
    %c0_90 = arith.constant 0 : index
    %55 = vector.load %arg2[%c4, %c0_89, %c0_90] : memref<9x4x8xf32, #tpu.memory_space<vmem>>, vector<1x4x8xf32>
    %56 = vector.shape_cast %55 : vector<1x4x8xf32> to vector<4x8xf32>
    %cst_91 = arith.constant dense<0.000000e+00> : vector<64x8xf32>
    %57 = tpu.matmul %54, %56, %cst_91 {dimension_numbers = #tpu.dot_dimension_numbers<[1], [0], [0], [1], [0, 0, 1, 1], [], []>} : vector<64x4xf32>, vector<4x8xf32>, vector<64x8xf32> -> vector<64x8xf32>
    %c0_92 = arith.constant 0 : index
    %c0_93 = arith.constant 0 : index
    %58 = vector.load %arg14[%c0_92, %c0_93] : memref<64x8xf32, #tpu.memory_space<vmem>>, vector<64x8xf32>
    %59 = arith.addf %58, %57 : vector<64x8xf32>
    %c0_94 = arith.constant 0 : index
    %c0_95 = arith.constant 0 : index
    %60 = vector.load %arg14[%c0_94, %c0_95] : memref<64x8xf32, #tpu.memory_space<vmem>>, vector<64x8xf32>
    tpu.vector_store %arg14[%c0_94, %c0_95], %59 {strides = array<i32>} : memref<64x8xf32, #tpu.memory_space<vmem>>, vector<64x8xf32>,
    %c1_96 = arith.constant 1 : index
    %c1_97 = arith.constant 1 : index
    %c0_98 = arith.constant 0 : index
    %61 = tpu.strided_load %arg15[%c1_96, %c1_97, %c0_98] {strides = array<i32: 2, 1, 1>} : memref<18x9x4xf32, #tpu.memory_space<vmem>>, vector<8x8x4xf32>
    %62 = vector.shape_cast %61 : vector<8x8x4xf32> to vector<64x4xf32>
    %c5 = arith.constant 5 : index
    %c0_99 = arith.constant 0 : index
    %c0_100 = arith.constant 0 : index
    %63 = vector.load %arg2[%c5, %c0_99, %c0_100] : memref<9x4x8xf32, #tpu.memory_space<vmem>>, vector<1x4x8xf32>
    %64 = vector.shape_cast %63 : vector<1x4x8xf32> to vector<4x8xf32>
    %cst_101 = arith.constant dense<0.000000e+00> : vector<64x8xf32>
    %65 = tpu.matmul %62, %64, %cst_101 {dimension_numbers = #tpu.dot_dimension_numbers<[1], [0], [0], [1], [0, 0, 1, 1], [], []>} : vector<64x4xf32>, vector<4x8xf32>, vector<64x8xf32> -> vector<64x8xf32>
    %c0_102 = arith.constant 0 : index
    %c0_103 = arith.constant 0 : index
    %66 = vector.load %arg14[%c0_102, %c0_103] : memref<64x8xf32, #tpu.memory_space<vmem>>, vector<64x8xf32>
    %67 = arith.addf %66, %65 : vector<64x8xf32>
    %c0_104 = arith.constant 0 : index
    %c0_105 = arith.constant 0 : index
    %68 = vector.load %arg14[%c0_104, %c0_105] : memref<64x8xf32, #tpu.memory_space<vmem>>, vector<64x8xf32>
    tpu.vector_store %arg14[%c0_104, %c0_105], %67 {strides = array<i32>} : memref<64x8xf32, #tpu.memory_space<vmem>>, vector<64x8xf32>,
    %c2_106 = arith.constant 2 : index
    %c0_107 = arith.constant 0 : index
    %c0_108 = arith.constant 0 : index
    %69 = tpu.strided_load %arg15[%c2_106, %c0_107, %c0_108] {strides = array<i32: 2, 1, 1>} : memref<18x9x4xf32, #tpu.memory_space<vmem>>, vector<8x8x4xf32>
    %70 = vector.shape_cast %69 : vector<8x8x4xf32> to vector<64x4xf32>
    %c6 = arith.constant 6 : index
    %c0_109 = arith.constant 0 : index
    %c0_110 = arith.constant 0 : index
    %71 = vector.load %arg2[%c6, %c0_109, %c0_110] : memref<9x4x8xf32, #tpu.memory_space<vmem>>, vector<1x4x8xf32>
    %72 = vector.shape_cast %71 : vector<1x4x8xf32> to vector<4x8xf32>
    %cst_111 = arith.constant dense<0.000000e+00> : vector<64x8xf32>
    %73 = tpu.matmul %70, %72, %cst_111 {dimension_numbers = #tpu.dot_dimension_numbers<[1], [0], [0], [1], [0, 0, 1, 1], [], []>} : vector<64x4xf32>, vector<4x8xf32>, vector<64x8xf32> -> vector<64x8xf32>
    %c0_112 = arith.constant 0 : index
    %c0_113 = arith.constant 0 : index
    %74 = vector.load %arg14[%c0_112, %c0_113] : memref<64x8xf32, #tpu.memory_space<vmem>>, vector<64x8xf32>
    %75 = arith.addf %74, %73 : vector<64x8xf32>
    %c0_114 = arith.constant 0 : index
    %c0_115 = arith.constant 0 : index
    %76 = vector.load %arg14[%c0_114, %c0_115] : memref<64x8xf32, #tpu.memory_space<vmem>>, vector<64x8xf32>
    tpu.vector_store %arg14[%c0_114, %c0_115], %75 {strides = array<i32>} : memref<64x8xf32, #tpu.memory_space<vmem>>, vector<64x8xf32>,
    %c2_116 = arith.constant 2 : index
    %c0_117 = arith.constant 0 : index
    %c0_118 = arith.constant 0 : index
    %77 = tpu.strided_load %arg16[%c2_116, %c0_117, %c0_118] {strides = array<i32: 2, 1, 1>} : memref<18x9x4xf32, #tpu.memory_space<vmem>>, vector<8x8x4xf32>
    %78 = vector.shape_cast %77 : vector<8x8x4xf32> to vector<64x4xf32>
    %c7 = arith.constant 7 : index
    %c0_119 = arith.constant 0 : index
    %c0_120 = arith.constant 0 : index
    %79 = vector.load %arg2[%c7, %c0_119, %c0_120] : memref<9x4x8xf32, #tpu.memory_space<vmem>>, vector<1x4x8xf32>
    %80 = vector.shape_cast %79 : vector<1x4x8xf32> to vector<4x8xf32>
    %cst_121 = arith.constant dense<0.000000e+00> : vector<64x8xf32>
    %81 = tpu.matmul %78, %80, %cst_121 {dimension_numbers = #tpu.dot_dimension_numbers<[1], [0], [0], [1], [0, 0, 1, 1], [], []>} : vector<64x4xf32>, vector<4x8xf32>, vector<64x8xf32> -> vector<64x8xf32>
    %c0_122 = arith.constant 0 : index
    %c0_123 = arith.constant 0 : index
    %82 = vector.load %arg14[%c0_122, %c0_123] : memref<64x8xf32, #tpu.memory_space<vmem>>, vector<64x8xf32>
    %83 = arith.addf %82, %81 : vector<64x8xf32>
    %c0_124 = arith.constant 0 : index
    %c0_125 = arith.constant 0 : index
    %84 = vector.load %arg14[%c0_124, %c0_125] : memref<64x8xf32, #tpu.memory_space<vmem>>, vector<64x8xf32>
    tpu.vector_store %arg14[%c0_124, %c0_125], %83 {strides = array<i32>} : memref<64x8xf32, #tpu.memory_space<vmem>>, vector<64x8xf32>,
    %c2_126 = arith.constant 2 : index
    %c1_127 = arith.constant 1 : index
    %c0_128 = arith.constant 0 : index
    %85 = tpu.strided_load %arg15[%c2_126, %c1_127, %c0_128] {strides = array<i32: 2, 1, 1>} : memref<18x9x4xf32, #tpu.memory_space<vmem>>, vector<8x8x4xf32>
    %86 = vector.shape_cast %85 : vector<8x8x4xf32> to vector<64x4xf32>
    %c8 = arith.constant 8 : index
    %c0_129 = arith.constant 0 : index
    %c0_130 = arith.constant 0 : index
    %87 = vector.load %arg2[%c8, %c0_129, %c0_130] : memref<9x4x8xf32, #tpu.memory_space<vmem>>, vector<1x4x8xf32>
    %88 = vector.shape_cast %87 : vector<1x4x8xf32> to vector<4x8xf32>
    %cst_131 = arith.constant dense<0.000000e+00> : vector<64x8xf32>
    %89 = tpu.matmul %86, %88, %cst_131 {dimension_numbers = #tpu.dot_dimension_numbers<[1], [0], [0], [1], [0, 0, 1, 1], [], []>} : vector<64x4xf32>, vector<4x8xf32>, vector<64x8xf32> -> vector<64x8xf32>
    %c0_132 = arith.constant 0 : index
    %c0_133 = arith.constant 0 : index
    %90 = vector.load %arg14[%c0_132, %c0_133] : memref<64x8xf32, #tpu.memory_space<vmem>>, vector<64x8xf32>
    %91 = arith.addf %90, %89 : vector<64x8xf32>
    %c0_134 = arith.constant 0 : index
    %c0_135 = arith.constant 0 : index
    %92 = vector.load %arg14[%c0_134, %c0_135] : memref<64x8xf32, #tpu.memory_space<vmem>>, vector<64x8xf32>
    tpu.vector_store %arg14[%c0_134, %c0_135], %91 {strides = array<i32>} : memref<64x8xf32, #tpu.memory_space<vmem>>, vector<64x8xf32>,
    %c0_136 = arith.constant 0 : index
    %c0_137 = arith.constant 0 : index
    %93 = vector.load %arg14[%c0_136, %c0_137] : memref<64x8xf32, #tpu.memory_space<vmem>>, vector<64x8xf32>
    %c0_138 = arith.constant 0 : index
    %c0_139 = arith.constant 0 : index
    %94 = vector.load %arg3[%c0_138, %c0_139] : memref<1x8xf32, #tpu.memory_space<vmem>>, vector<1x8xf32>
    %95 = vector.broadcast %94 : vector<1x8xf32> to vector<64x8xf32>
    %96 = arith.mulf %93, %95 : vector<64x8xf32>
    %c0_140 = arith.constant 0 : index
    %c0_141 = arith.constant 0 : index
    %97 = vector.load %arg4[%c0_140, %c0_141] : memref<1x8xf32, #tpu.memory_space<vmem>>, vector<1x8xf32>
    %98 = vector.broadcast %97 : vector<1x8xf32> to vector<64x8xf32>
    %99 = arith.addf %96, %98 : vector<64x8xf32>
    %cst_142 = arith.constant 0.000000e+00 : f32
    %100 = vector.broadcast %cst_142 : f32 to vector<64x8xf32>
    %101 = arith.maximumf %99, %100 : vector<64x8xf32>
    %102 = vector.shape_cast %101 : vector<64x8xf32> to vector<8x8x8xf32>
    %c1_143 = arith.constant 1 : index
    %c1_144 = arith.constant 1 : index
    %c0_145 = arith.constant 0 : index
    %103 = vector.load %arg13[%c1_143, %c1_144, %c0_145] : memref<10x10x8xf32, #tpu.memory_space<vmem>>, vector<8x8x8xf32>
    tpu.vector_store %arg13[%c1_143, %c1_144, %c0_145], %102 {strides = array<i32>} : memref<10x10x8xf32, #tpu.memory_space<vmem>>, vector<8x8x8xf32>,
    %c1_146 = arith.constant 1 : index
    %c0_147 = arith.constant 0 : index
    %c0_148 = arith.constant 0 : index
    %104 = tpu.strided_load %arg16[%c1_146, %c0_147, %c0_148] {strides = array<i32: 2, 1, 1>} : memref<18x9x4xf32, #tpu.memory_space<vmem>>, vector<8x8x4xf32>
    %105 = vector.shape_cast %104 : vector<8x8x4xf32> to vector<64x4xf32>
    %c0_149 = arith.constant 0 : index
    %c0_150 = arith.constant 0 : index
    %106 = vector.load %arg8[%c0_149, %c0_150] : memref<4x8xf32, #tpu.memory_space<vmem>>, vector<4x8xf32>
    %cst_151 = arith.constant dense<0.000000e+00> : vector<64x8xf32>
    %107 = tpu.matmul %105, %106, %cst_151 {dimension_numbers = #tpu.dot_dimension_numbers<[1], [0], [0], [1], [0, 0, 1, 1], [], []>} : vector<64x4xf32>, vector<4x8xf32>, vector<64x8xf32> -> vector<64x8xf32>
    %c0_152 = arith.constant 0 : index
    %c0_153 = arith.constant 0 : index
    %108 = vector.load %arg9[%c0_152, %c0_153] : memref<1x8xf32, #tpu.memory_space<vmem>>, vector<1x8xf32>
    %109 = vector.broadcast %108 : vector<1x8xf32> to vector<64x8xf32>
    %110 = arith.mulf %107, %109 : vector<64x8xf32>
    %c0_154 = arith.constant 0 : index
    %c0_155 = arith.constant 0 : index
    %111 = vector.load %arg10[%c0_154, %c0_155] : memref<1x8xf32, #tpu.memory_space<vmem>>, vector<1x8xf32>
    %112 = vector.broadcast %111 : vector<1x8xf32> to vector<64x8xf32>
    %113 = arith.addf %110, %112 : vector<64x8xf32>
    %c0_156 = arith.constant 0 : index
    %c0_157 = arith.constant 0 : index
    %c0_158 = arith.constant 0 : index
    %114 = vector.load %arg13[%c0_156, %c0_157, %c0_158] : memref<10x10x8xf32, #tpu.memory_space<vmem>>, vector<8x8x8xf32>
    %115 = vector.shape_cast %114 : vector<8x8x8xf32> to vector<64x8xf32>
    %c0_159 = arith.constant 0 : index
    %c0_160 = arith.constant 0 : index
    %c0_161 = arith.constant 0 : index
    %116 = vector.load %arg5[%c0_159, %c0_160, %c0_161] : memref<9x8x8xf32, #tpu.memory_space<vmem>>, vector<1x8x8xf32>
    %117 = vector.shape_cast %116 : vector<1x8x8xf32> to vector<8x8xf32>
    %cst_162 = arith.constant dense<0.000000e+00> : vector<64x8xf32>
    %118 = tpu.matmul %115, %117, %cst_162 {dimension_numbers = #tpu.dot_dimension_numbers<[1], [0], [0], [1], [0, 0, 1, 1], [], []>} : vector<64x8xf32>, vector<8x8xf32>, vector<64x8xf32> -> vector<64x8xf32>
    %c0_163 = arith.constant 0 : index
    %c0_164 = arith.constant 0 : index
    %119 = vector.load %arg14[%c0_163, %c0_164] : memref<64x8xf32, #tpu.memory_space<vmem>>, vector<64x8xf32>
    tpu.vector_store %arg14[%c0_163, %c0_164], %118 {strides = array<i32>} : memref<64x8xf32, #tpu.memory_space<vmem>>, vector<64x8xf32>,
    %c0_165 = arith.constant 0 : index
    %c1_166 = arith.constant 1 : index
    %c0_167 = arith.constant 0 : index
    %120 = vector.load %arg13[%c0_165, %c1_166, %c0_167] : memref<10x10x8xf32, #tpu.memory_space<vmem>>, vector<8x8x8xf32>
    %121 = vector.shape_cast %120 : vector<8x8x8xf32> to vector<64x8xf32>
    %c1_168 = arith.constant 1 : index
    %c0_169 = arith.constant 0 : index
    %c0_170 = arith.constant 0 : index
    %122 = vector.load %arg5[%c1_168, %c0_169, %c0_170] : memref<9x8x8xf32, #tpu.memory_space<vmem>>, vector<1x8x8xf32>
    %123 = vector.shape_cast %122 : vector<1x8x8xf32> to vector<8x8xf32>
    %cst_171 = arith.constant dense<0.000000e+00> : vector<64x8xf32>
    %124 = tpu.matmul %121, %123, %cst_171 {dimension_numbers = #tpu.dot_dimension_numbers<[1], [0], [0], [1], [0, 0, 1, 1], [], []>} : vector<64x8xf32>, vector<8x8xf32>, vector<64x8xf32> -> vector<64x8xf32>
    %c0_172 = arith.constant 0 : index
    %c0_173 = arith.constant 0 : index
    %125 = vector.load %arg14[%c0_172, %c0_173] : memref<64x8xf32, #tpu.memory_space<vmem>>, vector<64x8xf32>
    %126 = arith.addf %125, %124 : vector<64x8xf32>
    %c0_174 = arith.constant 0 : index
    %c0_175 = arith.constant 0 : index
    %127 = vector.load %arg14[%c0_174, %c0_175] : memref<64x8xf32, #tpu.memory_space<vmem>>, vector<64x8xf32>
    tpu.vector_store %arg14[%c0_174, %c0_175], %126 {strides = array<i32>} : memref<64x8xf32, #tpu.memory_space<vmem>>, vector<64x8xf32>,
    %c0_176 = arith.constant 0 : index
    %c2_177 = arith.constant 2 : index
    %c0_178 = arith.constant 0 : index
    %128 = vector.load %arg13[%c0_176, %c2_177, %c0_178] : memref<10x10x8xf32, #tpu.memory_space<vmem>>, vector<8x8x8xf32>
    %129 = vector.shape_cast %128 : vector<8x8x8xf32> to vector<64x8xf32>
    %c2_179 = arith.constant 2 : index
    %c0_180 = arith.constant 0 : index
    %c0_181 = arith.constant 0 : index
    %130 = vector.load %arg5[%c2_179, %c0_180, %c0_181] : memref<9x8x8xf32, #tpu.memory_space<vmem>>, vector<1x8x8xf32>
    %131 = vector.shape_cast %130 : vector<1x8x8xf32> to vector<8x8xf32>
    %cst_182 = arith.constant dense<0.000000e+00> : vector<64x8xf32>
    %132 = tpu.matmul %129, %131, %cst_182 {dimension_numbers = #tpu.dot_dimension_numbers<[1], [0], [0], [1], [0, 0, 1, 1], [], []>} : vector<64x8xf32>, vector<8x8xf32>, vector<64x8xf32> -> vector<64x8xf32>
    %c0_183 = arith.constant 0 : index
    %c0_184 = arith.constant 0 : index
    %133 = vector.load %arg14[%c0_183, %c0_184] : memref<64x8xf32, #tpu.memory_space<vmem>>, vector<64x8xf32>
    %134 = arith.addf %133, %132 : vector<64x8xf32>
    %c0_185 = arith.constant 0 : index
    %c0_186 = arith.constant 0 : index
    %135 = vector.load %arg14[%c0_185, %c0_186] : memref<64x8xf32, #tpu.memory_space<vmem>>, vector<64x8xf32>
    tpu.vector_store %arg14[%c0_185, %c0_186], %134 {strides = array<i32>} : memref<64x8xf32, #tpu.memory_space<vmem>>, vector<64x8xf32>,
    %c1_187 = arith.constant 1 : index
    %c0_188 = arith.constant 0 : index
    %c0_189 = arith.constant 0 : index
    %136 = vector.load %arg13[%c1_187, %c0_188, %c0_189] : memref<10x10x8xf32, #tpu.memory_space<vmem>>, vector<8x8x8xf32>
    %137 = vector.shape_cast %136 : vector<8x8x8xf32> to vector<64x8xf32>
    %c3_190 = arith.constant 3 : index
    %c0_191 = arith.constant 0 : index
    %c0_192 = arith.constant 0 : index
    %138 = vector.load %arg5[%c3_190, %c0_191, %c0_192] : memref<9x8x8xf32, #tpu.memory_space<vmem>>, vector<1x8x8xf32>
    %139 = vector.shape_cast %138 : vector<1x8x8xf32> to vector<8x8xf32>
    %cst_193 = arith.constant dense<0.000000e+00> : vector<64x8xf32>
    %140 = tpu.matmul %137, %139, %cst_193 {dimension_numbers = #tpu.dot_dimension_numbers<[1], [0], [0], [1], [0, 0, 1, 1], [], []>} : vector<64x8xf32>, vector<8x8xf32>, vector<64x8xf32> -> vector<64x8xf32>
    %c0_194 = arith.constant 0 : index
    %c0_195 = arith.constant 0 : index
    %141 = vector.load %arg14[%c0_194, %c0_195] : memref<64x8xf32, #tpu.memory_space<vmem>>, vector<64x8xf32>
    %142 = arith.addf %141, %140 : vector<64x8xf32>
    %c0_196 = arith.constant 0 : index
    %c0_197 = arith.constant 0 : index
    %143 = vector.load %arg14[%c0_196, %c0_197] : memref<64x8xf32, #tpu.memory_space<vmem>>, vector<64x8xf32>
    tpu.vector_store %arg14[%c0_196, %c0_197], %142 {strides = array<i32>} : memref<64x8xf32, #tpu.memory_space<vmem>>, vector<64x8xf32>,
    %c1_198 = arith.constant 1 : index
    %c1_199 = arith.constant 1 : index
    %c0_200 = arith.constant 0 : index
    %144 = vector.load %arg13[%c1_198, %c1_199, %c0_200] : memref<10x10x8xf32, #tpu.memory_space<vmem>>, vector<8x8x8xf32>
    %145 = vector.shape_cast %144 : vector<8x8x8xf32> to vector<64x8xf32>
    %c4_201 = arith.constant 4 : index
    %c0_202 = arith.constant 0 : index
    %c0_203 = arith.constant 0 : index
    %146 = vector.load %arg5[%c4_201, %c0_202, %c0_203] : memref<9x8x8xf32, #tpu.memory_space<vmem>>, vector<1x8x8xf32>
    %147 = vector.shape_cast %146 : vector<1x8x8xf32> to vector<8x8xf32>
    %cst_204 = arith.constant dense<0.000000e+00> : vector<64x8xf32>
    %148 = tpu.matmul %145, %147, %cst_204 {dimension_numbers = #tpu.dot_dimension_numbers<[1], [0], [0], [1], [0, 0, 1, 1], [], []>} : vector<64x8xf32>, vector<8x8xf32>, vector<64x8xf32> -> vector<64x8xf32>
    %c0_205 = arith.constant 0 : index
    %c0_206 = arith.constant 0 : index
    %149 = vector.load %arg14[%c0_205, %c0_206] : memref<64x8xf32, #tpu.memory_space<vmem>>, vector<64x8xf32>
    %150 = arith.addf %149, %148 : vector<64x8xf32>
    %c0_207 = arith.constant 0 : index
    %c0_208 = arith.constant 0 : index
    %151 = vector.load %arg14[%c0_207, %c0_208] : memref<64x8xf32, #tpu.memory_space<vmem>>, vector<64x8xf32>
    tpu.vector_store %arg14[%c0_207, %c0_208], %150 {strides = array<i32>} : memref<64x8xf32, #tpu.memory_space<vmem>>, vector<64x8xf32>,
    %c1_209 = arith.constant 1 : index
    %c2_210 = arith.constant 2 : index
    %c0_211 = arith.constant 0 : index
    %152 = vector.load %arg13[%c1_209, %c2_210, %c0_211] : memref<10x10x8xf32, #tpu.memory_space<vmem>>, vector<8x8x8xf32>
    %153 = vector.shape_cast %152 : vector<8x8x8xf32> to vector<64x8xf32>
    %c5_212 = arith.constant 5 : index
    %c0_213 = arith.constant 0 : index
    %c0_214 = arith.constant 0 : index
    %154 = vector.load %arg5[%c5_212, %c0_213, %c0_214] : memref<9x8x8xf32, #tpu.memory_space<vmem>>, vector<1x8x8xf32>
    %155 = vector.shape_cast %154 : vector<1x8x8xf32> to vector<8x8xf32>
    %cst_215 = arith.constant dense<0.000000e+00> : vector<64x8xf32>
    %156 = tpu.matmul %153, %155, %cst_215 {dimension_numbers = #tpu.dot_dimension_numbers<[1], [0], [0], [1], [0, 0, 1, 1], [], []>} : vector<64x8xf32>, vector<8x8xf32>, vector<64x8xf32> -> vector<64x8xf32>
    %c0_216 = arith.constant 0 : index
    %c0_217 = arith.constant 0 : index
    %157 = vector.load %arg14[%c0_216, %c0_217] : memref<64x8xf32, #tpu.memory_space<vmem>>, vector<64x8xf32>
    %158 = arith.addf %157, %156 : vector<64x8xf32>
    %c0_218 = arith.constant 0 : index
    %c0_219 = arith.constant 0 : index
    %159 = vector.load %arg14[%c0_218, %c0_219] : memref<64x8xf32, #tpu.memory_space<vmem>>, vector<64x8xf32>
    tpu.vector_store %arg14[%c0_218, %c0_219], %158 {strides = array<i32>} : memref<64x8xf32, #tpu.memory_space<vmem>>, vector<64x8xf32>,
    %c2_220 = arith.constant 2 : index
    %c0_221 = arith.constant 0 : index
    %c0_222 = arith.constant 0 : index
    %160 = vector.load %arg13[%c2_220, %c0_221, %c0_222] : memref<10x10x8xf32, #tpu.memory_space<vmem>>, vector<8x8x8xf32>
    %161 = vector.shape_cast %160 : vector<8x8x8xf32> to vector<64x8xf32>
    %c6_223 = arith.constant 6 : index
    %c0_224 = arith.constant 0 : index
    %c0_225 = arith.constant 0 : index
    %162 = vector.load %arg5[%c6_223, %c0_224, %c0_225] : memref<9x8x8xf32, #tpu.memory_space<vmem>>, vector<1x8x8xf32>
    %163 = vector.shape_cast %162 : vector<1x8x8xf32> to vector<8x8xf32>
    %cst_226 = arith.constant dense<0.000000e+00> : vector<64x8xf32>
    %164 = tpu.matmul %161, %163, %cst_226 {dimension_numbers = #tpu.dot_dimension_numbers<[1], [0], [0], [1], [0, 0, 1, 1], [], []>} : vector<64x8xf32>, vector<8x8xf32>, vector<64x8xf32> -> vector<64x8xf32>
    %c0_227 = arith.constant 0 : index
    %c0_228 = arith.constant 0 : index
    %165 = vector.load %arg14[%c0_227, %c0_228] : memref<64x8xf32, #tpu.memory_space<vmem>>, vector<64x8xf32>
    %166 = arith.addf %165, %164 : vector<64x8xf32>
    %c0_229 = arith.constant 0 : index
    %c0_230 = arith.constant 0 : index
    %167 = vector.load %arg14[%c0_229, %c0_230] : memref<64x8xf32, #tpu.memory_space<vmem>>, vector<64x8xf32>
    tpu.vector_store %arg14[%c0_229, %c0_230], %166 {strides = array<i32>} : memref<64x8xf32, #tpu.memory_space<vmem>>, vector<64x8xf32>,
    %c2_231 = arith.constant 2 : index
    %c1_232 = arith.constant 1 : index
    %c0_233 = arith.constant 0 : index
    %168 = vector.load %arg13[%c2_231, %c1_232, %c0_233] : memref<10x10x8xf32, #tpu.memory_space<vmem>>, vector<8x8x8xf32>
    %169 = vector.shape_cast %168 : vector<8x8x8xf32> to vector<64x8xf32>
    %c7_234 = arith.constant 7 : index
    %c0_235 = arith.constant 0 : index
    %c0_236 = arith.constant 0 : index
    %170 = vector.load %arg5[%c7_234, %c0_235, %c0_236] : memref<9x8x8xf32, #tpu.memory_space<vmem>>, vector<1x8x8xf32>
    %171 = vector.shape_cast %170 : vector<1x8x8xf32> to vector<8x8xf32>
    %cst_237 = arith.constant dense<0.000000e+00> : vector<64x8xf32>
    %172 = tpu.matmul %169, %171, %cst_237 {dimension_numbers = #tpu.dot_dimension_numbers<[1], [0], [0], [1], [0, 0, 1, 1], [], []>} : vector<64x8xf32>, vector<8x8xf32>, vector<64x8xf32> -> vector<64x8xf32>
    %c0_238 = arith.constant 0 : index
    %c0_239 = arith.constant 0 : index
    %173 = vector.load %arg14[%c0_238, %c0_239] : memref<64x8xf32, #tpu.memory_space<vmem>>, vector<64x8xf32>
    %174 = arith.addf %173, %172 : vector<64x8xf32>
    %c0_240 = arith.constant 0 : index
    %c0_241 = arith.constant 0 : index
    %175 = vector.load %arg14[%c0_240, %c0_241] : memref<64x8xf32, #tpu.memory_space<vmem>>, vector<64x8xf32>
    tpu.vector_store %arg14[%c0_240, %c0_241], %174 {strides = array<i32>} : memref<64x8xf32, #tpu.memory_space<vmem>>, vector<64x8xf32>,
    %c2_242 = arith.constant 2 : index
    %c2_243 = arith.constant 2 : index
    %c0_244 = arith.constant 0 : index
    %176 = vector.load %arg13[%c2_242, %c2_243, %c0_244] : memref<10x10x8xf32, #tpu.memory_space<vmem>>, vector<8x8x8xf32>
    %177 = vector.shape_cast %176 : vector<8x8x8xf32> to vector<64x8xf32>
    %c8_245 = arith.constant 8 : index
    %c0_246 = arith.constant 0 : index
    %c0_247 = arith.constant 0 : index
    %178 = vector.load %arg5[%c8_245, %c0_246, %c0_247] : memref<9x8x8xf32, #tpu.memory_space<vmem>>, vector<1x8x8xf32>
    %179 = vector.shape_cast %178 : vector<1x8x8xf32> to vector<8x8xf32>
    %cst_248 = arith.constant dense<0.000000e+00> : vector<64x8xf32>
    %180 = tpu.matmul %177, %179, %cst_248 {dimension_numbers = #tpu.dot_dimension_numbers<[1], [0], [0], [1], [0, 0, 1, 1], [], []>} : vector<64x8xf32>, vector<8x8xf32>, vector<64x8xf32> -> vector<64x8xf32>
    %c0_249 = arith.constant 0 : index
    %c0_250 = arith.constant 0 : index
    %181 = vector.load %arg14[%c0_249, %c0_250] : memref<64x8xf32, #tpu.memory_space<vmem>>, vector<64x8xf32>
    %182 = arith.addf %181, %180 : vector<64x8xf32>
    %c0_251 = arith.constant 0 : index
    %c0_252 = arith.constant 0 : index
    %183 = vector.load %arg14[%c0_251, %c0_252] : memref<64x8xf32, #tpu.memory_space<vmem>>, vector<64x8xf32>
    tpu.vector_store %arg14[%c0_251, %c0_252], %182 {strides = array<i32>} : memref<64x8xf32, #tpu.memory_space<vmem>>, vector<64x8xf32>,
    %c0_253 = arith.constant 0 : index
    %c0_254 = arith.constant 0 : index
    %184 = vector.load %arg14[%c0_253, %c0_254] : memref<64x8xf32, #tpu.memory_space<vmem>>, vector<64x8xf32>
    %c0_255 = arith.constant 0 : index
    %c0_256 = arith.constant 0 : index
    %185 = vector.load %arg6[%c0_255, %c0_256] : memref<1x8xf32, #tpu.memory_space<vmem>>, vector<1x8xf32>
    %186 = vector.broadcast %185 : vector<1x8xf32> to vector<64x8xf32>
    %187 = arith.mulf %184, %186 : vector<64x8xf32>
    %c0_257 = arith.constant 0 : index
    %c0_258 = arith.constant 0 : index
    %188 = vector.load %arg7[%c0_257, %c0_258] : memref<1x8xf32, #tpu.memory_space<vmem>>, vector<1x8xf32>
    %189 = vector.broadcast %188 : vector<1x8xf32> to vector<64x8xf32>
    %190 = arith.addf %187, %189 : vector<64x8xf32>
    %191 = arith.addf %190, %113 : vector<64x8xf32>
    %cst_259 = arith.constant 0.000000e+00 : f32
    %192 = vector.broadcast %cst_259 : f32 to vector<64x8xf32>
    %193 = arith.maximumf %191, %192 : vector<64x8xf32>
    %c0_260 = arith.constant 0 : index
    %c0_261 = arith.constant 0 : index
    %c0_262 = arith.constant 0 : index
    %194 = vector.load %arg11[%c0_260, %c0_261, %c0_262] : memref<1x64x8xf32, #tpu.memory_space<vmem>>, vector<1x64x8xf32>
    %195 = vector.shape_cast %194 : vector<1x64x8xf32> to vector<64x8xf32>
    %196 = vector.shape_cast %193 : vector<64x8xf32> to vector<1x64x8xf32>
    tpu.vector_store %arg11[%c0_260, %c0_261, %c0_262], %196 {strides = array<i32>} : memref<1x64x8xf32, #tpu.memory_space<vmem>>, vector<1x64x8xf32>,
    return
  }
  func.func @transform_0(%arg0: i32) -> (i32, i32, i32, i32) {
    %c0_i32 = arith.constant 0 : i32
    %c0_i32_0 = arith.constant 0 : i32
    %c0_i32_1 = arith.constant 0 : i32
    %c0_i32_2 = arith.constant 0 : i32
    return %arg0, %c0_i32, %c0_i32_0, %c0_i32_1 : i32, i32, i32, i32
  }
  func.func @transform_1(%arg0: i32) -> (i32, i32, i32) {
    %c0_i32 = arith.constant 0 : i32
    %c0_i32_0 = arith.constant 0 : i32
    %c0_i32_1 = arith.constant 0 : i32
    %c0_i32_2 = arith.constant 0 : i32
    return %c0_i32, %c0_i32_0, %c0_i32_1 : i32, i32, i32
  }
  func.func @transform_2(%arg0: i32) -> (i32, i32) {
    %c0_i32 = arith.constant 0 : i32
    %c0_i32_0 = arith.constant 0 : i32
    %c0_i32_1 = arith.constant 0 : i32
    return %c0_i32, %c0_i32_0 : i32, i32
  }
  func.func @transform_3(%arg0: i32) -> (i32, i32) {
    %c0_i32 = arith.constant 0 : i32
    %c0_i32_0 = arith.constant 0 : i32
    %c0_i32_1 = arith.constant 0 : i32
    return %c0_i32, %c0_i32_0 : i32, i32
  }
  func.func @transform_4(%arg0: i32) -> (i32, i32, i32) {
    %c0_i32 = arith.constant 0 : i32
    %c0_i32_0 = arith.constant 0 : i32
    %c0_i32_1 = arith.constant 0 : i32
    %c0_i32_2 = arith.constant 0 : i32
    return %c0_i32, %c0_i32_0, %c0_i32_1 : i32, i32, i32
  }
  func.func @transform_5(%arg0: i32) -> (i32, i32) {
    %c0_i32 = arith.constant 0 : i32
    %c0_i32_0 = arith.constant 0 : i32
    %c0_i32_1 = arith.constant 0 : i32
    return %c0_i32, %c0_i32_0 : i32, i32
  }
  func.func @transform_6(%arg0: i32) -> (i32, i32) {
    %c0_i32 = arith.constant 0 : i32
    %c0_i32_0 = arith.constant 0 : i32
    %c0_i32_1 = arith.constant 0 : i32
    return %c0_i32, %c0_i32_0 : i32, i32
  }
  func.func @transform_7(%arg0: i32) -> (i32, i32) {
    %c0_i32 = arith.constant 0 : i32
    %c0_i32_0 = arith.constant 0 : i32
    %c0_i32_1 = arith.constant 0 : i32
    return %c0_i32, %c0_i32_0 : i32, i32
  }
  func.func @transform_8(%arg0: i32) -> (i32, i32) {
    %c0_i32 = arith.constant 0 : i32
    %c0_i32_0 = arith.constant 0 : i32
    %c0_i32_1 = arith.constant 0 : i32
    return %c0_i32, %c0_i32_0 : i32, i32
  }
  func.func @transform_9(%arg0: i32) -> (i32, i32) {
    %c0_i32 = arith.constant 0 : i32
    %c0_i32_0 = arith.constant 0 : i32
    %c0_i32_1 = arith.constant 0 : i32
    return %c0_i32, %c0_i32_0 : i32, i32
  }
  func.func @transform_10(%arg0: i32) -> (i32, i32, i32) {
    %c0_i32 = arith.constant 0 : i32
    %c0_i32_0 = arith.constant 0 : i32
    %c0_i32_1 = arith.constant 0 : i32
    return %arg0, %c0_i32, %c0_i32_0 : i32, i32, i32
  }
}

</mosaic_0001>

<llo_original>
// kernel: tpu_custom_call.1
$region0: #{tpu_custom_call.1}
  #allocation0 [shape = 'u32[]', space=smem, size = 0x4, offset = 0x4, fixed_abs, tag = 'smem constant byte address 0x4 - core index']
  #allocation1 [shape = 'u32[144,128]{1,0:T(1,128)}', space=vmem, size = 0x12000, scoped, tag = 'internal scratch']
  #allocation2 [shape = 'f32[18,18,4]{2,1,0:T(8,128)}', space=vmem, size = 0x36000, scoped, tag = 'scratch operand']
  #allocation3 [shape = 'f32[10,10,8]{2,1,0:T(8,128)}', space=vmem, size = 0x14000, scoped, tag = 'scratch operand']
  #allocation4 [shape = 'f32[64,8]{1,0:T(8,128)}', space=vmem, size = 0x8000, scoped, tag = 'scratch operand']
  #allocation5 [shape = 'f32[18,9,4]{2,1,0:T(8,128)}', space=vmem, size = 0x24000, scoped, tag = 'scratch operand']
  #allocation6 [shape = 'f32[18,9,4]{2,1,0:T(8,128)}', space=vmem, size = 0x24000, scoped, tag = 'scratch operand']
  %s0 = inlined_call_operand.vmem [shape: f32[2,16,16,4], index: 0, kind: input, shape index: {}]
  %s1 = inlined_call_operand.vmem [shape: f32[9,4,8], index: 1, kind: input, shape index: {}]
  %s2 = inlined_call_operand.vmem [shape: f32[1,8], index: 2, kind: input, shape index: {}]
  %s3 = inlined_call_operand.vmem [shape: f32[1,8], index: 3, kind: input, shape index: {}]
  %s4 = inlined_call_operand.vmem [shape: f32[9,8,8], index: 4, kind: input, shape index: {}]
  %s5 = inlined_call_operand.vmem [shape: f32[1,8], index: 5, kind: input, shape index: {}]
  %s6 = inlined_call_operand.vmem [shape: f32[1,8], index: 6, kind: input, shape index: {}]
  %s7 = inlined_call_operand.vmem [shape: f32[4,8], index: 7, kind: input, shape index: {}]
  %s8 = inlined_call_operand.vmem [shape: f32[1,8], index: 8, kind: input, shape index: {}]
  %s9 = inlined_call_operand.vmem [shape: f32[1,8], index: 9, kind: input, shape index: {}]
  %s10 = inlined_call_operand.vmem [shape: f32[2,64,8], index: 10, kind: output, shape index: {}]
  %s11 = sld [smem:[#allocation0]]
  $region73: #{tpu_custom_call.1} parent=0
    _
  %s13 = ssub.s32 1, %s11
  %s14 = scalar_select 0, %s13, %s11
  loop: start=0, step=1, limit=4
  $region2: #{tpu_custom_call.1} parent=0 // loop_pre_header
    _
  $region3: #{tpu_custom_call.1} parent=0 // loop_header
    %s16 = sphi 0, %s20
    %p17 = scmp.ge.s32.totalorder %s16, 4
    %s26 = sphi 0, %s28
    %s29 = sphi 0, %s26
    %s30 = sphi 0, %s29
    %s46 = sphi 0, %s30
    %s50 = sphi 0, %s50
    %s52 = sphi 0, %s50
    %s53 = sphi 0, %s52
    %s67 = sphi 0, %s53
    %s71 = sphi 0, %s71
    %s73 = sphi 0, %s71
    %s74 = sphi 0, %s73
    %s88 = sphi 0, %s74
    %s92 = sphi 0, %s92
    %s94 = sphi 0, %s92
    %s95 = sphi 0, %s94
    %s109 = sphi 0, %s95
    %s113 = sphi 0, %s113
    %s115 = sphi 0, %s113
    %s116 = sphi 0, %s115
    %s130 = sphi 0, %s116
    %s134 = sphi 0, %s134
    %s136 = sphi 0, %s134
    %s137 = sphi 0, %s136
    %s151 = sphi 0, %s137
    %s155 = sphi 0, %s155
    %s157 = sphi 0, %s155
    %s158 = sphi 0, %s157
    %s172 = sphi 0, %s158
    %s176 = sphi 0, %s176
    %s178 = sphi 0, %s176
    %s179 = sphi 0, %s178
    %s193 = sphi 0, %s179
    %s197 = sphi 0, %s197
    %s199 = sphi 0, %s197
    %s200 = sphi 0, %s199
    %s214 = sphi 0, %s200
    %s218 = sphi 0, %s218
    %s220 = sphi 0, %s218
    %s221 = sphi 0, %s220
    %s235 = sphi 0, %s221
    %s241 = sphi 0, %s243
    %s244 = sphi 0, %s241
    %s245 = sphi 0, %s244
    %s261 = sphi 0, %s245
  $region4: #{tpu_custom_call.1} parent=0 // loop_header_branch
    %19 = sbr.rel (%p17) target = $region8
  $region5: #{tpu_custom_call.1} parent=0 // loop_body
    %s21 = ssub.s32 %s16, 1
    %s22 = ssub.s32 %s16, 2
    %s23 = sadd.s32 %s16, 1
    %s24 = ssub.s32 %s16, %s23
    %p25 = scmp.eq.s32.totalorder %s24, 0
    %s27 = sadd.s32 %s26, 1
    %s28 = scalar_select %p25, %s26, %s27
    %p31 = pneg %p25
    %p32 = scmp.eq.s32.totalorder %s16, 1
    %p33 = por %p31, %p32
    %p34 = scmp.ne.s32.totalorder %s26, %s29
    %p35 = scmp.eq.s32.totalorder %s16, 0
    %p36 = por %p34, %p35
    %p37 = scmp.ne.s32.totalorder %s26, %s29
    %p38 = scmp.eq.s32.totalorder %s21, 1
    %p39 = por %p37, %p38
    %p40 = scmp.ne.s32.totalorder %s29, %s30
    %p41 = scmp.eq.s32.totalorder %s21, 0
    %p42 = por %p40, %p41
    %p43 = scmp.ne.s32.totalorder %s29, %s30
    %p44 = scmp.eq.s32.totalorder %s22, 1
    %p45 = por %p43, %p44
    %p47 = scmp.ne.s32.totalorder %s30, %s46
    %p48 = scmp.eq.s32.totalorder %s22, 0
    %p49 = por %p47, %p48
    %s51 = sadd.s32 %s50, 1
    %p54 = scmp.eq.s32.totalorder %s16, 1
    %p55 = scmp.ne.s32.totalorder %s50, %s52
    %p56 = scmp.eq.s32.totalorder %s16, 0
    %p57 = por %p55, %p56
    %p58 = scmp.ne.s32.totalorder %s50, %s52
    %p59 = scmp.eq.s32.totalorder %s21, 1
    %p60 = por %p58, %p59
    %p61 = scmp.ne.s32.totalorder %s52, %s53
    %p62 = scmp.eq.s32.totalorder %s21, 0
    %p63 = por %p61, %p62
    %p64 = scmp.ne.s32.totalorder %s52, %s53
    %p65 = scmp.eq.s32.totalorder %s22, 1
    %p66 = por %p64, %p65
    %p68 = scmp.ne.s32.totalorder %s53, %s67
    %p69 = scmp.eq.s32.totalorder %s22, 0
    %p70 = por %p68, %p69
    %s72 = sadd.s32 %s71, 1
    %p75 = scmp.eq.s32.totalorder %s16, 1
    %p76 = scmp.ne.s32.totalorder %s71, %s73
    %p77 = scmp.eq.s32.totalorder %s16, 0
    %p78 = por %p76, %p77
    %p79 = scmp.ne.s32.totalorder %s71, %s73
    %p80 = scmp.eq.s32.totalorder %s21, 1
    %p81 = por %p79, %p80
    %p82 = scmp.ne.s32.totalorder %s73, %s74
    %p83 = scmp.eq.s32.totalorder %s21, 0
    %p84 = por %p82, %p83
    %p85 = scmp.ne.s32.totalorder %s73, %s74
    %p86 = scmp.eq.s32.totalorder %s22, 1
    %p87 = por %p85, %p86
    %p89 = scmp.ne.s32.totalorder %s74, %s88
    %p90 = scmp.eq.s32.totalorder %s22, 0
    %p91 = por %p89, %p90
    %s93 = sadd.s32 %s92, 1
    %p96 = scmp.eq.s32.totalorder %s16, 1
    %p97 = scmp.ne.s32.totalorder %s92, %s94
    %p98 = scmp.eq.s32.totalorder %s16, 0
    %p99 = por %p97, %p98
    %p100 = scmp.ne.s32.totalorder %s92, %s94
    %p101 = scmp.eq.s32.totalorder %s21, 1
    %p102 = por %p100, %p101
    %p103 = scmp.ne.s32.totalorder %s94, %s95
    %p104 = scmp.eq.s32.totalorder %s21, 0
    %p105 = por %p103, %p104
    %p106 = scmp.ne.s32.totalorder %s94, %s95
    %p107 = scmp.eq.s32.totalorder %s22, 1
    %p108 = por %p106, %p107
    %p110 = scmp.ne.s32.totalorder %s95, %s109
    %p111 = scmp.eq.s32.totalorder %s22, 0
    %p112 = por %p110, %p111
    %s114 = sadd.s32 %s113, 1
    %p117 = scmp.eq.s32.totalorder %s16, 1
    %p118 = scmp.ne.s32.totalorder %s113, %s115
    %p119 = scmp.eq.s32.totalorder %s16, 0
    %p120 = por %p118, %p119
    %p121 = scmp.ne.s32.totalorder %s113, %s115
    %p122 = scmp.eq.s32.totalorder %s21, 1
    %p123 = por %p121, %p122
    %p124 = scmp.ne.s32.totalorder %s115, %s116
    %p125 = scmp.eq.s32.totalorder %s21, 0
    %p126 = por %p124, %p125
    %p127 = scmp.ne.s32.totalorder %s115, %s116
    %p128 = scmp.eq.s32.totalorder %s22, 1
    %p129 = por %p127, %p128
    %p131 = scmp.ne.s32.totalorder %s116, %s130
    %p132 = scmp.eq.s32.totalorder %s22, 0
    %p133 = por %p131, %p132
    %s135 = sadd.s32 %s134, 1
    %p138 = scmp.eq.s32.totalorder %s16, 1
    %p139 = scmp.ne.s32.totalorder %s134, %s136
    %p140 = scmp.eq.s32.totalorder %s16, 0
    %p141 = por %p139, %p140
    %p142 = scmp.ne.s32.totalorder %s134, %s136
    %p143 = scmp.eq.s32.totalorder %s21, 1
    %p144 = por %p142, %p143
    %p145 = scmp.ne.s32.totalorder %s136, %s137
    %p146 = scmp.eq.s32.totalorder %s21, 0
    %p147 = por %p145, %p146
    %p148 = scmp.ne.s32.totalorder %s136, %s137
    %p149 = scmp.eq.s32.totalorder %s22, 1
    %p150 = por %p148, %p149
    %p152 = scmp.ne.s32.totalorder %s137, %s151
    %p153 = scmp.eq.s32.totalorder %s22, 0
    %p154 = por %p152, %p153
    %s156 = sadd.s32 %s155, 1
    %p159 = scmp.eq.s32.totalorder %s16, 1
    %p160 = scmp.ne.s32.totalorder %s155, %s157
    %p161 = scmp.eq.s32.totalorder %s16, 0
    %p162 = por %p160, %p161
    %p163 = scmp.ne.s32.totalorder %s155, %s157
    %p164 = scmp.eq.s32.totalorder %s21, 1
    %p165 = por %p163, %p164
    %p166 = scmp.ne.s32.totalorder %s157, %s158
    %p167 = scmp.eq.s32.totalorder %s21, 0
    %p168 = por %p166, %p167
    %p169 = scmp.ne.s32.totalorder %s157, %s158
    %p170 = scmp.eq.s32.totalorder %s22, 1
    %p171 = por %p169, %p170
    %p173 = scmp.ne.s32.totalorder %s158, %s172
    %p174 = scmp.eq.s32.totalorder %s22, 0
    %p175 = por %p173, %p174
    %s177 = sadd.s32 %s176, 1
    %p180 = scmp.eq.s32.totalorder %s16, 1
    %p181 = scmp.ne.s32.totalorder %s176, %s178
    %p182 = scmp.eq.s32.totalorder %s16, 0
    %p183 = por %p181, %p182
    %p184 = scmp.ne.s32.totalorder %s176, %s178
    %p185 = scmp.eq.s32.totalorder %s21, 1
    %p186 = por %p184, %p185
    %p187 = scmp.ne.s32.totalorder %s178, %s179
    %p188 = scmp.eq.s32.totalorder %s21, 0
    %p189 = por %p187, %p188
    %p190 = scmp.ne.s32.totalorder %s178, %s179
    %p191 = scmp.eq.s32.totalorder %s22, 1
    %p192 = por %p190, %p191
    %p194 = scmp.ne.s32.totalorder %s179, %s193
    %p195 = scmp.eq.s32.totalorder %s22, 0
    %p196 = por %p194, %p195
    %s198 = sadd.s32 %s197, 1
    %p201 = scmp.eq.s32.totalorder %s16, 1
    %p202 = scmp.ne.s32.totalorder %s197, %s199
    %p203 = scmp.eq.s32.totalorder %s16, 0
    %p204 = por %p202, %p203
    %p205 = scmp.ne.s32.totalorder %s197, %s199
    %p206 = scmp.eq.s32.totalorder %s21, 1
    %p207 = por %p205, %p206
    %p208 = scmp.ne.s32.totalorder %s199, %s200
    %p209 = scmp.eq.s32.totalorder %s21, 0
    %p210 = por %p208, %p209
    %p211 = scmp.ne.s32.totalorder %s199, %s200
    %p212 = scmp.eq.s32.totalorder %s22, 1
    %p213 = por %p211, %p212
    %p215 = scmp.ne.s32.totalorder %s200, %s214
    %p216 = scmp.eq.s32.totalorder %s22, 0
    %p217 = por %p215, %p216
    %s219 = sadd.s32 %s218, 1
    %p222 = scmp.eq.s32.totalorder %s16, 1
    %p223 = scmp.ne.s32.totalorder %s218, %s220
    %p224 = scmp.eq.s32.totalorder %s16, 0
    %p225 = por %p223, %p224
    %p226 = scmp.ne.s32.totalorder %s218, %s220
    %p227 = scmp.eq.s32.totalorder %s21, 1
    %p228 = por %p226, %p227
    %p229 = scmp.ne.s32.totalorder %s220, %s221
    %p230 = scmp.eq.s32.totalorder %s21, 0
    %p231 = por %p229, %p230
    %p232 = scmp.ne.s32.totalorder %s220, %s221
    %p233 = scmp.eq.s32.totalorder %s22, 1
    %p234 = por %p232, %p233
    %p236 = scmp.ne.s32.totalorder %s221, %s235
    %p237 = scmp.eq.s32.totalorder %s22, 0
    %p238 = por %p236, %p237
    %s239 = ssub.s32 %s16, %s23
    %p240 = scmp.eq.s32.totalorder %s239, 0
    %s242 = sadd.s32 %s241, 1
    %s243 = scalar_select %p240, %s241, %s242
    %p246 = pneg %p240
    %p247 = scmp.eq.s32.totalorder %s16, 1
    %p248 = por %p246, %p247
    %p249 = scmp.ne.s32.totalorder %s241, %s244
    %p250 = scmp.eq.s32.totalorder %s16, 0
    %p251 = por %p249, %p250
    %p252 = scmp.ne.s32.totalorder %s241, %s244
    %p253 = scmp.eq.s32.totalorder %s21, 1
    %p254 = por %p252, %p253
    %p255 = scmp.ne.s32.totalorder %s244, %s245
    %p256 = scmp.eq.s32.totalorder %s21, 0
    %p257 = por %p255, %p256
    %p258 = scmp.ne.s32.totalorder %s244, %s245
    %p259 = scmp.eq.s32.totalorder %s22, 1
    %p260 = por %p258, %p259
    %p262 = scmp.ne.s32.totalorder %s245, %s261
    %p263 = scmp.eq.s32.totalorder %s22, 0
    %p264 = por %p262, %p263
    %p265 = scmp.le.s32.totalorder 1, %s16
    %p266 = scmp.lt.s32.totalorder %s16, 3
    %p267 = pnand %p265, %p266
    %p268 = pneg %p267
    // Predicated region
    $region9: #{tpu_custom_call.1} parent=5 // pred_check
      _
    $region10: #{tpu_custom_call.1} parent=5 // pred_check_branch
      %270 = sbr.rel (%p267) target = $region12
    $region11: #{tpu_custom_call.1} parent=5 // pred_region
      %s271 = ssub.s32 %s16, 1
      // Predicated region
      $region13: #{tpu_custom_call.1} parent=11 // pred_check
        %p272 = pneg %p63
      $region14: #{tpu_custom_call.1} parent=11 // pred_check_branch
        %274 = sbr.rel (%p272) target = $region16
      $region15: #{tpu_custom_call.1} parent=11 // pred_region
        _
      $region16: #{tpu_custom_call.1} parent=11 // pred_fallthru
        _
      // Predicated region
      $region17: #{tpu_custom_call.1} parent=11 // pred_check
        %p275 = pneg %p84
      $region18: #{tpu_custom_call.1} parent=11 // pred_check_branch
        %277 = sbr.rel (%p275) target = $region20
      $region19: #{tpu_custom_call.1} parent=11 // pred_region
        _
      $region20: #{tpu_custom_call.1} parent=11 // pred_fallthru
        _
      // Predicated region
      $region21: #{tpu_custom_call.1} parent=11 // pred_check
        %p278 = pneg %p105
      $region22: #{tpu_custom_call.1} parent=11 // pred_check_branch
        %280 = sbr.rel (%p278) target = $region24
      $region23: #{tpu_custom_call.1} parent=11 // pred_region
        _
      $region24: #{tpu_custom_call.1} parent=11 // pred_fallthru
        _
      // Predicated region
      $region25: #{tpu_custom_call.1} parent=11 // pred_check
        %p281 = pneg %p126
      $region26: #{tpu_custom_call.1} parent=11 // pred_check_branch
        %283 = sbr.rel (%p281) target = $region28
      $region27: #{tpu_custom_call.1} parent=11 // pred_region
        _
      $region28: #{tpu_custom_call.1} parent=11 // pred_fallthru
        _
      // Predicated region
      $region29: #{tpu_custom_call.1} parent=11 // pred_check
        %p284 = pneg %p147
      $region30: #{tpu_custom_call.1} parent=11 // pred_check_branch
        %286 = sbr.rel (%p284) target = $region32
      $region31: #{tpu_custom_call.1} parent=11 // pred_region
        _
      $region32: #{tpu_custom_call.1} parent=11 // pred_fallthru
        _
      // Predicated region
      $region33: #{tpu_custom_call.1} parent=11 // pred_check
        %p287 = pneg %p168
      $region34: #{tpu_custom_call.1} parent=11 // pred_check_branch
        %289 = sbr.rel (%p287) target = $region36
      $region35: #{tpu_custom_call.1} parent=11 // pred_region
        _
      $region36: #{tpu_custom_call.1} parent=11 // pred_fallthru
        _
      // Predicated region
      $region37: #{tpu_custom_call.1} parent=11 // pred_check
        %p290 = pneg %p189
      $region38: #{tpu_custom_call.1} parent=11 // pred_check_branch
        %292 = sbr.rel (%p290) target = $region40
      $region39: #{tpu_custom_call.1} parent=11 // pred_region
        _
      $region40: #{tpu_custom_call.1} parent=11 // pred_fallthru
        _
      // Predicated region
      $region41: #{tpu_custom_call.1} parent=11 // pred_check
        %p293 = pneg %p210
      $region42: #{tpu_custom_call.1} parent=11 // pred_check_branch
        %295 = sbr.rel (%p293) target = $region44
      $region43: #{tpu_custom_call.1} parent=11 // pred_region
        _
      $region44: #{tpu_custom_call.1} parent=11 // pred_fallthru
        _
      // Predicated region
      $region45: #{tpu_custom_call.1} parent=11 // pred_check
        %p296 = pneg %p231
      $region46: #{tpu_custom_call.1} parent=11 // pred_check_branch
        %298 = sbr.rel (%p296) target = $region48
      $region47: #{tpu_custom_call.1} parent=11 // pred_region
        _
      $region48: #{tpu_custom_call.1} parent=11 // pred_fallthru
        _
    $region12: #{tpu_custom_call.1} parent=5 // pred_fallthru
      _
    %p299 = scmp.lt.s32.totalorder %s16, 2
    // Predicated region
    $region49: #{tpu_custom_call.1} parent=5 // pred_check
      %p300 = pneg %p299
    $region50: #{tpu_custom_call.1} parent=5 // pred_check_branch
      %302 = sbr.rel (%p300) target = $region52
    $region51: #{tpu_custom_call.1} parent=5 // pred_region
      // Predicated region
      $region53: #{tpu_custom_call.1} parent=51 // pred_check
        %p303 = pneg %p36
      $region54: #{tpu_custom_call.1} parent=51 // pred_check_branch
        %305 = sbr.rel (%p303) target = $region56
      $region55: #{tpu_custom_call.1} parent=51 // pred_region
        %p306 = scmp.lt.s32.totalorder %s16, 1
        %s307 = scalar_select %p306, %s16, 1
        %s308 = smul.addr %s307, 32
        %s309 = smul.addr %s308, 8
        %s310 = scalar_lea.vmem %s0, %s309
      $region56: #{tpu_custom_call.1} parent=51 // pred_fallthru
        _
    $region52: #{tpu_custom_call.1} parent=5 // pred_fallthru
      _
    %p311 = scmp.le.s32.totalorder 1, %s16
    %p312 = scmp.lt.s32.totalorder %s16, 3
    %p313 = pnand %p311, %p312
    %p314 = pneg %p313
    // Predicated region
    $region57: #{tpu_custom_call.1} parent=5 // pred_check
      _
    $region58: #{tpu_custom_call.1} parent=5 // pred_check_branch
      %316 = sbr.rel (%p313) target = $region60
    $region59: #{tpu_custom_call.1} parent=5 // pred_region
      %s317 = ssub.s32 %s16, 1
      %p318 = scmp.lt.s32.totalorder %s21, 1
      %s319 = scalar_select %p318, %s21, 1
      %s320 = smul.addr %s319, 32
      %s321 = smul.addr %s320, 8
      %s322 = scalar_lea.vmem %s0, %s321
      %p323 = pneg %p42
      %p324 = pneg %p39
      %p325 = pneg %p63
      %p326 = pneg %p60
      %p327 = pneg %p84
      %p328 = pneg %p81
      %p329 = pneg %p105
      %p330 = pneg %p102
      %p331 = pneg %p126
      %p332 = pneg %p123
      %p333 = pneg %p147
      %p334 = pneg %p144
      %p335 = pneg %p168
      %p336 = pneg %p165
      %p337 = pneg %p189
      %p338 = pneg %p186
      %p339 = pneg %p210
      %p340 = pneg %p207
      %p341 = pneg %p231
      %p342 = pneg %p228
      %p343 = pneg %p257
      %p344 = pneg %p254
      %p345 = scmp.lt.s32.totalorder %s21, 1
      %s346 = scalar_select %p345, %s21, 1
      %s347 = smul.addr %s346, 8
      %s348 = smul.addr %s347, 8
      %s349 = scalar_lea.vmem %s10, %s348
      %p350 = scmp.lt.s32.totalorder %s21, 1
      %s351 = scalar_select %p350, %s21, 1
      %s352 = smul.addr %s351, 32
      %s353 = smul.addr %s352, 8
      %s354 = scalar_lea.vmem %s0, %s353
      %p355 = scmp.lt.s32.totalorder %s21, 1
      %s356 = scalar_select %p355, %s21, 1
      %s357 = smul.addr %s356, 8
      %s358 = smul.addr %s357, 8
      %s359 = scalar_lea.vmem %s10, %s358
      %vm360 = vcmask 31744
      %361 = vst.msk [vmem:[#allocation2] sm:$0xff] %vm360, 0.0
      %362 = vst.msk [vmem:[#allocation2 + $0x8] sm:$0xff] %vm360, 0.0
      %vm363 = vcmask 25600
      %364 = vst.msk [vmem:[#allocation2 + $0x10] sm:$0x3] %vm363, 0.0
      %s365 = scalar_lea.vmem [#allocation2], 408
      %366 = vst.msk [vmem:[%s365] sm:$0xff] %vm360, 0.0
      %367 = vst.msk [vmem:[%s365 + $0x8] sm:$0xff] %vm360, 0.0
      %368 = vst.msk [vmem:[%s365 + $0x10] sm:$0x3] %vm363, 0.0
      %vm369 = vcmask 24576
      %370 = vst.msk [vmem:[#allocation2] sm:$0x1] %vm369, 0.0
      %371 = vst.msk [vmem:[#allocation2 + $0x18] sm:$0x1] %vm369, 0.0
      %372 = vst.msk [vmem:[#allocation2 + $0x30] sm:$0x1] %vm369, 0.0
      %373 = vst.msk [vmem:[#allocation2 + $0x48] sm:$0x1] %vm369, 0.0
      %374 = vst.msk [vmem:[#allocation2 + $0x60] sm:$0x1] %vm369, 0.0
      %375 = vst.msk [vmem:[#allocation2 + $0x78] sm:$0x1] %vm369, 0.0
      %376 = vst.msk [vmem:[#allocation2 + $0x90] sm:$0x1] %vm369, 0.0
      %377 = vst.msk [vmem:[#allocation2 + $0xa8] sm:$0x1] %vm369, 0.0
      %378 = vst.msk [vmem:[#allocation2 + $0xc0] sm:$0x1] %vm369, 0.0
      %379 = vst.msk [vmem:[#allocation2 + $0xd8] sm:$0x1] %vm369, 0.0
      %380 = vst.msk [vmem:[#allocation2 + $0xf0] sm:$0x1] %vm369, 0.0
      %381 = vst.msk [vmem:[#allocation2 + $0x108] sm:$0x1] %vm369, 0.0
      %382 = vst.msk [vmem:[#allocation2 + $0x120] sm:$0x1] %vm369, 0.0
      %383 = vst.msk [vmem:[#allocation2 + $0x138] sm:$0x1] %vm369, 0.0
      %384 = vst.msk [vmem:[#allocation2 + $0x150] sm:$0x1] %vm369, 0.0
      %385 = vst.msk [vmem:[#allocation2 + $0x168] sm:$0x1] %vm369, 0.0
      %386 = vst.msk [vmem:[#allocation2 + $0x180] sm:$0x1] %vm369, 0.0
      %387 = vst.msk [vmem:[#allocation2 + $0x198] sm:$0x1] %vm369, 0.0
      %388 = vst.msk [vmem:[#allocation2 + $0x11] sm:$0x1] %vm369, 0.0
      %389 = vst.msk [vmem:[#allocation2 + $0x29] sm:$0x1] %vm369, 0.0
      %390 = vst.msk [vmem:[#allocation2 + $0x41] sm:$0x1] %vm369, 0.0
      %391 = vst.msk [vmem:[#allocation2 + $0x59] sm:$0x1] %vm369, 0.0
      %392 = vst.msk [vmem:[#allocation2 + $0x71] sm:$0x1] %vm369, 0.0
      %393 = vst.msk [vmem:[#allocation2 + $0x89] sm:$0x1] %vm369, 0.0
      %394 = vst.msk [vmem:[#allocation2 + $0xa1] sm:$0x1] %vm369, 0.0
      %395 = vst.msk [vmem:[#allocation2 + $0xb9] sm:$0x1] %vm369, 0.0
      %396 = vst.msk [vmem:[#allocation2 + $0xd1] sm:$0x1] %vm369, 0.0
      %397 = vst.msk [vmem:[#allocation2 + $0xe9] sm:$0x1] %vm369, 0.0
      %398 = vst.msk [vmem:[#allocation2 + $0x101] sm:$0x1] %vm369, 0.0
      %399 = vst.msk [vmem:[#allocation2 + $0x119] sm:$0x1] %vm369, 0.0
      %400 = vst.msk [vmem:[#allocation2 + $0x131] sm:$0x1] %vm369, 0.0
      %401 = vst.msk [vmem:[#allocation2 + $0x149] sm:$0x1] %vm369, 0.0
      %402 = vst.msk [vmem:[#allocation2 + $0x161] sm:$0x1] %vm369, 0.0
      %403 = vst.msk [vmem:[#allocation2 + $0x179] sm:$0x1] %vm369, 0.0
      %404 = vst.msk [vmem:[#allocation2 + $0x191] sm:$0x1] %vm369, 0.0
      %405 = vst.msk [vmem:[#allocation2 + $0x1a9] sm:$0x1] %vm369, 0.0
      %vm406 = vcmask 64512
      %407 = vst.msk [vmem:[#allocation3] sm:$0xff] %vm406, 0.0
      %vm408 = vcmask 58368
      %409 = vst.msk [vmem:[#allocation3 + $0x8] sm:$0x3] %vm408, 0.0
      %s410 = scalar_lea.vmem [#allocation3], 144
      %411 = vst.msk [vmem:[%s410] sm:$0xff] %vm406, 0.0
      %412 = vst.msk [vmem:[%s410 + $0x8] sm:$0x3] %vm408, 0.0
      %vm413 = vcmask 57344
      %414 = vst.msk [vmem:[#allocation3] sm:$0x1] %vm413, 0.0
      %415 = vst.msk [vmem:[#allocation3 + $0x10] sm:$0x1] %vm413, 0.0
      %416 = vst.msk [vmem:[#allocation3 + $0x20] sm:$0x1] %vm413, 0.0
      %417 = vst.msk [vmem:[#allocation3 + $0x30] sm:$0x1] %vm413, 0.0
      %418 = vst.msk [vmem:[#allocation3 + $0x40] sm:$0x1] %vm413, 0.0
      %419 = vst.msk [vmem:[#allocation3 + $0x50] sm:$0x1] %vm413, 0.0
      %420 = vst.msk [vmem:[#allocation3 + $0x60] sm:$0x1] %vm413, 0.0
      %421 = vst.msk [vmem:[#allocation3 + $0x70] sm:$0x1] %vm413, 0.0
      %422 = vst.msk [vmem:[#allocation3 + $0x80] sm:$0x1] %vm413, 0.0
      %423 = vst.msk [vmem:[#allocation3 + $0x90] sm:$0x1] %vm413, 0.0
      %424 = vst.msk [vmem:[#allocation3 + $0x9] sm:$0x1] %vm413, 0.0
      %425 = vst.msk [vmem:[#allocation3 + $0x19] sm:$0x1] %vm413, 0.0
      %426 = vst.msk [vmem:[#allocation3 + $0x29] sm:$0x1] %vm413, 0.0
      %427 = vst.msk [vmem:[#allocation3 + $0x39] sm:$0x1] %vm413, 0.0
      %428 = vst.msk [vmem:[#allocation3 + $0x49] sm:$0x1] %vm413, 0.0
      %429 = vst.msk [vmem:[#allocation3 + $0x59] sm:$0x1] %vm413, 0.0
      %430 = vst.msk [vmem:[#allocation3 + $0x69] sm:$0x1] %vm413, 0.0
      %431 = vst.msk [vmem:[#allocation3 + $0x79] sm:$0x1] %vm413, 0.0
      %432 = vst.msk [vmem:[#allocation3 + $0x89] sm:$0x1] %vm413, 0.0
      %433 = vst.msk [vmem:[#allocation3 + $0x99] sm:$0x1] %vm413, 0.0
      %v434 = vld [vmem:[%s354] sm:$0xff]
      %v435 = vld [vmem:[%s354 + $0x8] sm:$0xff]
      %v436 = vld [vmem:[%s354 + $0x10] sm:$0xff]
      %v437 = vld [vmem:[%s354 + $0x18] sm:$0xff]
      %v438 = vld [vmem:[%s354 + $0x20] sm:$0xff]
      %v439 = vld [vmem:[%s354 + $0x28] sm:$0xff]
      %v440 = vld [vmem:[%s354 + $0x30] sm:$0xff]
      %v441 = vld [vmem:[%s354 + $0x38] sm:$0xff]
      %v442 = vld [vmem:[%s354 + $0x40] sm:$0xff]
      %v443 = vld [vmem:[%s354 + $0x48] sm:$0xff]
      %v444 = vld [vmem:[%s354 + $0x50] sm:$0xff]
      %v445 = vld [vmem:[%s354 + $0x58] sm:$0xff]
      %v446 = vld [vmem:[%s354 + $0x60] sm:$0xff]
      %v447 = vld [vmem:[%s354 + $0x68] sm:$0xff]
      %v448 = vld [vmem:[%s354 + $0x70] sm:$0xff]
      %v449 = vld [vmem:[%s354 + $0x78] sm:$0xff]
      %v450 = vld [vmem:[%s354 + $0x80] sm:$0xff]
      %v451 = vld [vmem:[%s354 + $0x88] sm:$0xff]
      %v452 = vld [vmem:[%s354 + $0x90] sm:$0xff]
      %v453 = vld [vmem:[%s354 + $0x98] sm:$0xff]
      %v454 = vld [vmem:[%s354 + $0xa0] sm:$0xff]
      %v455 = vld [vmem:[%s354 + $0xa8] sm:$0xff]
      %v456 = vld [vmem:[%s354 + $0xb0] sm:$0xff]
      %v457 = vld [vmem:[%s354 + $0xb8] sm:$0xff]
      %v458 = vld [vmem:[%s354 + $0xc0] sm:$0xff]
      %v459 = vld [vmem:[%s354 + $0xc8] sm:$0xff]
      %v460 = vld [vmem:[%s354 + $0xd0] sm:$0xff]
      %v461 = vld [vmem:[%s354 + $0xd8] sm:$0xff]
      %v462 = vld [vmem:[%s354 + $0xe0] sm:$0xff]
      %v463 = vld [vmem:[%s354 + $0xe8] sm:$0xff]
      %v464 = vld [vmem:[%s354 + $0xf0] sm:$0xff]
      %v465 = vld [vmem:[%s354 + $0xf8] sm:$0xff]
      %s466 = scalar_lea.vmem [#allocation2], 24
      %467 = vst.msk [vmem:[%s466 + $0x1] sm:$0xff] %vm360, %v434
      %468 = vst.msk [vmem:[%s466 + $0x9] sm:$0xff] %vm360, %v435
      %469 = vst.msk [vmem:[%s466 + $0x19] sm:$0xff] %vm360, %v436
      %470 = vst.msk [vmem:[%s466 + $0x21] sm:$0xff] %vm360, %v437
      %471 = vst.msk [vmem:[%s466 + $0x31] sm:$0xff] %vm360, %v438
      %472 = vst.msk [vmem:[%s466 + $0x39] sm:$0xff] %vm360, %v439
      %473 = vst.msk [vmem:[%s466 + $0x49] sm:$0xff] %vm360, %v440
      %474 = vst.msk [vmem:[%s466 + $0x51] sm:$0xff] %vm360, %v441
      %475 = vst.msk [vmem:[%s466 + $0x61] sm:$0xff] %vm360, %v442
      %476 = vst.msk [vmem:[%s466 + $0x69] sm:$0xff] %vm360, %v443
      %477 = vst.msk [vmem:[%s466 + $0x79] sm:$0xff] %vm360, %v444
      %478 = vst.msk [vmem:[%s466 + $0x81] sm:$0xff] %vm360, %v445
      %479 = vst.msk [vmem:[%s466 + $0x91] sm:$0xff] %vm360, %v446
      %480 = vst.msk [vmem:[%s466 + $0x99] sm:$0xff] %vm360, %v447
      %481 = vst.msk [vmem:[%s466 + $0xa9] sm:$0xff] %vm360, %v448
      %482 = vst.msk [vmem:[%s466 + $0xb1] sm:$0xff] %vm360, %v449
      %483 = vst.msk [vmem:[%s466 + $0xc1] sm:$0xff] %vm360, %v450
      %484 = vst.msk [vmem:[%s466 + $0xc9] sm:$0xff] %vm360, %v451
      %485 = vst.msk [vmem:[%s466 + $0xd9] sm:$0xff] %vm360, %v452
      %486 = vst.msk [vmem:[%s466 + $0xe1] sm:$0xff] %vm360, %v453
      %487 = vst.msk [vmem:[%s466 + $0xf1] sm:$0xff] %vm360, %v454
      %488 = vst.msk [vmem:[%s466 + $0xf9] sm:$0xff] %vm360, %v455
      %489 = vst.msk [vmem:[%s466 + $0x109] sm:$0xff] %vm360, %v456
      %490 = vst.msk [vmem:[%s466 + $0x111] sm:$0xff] %vm360, %v457
      %491 = vst.msk [vmem:[%s466 + $0x121] sm:$0xff] %vm360, %v458
      %492 = vst.msk [vmem:[%s466 + $0x129] sm:$0xff] %vm360, %v459
      %493 = vst.msk [vmem:[%s466 + $0x139] sm:$0xff] %vm360, %v460
      %494 = vst.msk [vmem:[%s466 + $0x141] sm:$0xff] %vm360, %v461
      %495 = vst.msk [vmem:[%s466 + $0x151] sm:$0xff] %vm360, %v462
      %496 = vst.msk [vmem:[%s466 + $0x159] sm:$0xff] %vm360, %v463
      %497 = vst.msk [vmem:[%s466 + $0x169] sm:$0xff] %vm360, %v464
      %498 = vst.msk [vmem:[%s466 + $0x171] sm:$0xff] %vm360, %v465
      %v499 = vld [vmem:[#allocation2] ss:$2 sm:$0xff]
      %s500 = scalar_lea.vmem [#allocation2], 16
      %v501 = vld [vmem:[%s500] ss:$2 sm:$0x1]
      %s502 = scalar_lea.vmem [#allocation2], 24
      %v503 = vld [vmem:[%s502] ss:$2 sm:$0xff]
      %s504 = scalar_lea.vmem [#allocation2], 40
      %v505 = vld [vmem:[%s504] ss:$2 sm:$0x1]
      %s506 = scalar_lea.vmem [#allocation2], 48
      %v507 = vld [vmem:[%s506] ss:$2 sm:$0xff]
      %s508 = scalar_lea.vmem [#allocation2], 64
      %v509 = vld [vmem:[%s508] ss:$2 sm:$0x1]
      %s510 = scalar_lea.vmem [#allocation2], 72
      %v511 = vld [vmem:[%s510] ss:$2 sm:$0xff]
      %s512 = scalar_lea.vmem [#allocation2], 88
      %v513 = vld [vmem:[%s512] ss:$2 sm:$0x1]
      %s514 = scalar_lea.vmem [#allocation2], 96
      %v515 = vld [vmem:[%s514] ss:$2 sm:$0xff]
      %s516 = scalar_lea.vmem [#allocation2], 112
      %v517 = vld [vmem:[%s516] ss:$2 sm:$0x1]
      %s518 = scalar_lea.vmem [#allocation2], 120
      %v519 = vld [vmem:[%s518] ss:$2 sm:$0xff]
      %s520 = scalar_lea.vmem [#allocation2], 136
      %v521 = vld [vmem:[%s520] ss:$2 sm:$0x1]
      %s522 = scalar_lea.vmem [#allocation2], 144
      %v523 = vld [vmem:[%s522] ss:$2 sm:$0xff]
      %s524 = scalar_lea.vmem [#allocation2], 160
      %v525 = vld [vmem:[%s524] ss:$2 sm:$0x1]
      %s526 = scalar_lea.vmem [#allocation2], 168
      %v527 = vld [vmem:[%s526] ss:$2 sm:$0xff]
      %s528 = scalar_lea.vmem [#allocation2], 184
      %v529 = vld [vmem:[%s528] ss:$2 sm:$0x1]
      %s530 = scalar_lea.vmem [#allocation2], 192
      %v531 = vld [vmem:[%s530] ss:$2 sm:$0xff]
      %s532 = scalar_lea.vmem [#allocation2], 208
      %v533 = vld [vmem:[%s532] ss:$2 sm:$0x1]
      %s534 = scalar_lea.vmem [#allocation2], 216
      %v535 = vld [vmem:[%s534] ss:$2 sm:$0xff]
      %s536 = scalar_lea.vmem [#allocation2], 232
      %v537 = vld [vmem:[%s536] ss:$2 sm:$0x1]
      %s538 = scalar_lea.vmem [#allocation2], 240
      %v539 = vld [vmem:[%s538] ss:$2 sm:$0xff]
      %s540 = scalar_lea.vmem [#allocation2], 256
      %v541 = vld [vmem:[%s540] ss:$2 sm:$0x1]
      %s542 = scalar_lea.vmem [#allocation2], 264
      %v543 = vld [vmem:[%s542] ss:$2 sm:$0xff]
      %s544 = scalar_lea.vmem [#allocation2], 280
      %v545 = vld [vmem:[%s544] ss:$2 sm:$0x1]
      %s546 = scalar_lea.vmem [#allocation2], 288
      %v547 = vld [vmem:[%s546] ss:$2 sm:$0xff]
      %s548 = scalar_lea.vmem [#allocation2], 304
      %v549 = vld [vmem:[%s548] ss:$2 sm:$0x1]
      %s550 = scalar_lea.vmem [#allocation2], 312
      %v551 = vld [vmem:[%s550] ss:$2 sm:$0xff]
      %s552 = scalar_lea.vmem [#allocation2], 328
      %v553 = vld [vmem:[%s552] ss:$2 sm:$0x1]
      %s554 = scalar_lea.vmem [#allocation2], 336
      %v555 = vld [vmem:[%s554] ss:$2 sm:$0xff]
      %s556 = scalar_lea.vmem [#allocation2], 352
      %v557 = vld [vmem:[%s556] ss:$2 sm:$0x1]
      %s558 = scalar_lea.vmem [#allocation2], 360
      %v559 = vld [vmem:[%s558] ss:$2 sm:$0xff]
      %s560 = scalar_lea.vmem [#allocation2], 376
      %v561 = vld [vmem:[%s560] ss:$2 sm:$0x1]
      %s562 = scalar_lea.vmem [#allocation2], 384
      %v563 = vld [vmem:[%s562] ss:$2 sm:$0xff]
      %s564 = scalar_lea.vmem [#allocation2], 400
      %v565 = vld [vmem:[%s564] ss:$2 sm:$0x1]
      %s566 = scalar_lea.vmem [#allocation2], 408
      %v567 = vld [vmem:[%s566] ss:$2 sm:$0xff]
      %s568 = scalar_lea.vmem [#allocation2], 424
      %v569 = vld [vmem:[%s568] ss:$2 sm:$0x1]
      %570 = vst.msk [vmem:[#allocation5] sm:$0xff] %vm360, %v499
      %571 = vst.msk [vmem:[#allocation5 + $0x8] sm:$0x1] %vm369, %v501
      %572 = vst.msk [vmem:[#allocation5 + $0x10] sm:$0xff] %vm360, %v503
      %573 = vst.msk [vmem:[#allocation5 + $0x18] sm:$0x1] %vm369, %v505
      %574 = vst.msk [vmem:[#allocation5 + $0x20] sm:$0xff] %vm360, %v507
      %575 = vst.msk [vmem:[#allocation5 + $0x28] sm:$0x1] %vm369, %v509
      %576 = vst.msk [vmem:[#allocation5 + $0x30] sm:$0xff] %vm360, %v511
      %577 = vst.msk [vmem:[#allocation5 + $0x38] sm:$0x1] %vm369, %v513
      %578 = vst.msk [vmem:[#allocation5 + $0x40] sm:$0xff] %vm360, %v515
      %579 = vst.msk [vmem:[#allocation5 + $0x48] sm:$0x1] %vm369, %v517
      %580 = vst.msk [vmem:[#allocation5 + $0x50] sm:$0xff] %vm360, %v519
      %581 = vst.msk [vmem:[#allocation5 + $0x58] sm:$0x1] %vm369, %v521
      %582 = vst.msk [vmem:[#allocation5 + $0x60] sm:$0xff] %vm360, %v523
      %583 = vst.msk [vmem:[#allocation5 + $0x68] sm:$0x1] %vm369, %v525
      %584 = vst.msk [vmem:[#allocation5 + $0x70] sm:$0xff] %vm360, %v527
      %585 = vst.msk [vmem:[#allocation5 + $0x78] sm:$0x1] %vm369, %v529
      %586 = vst.msk [vmem:[#allocation5 + $0x80] sm:$0xff] %vm360, %v531
      %587 = vst.msk [vmem:[#allocation5 + $0x88] sm:$0x1] %vm369, %v533
      %588 = vst.msk [vmem:[#allocation5 + $0x90] sm:$0xff] %vm360, %v535
      %589 = vst.msk [vmem:[#allocation5 + $0x98] sm:$0x1] %vm369, %v537
      %590 = vst.msk [vmem:[#allocation5 + $0xa0] sm:$0xff] %vm360, %v539
      %591 = vst.msk [vmem:[#allocation5 + $0xa8] sm:$0x1] %vm369, %v541
      %592 = vst.msk [vmem:[#allocation5 + $0xb0] sm:$0xff] %vm360, %v543
      %593 = vst.msk [vmem:[#allocation5 + $0xb8] sm:$0x1] %vm369, %v545
      %594 = vst.msk [vmem:[#allocation5 + $0xc0] sm:$0xff] %vm360, %v547
      %595 = vst.msk [vmem:[#allocation5 + $0xc8] sm:$0x1] %vm369, %v549
      %596 = vst.msk [vmem:[#allocation5 + $0xd0] sm:$0xff] %vm360, %v551
      %597 = vst.msk [vmem:[#allocation5 + $0xd8] sm:$0x1] %vm369, %v553
      %598 = vst.msk [vmem:[#allocation5 + $0xe0] sm:$0xff] %vm360, %v555
      %599 = vst.msk [vmem:[#allocation5 + $0xe8] sm:$0x1] %vm369, %v557
      %600 = vst.msk [vmem:[#allocation5 + $0xf0] sm:$0xff] %vm360, %v559
      %601 = vst.msk [vmem:[#allocation5 + $0xf8] sm:$0x1] %vm369, %v561
      %602 = vst.msk [vmem:[#allocation5 + $0x100] sm:$0xff] %vm360, %v563
      %603 = vst.msk [vmem:[#allocation5 + $0x108] sm:$0x1] %vm369, %v565
      %604 = vst.msk [vmem:[#allocation5 + $0x110] sm:$0xff] %vm360, %v567
      %605 = vst.msk [vmem:[#allocation5 + $0x118] sm:$0x1] %vm369, %v569
      %s606 = scalar_lea.vmem [#allocation2], 1
      %v607 = vld [vmem:[%s606] ss:$2 sm:$0xff]
      %s608 = scalar_lea.vmem [#allocation2], 17
      %v609 = vld [vmem:[%s608] ss:$2 sm:$0x1]
      %s610 = scalar_lea.vmem [#allocation2], 25
      %v611 = vld [vmem:[%s610] ss:$2 sm:$0xff]
      %s612 = scalar_lea.vmem [#allocation2], 41
      %v613 = vld [vmem:[%s612] ss:$2 sm:$0x1]
      %s614 = scalar_lea.vmem [#allocation2], 49
      %v615 = vld [vmem:[%s614] ss:$2 sm:$0xff]
      %s616 = scalar_lea.vmem [#allocation2], 65
      %v617 = vld [vmem:[%s616] ss:$2 sm:$0x1]
      %s618 = scalar_lea.vmem [#allocation2], 73
      %v619 = vld [vmem:[%s618] ss:$2 sm:$0xff]
      %s620 = scalar_lea.vmem [#allocation2], 89
      %v621 = vld [vmem:[%s620] ss:$2 sm:$0x1]
      %s622 = scalar_lea.vmem [#allocation2], 97
      %v623 = vld [vmem:[%s622] ss:$2 sm:$0xff]
      %s624 = scalar_lea.vmem [#allocation2], 113
      %v625 = vld [vmem:[%s624] ss:$2 sm:$0x1]
      %s626 = scalar_lea.vmem [#allocation2], 121
      %v627 = vld [vmem:[%s626] ss:$2 sm:$0xff]
      %s628 = scalar_lea.vmem [#allocation2], 137
      %v629 = vld [vmem:[%s628] ss:$2 sm:$0x1]
      %s630 = scalar_lea.vmem [#allocation2], 145
      %v631 = vld [vmem:[%s630] ss:$2 sm:$0xff]
      %s632 = scalar_lea.vmem [#allocation2], 161
      %v633 = vld [vmem:[%s632] ss:$2 sm:$0x1]
      %s634 = scalar_lea.vmem [#allocation2], 169
      %v635 = vld [vmem:[%s634] ss:$2 sm:$0xff]
      %s636 = scalar_lea.vmem [#allocation2], 185
      %v637 = vld [vmem:[%s636] ss:$2 sm:$0x1]
      %s638 = scalar_lea.vmem [#allocation2], 193
      %v639 = vld [vmem:[%s638] ss:$2 sm:$0xff]
      %s640 = scalar_lea.vmem [#allocation2], 209
      %v641 = vld [vmem:[%s640] ss:$2 sm:$0x1]
      %s642 = scalar_lea.vmem [#allocation2], 217
      %v643 = vld [vmem:[%s642] ss:$2 sm:$0xff]
      %s644 = scalar_lea.vmem [#allocation2], 233
      %v645 = vld [vmem:[%s644] ss:$2 sm:$0x1]
      %s646 = scalar_lea.vmem [#allocation2], 241
      %v647 = vld [vmem:[%s646] ss:$2 sm:$0xff]
      %s648 = scalar_lea.vmem [#allocation2], 257
      %v649 = vld [vmem:[%s648] ss:$2 sm:$0x1]
      %s650 = scalar_lea.vmem [#allocation2], 265
      %v651 = vld [vmem:[%s650] ss:$2 sm:$0xff]
      %s652 = scalar_lea.vmem [#allocation2], 281
      %v653 = vld [vmem:[%s652] ss:$2 sm:$0x1]
      %s654 = scalar_lea.vmem [#allocation2], 289
      %v655 = vld [vmem:[%s654] ss:$2 sm:$0xff]
      %s656 = scalar_lea.vmem [#allocation2], 305
      %v657 = vld [vmem:[%s656] ss:$2 sm:$0x1]
      %s658 = scalar_lea.vmem [#allocation2], 313
      %v659 = vld [vmem:[%s658] ss:$2 sm:$0xff]
      %s660 = scalar_lea.vmem [#allocation2], 329
      %v661 = vld [vmem:[%s660] ss:$2 sm:$0x1]
      %s662 = scalar_lea.vmem [#allocation2], 337
      %v663 = vld [vmem:[%s662] ss:$2 sm:$0xff]
      %s664 = scalar_lea.vmem [#allocation2], 353
      %v665 = vld [vmem:[%s664] ss:$2 sm:$0x1]
      %s666 = scalar_lea.vmem [#allocation2], 361
      %v667 = vld [vmem:[%s666] ss:$2 sm:$0xff]
      %s668 = scalar_lea.vmem [#allocation2], 377
      %v669 = vld [vmem:[%s668] ss:$2 sm:$0x1]
      %s670 = scalar_lea.vmem [#allocation2], 385
      %v671 = vld [vmem:[%s670] ss:$2 sm:$0xff]
      %s672 = scalar_lea.vmem [#allocation2], 401
      %v673 = vld [vmem:[%s672] ss:$2 sm:$0x1]
      %s674 = scalar_lea.vmem [#allocation2], 409
      %v675 = vld [vmem:[%s674] ss:$2 sm:$0xff]
      %s676 = scalar_lea.vmem [#allocation2], 425
      %v677 = vld [vmem:[%s676] ss:$2 sm:$0x1]
      %678 = vst.msk [vmem:[#allocation6] sm:$0xff] %vm360, %v607
      %679 = vst.msk [vmem:[#allocation6 + $0x8] sm:$0x1] %vm369, %v609
      %680 = vst.msk [vmem:[#allocation6 + $0x10] sm:$0xff] %vm360, %v611
      %681 = vst.msk [vmem:[#allocation6 + $0x18] sm:$0x1] %vm369, %v613
      %682 = vst.msk [vmem:[#allocation6 + $0x20] sm:$0xff] %vm360, %v615
      %683 = vst.msk [vmem:[#allocation6 + $0x28] sm:$0x1] %vm369, %v617
      %684 = vst.msk [vmem:[#allocation6 + $0x30] sm:$0xff] %vm360, %v619
      %685 = vst.msk [vmem:[#allocation6 + $0x38] sm:$0x1] %vm369, %v621
      %686 = vst.msk [vmem:[#allocation6 + $0x40] sm:$0xff] %vm360, %v623
      %687 = vst.msk [vmem:[#allocation6 + $0x48] sm:$0x1] %vm369, %v625
      %688 = vst.msk [vmem:[#allocation6 + $0x50] sm:$0xff] %vm360, %v627
      %689 = vst.msk [vmem:[#allocation6 + $0x58] sm:$0x1] %vm369, %v629
      %690 = vst.msk [vmem:[#allocation6 + $0x60] sm:$0xff] %vm360, %v631
      %691 = vst.msk [vmem:[#allocation6 + $0x68] sm:$0x1] %vm369, %v633
      %692 = vst.msk [vmem:[#allocation6 + $0x70] sm:$0xff] %vm360, %v635
      %693 = vst.msk [vmem:[#allocation6 + $0x78] sm:$0x1] %vm369, %v637
      %694 = vst.msk [vmem:[#allocation6 + $0x80] sm:$0xff] %vm360, %v639
      %695 = vst.msk [vmem:[#allocation6 + $0x88] sm:$0x1] %vm369, %v641
      %696 = vst.msk [vmem:[#allocation6 + $0x90] sm:$0xff] %vm360, %v643
      %697 = vst.msk [vmem:[#allocation6 + $0x98] sm:$0x1] %vm369, %v645
      %698 = vst.msk [vmem:[#allocation6 + $0xa0] sm:$0xff] %vm360, %v647
      %699 = vst.msk [vmem:[#allocation6 + $0xa8] sm:$0x1] %vm369, %v649
      %700 = vst.msk [vmem:[#allocation6 + $0xb0] sm:$0xff] %vm360, %v651
      %701 = vst.msk [vmem:[#allocation6 + $0xb8] sm:$0x1] %vm369, %v653
      %702 = vst.msk [vmem:[#allocation6 + $0xc0] sm:$0xff] %vm360, %v655
      %703 = vst.msk [vmem:[#allocation6 + $0xc8] sm:$0x1] %vm369, %v657
      %704 = vst.msk [vmem:[#allocation6 + $0xd0] sm:$0xff] %vm360, %v659
      %705 = vst.msk [vmem:[#allocation6 + $0xd8] sm:$0x1] %vm369, %v661
      %706 = vst.msk [vmem:[#allocation6 + $0xe0] sm:$0xff] %vm360, %v663
      %707 = vst.msk [vmem:[#allocation6 + $0xe8] sm:$0x1] %vm369, %v665
      %708 = vst.msk [vmem:[#allocation6 + $0xf0] sm:$0xff] %vm360, %v667
      %709 = vst.msk [vmem:[#allocation6 + $0xf8] sm:$0x1] %vm369, %v669
      %710 = vst.msk [vmem:[#allocation6 + $0x100] sm:$0xff] %vm360, %v671
      %711 = vst.msk [vmem:[#allocation6 + $0x108] sm:$0x1] %vm369, %v673
      %712 = vst.msk [vmem:[#allocation6 + $0x110] sm:$0xff] %vm360, %v675
      %713 = vst.msk [vmem:[#allocation6 + $0x118] sm:$0x1] %vm369, %v677
      %v714 = vld [vmem:[#allocation5] sm:$0xff]
      %v715 = vld [vmem:[#allocation5 + $0x20] sm:$0xff]
      %v716 = vld [vmem:[#allocation5 + $0x40] sm:$0xff]
      %v717 = vld [vmem:[#allocation5 + $0x60] sm:$0xff]
      %v718 = vld [vmem:[#allocation5 + $0x80] sm:$0xff]
      %v719 = vld [vmem:[#allocation5 + $0xa0] sm:$0xff]
      %v720 = vld [vmem:[#allocation5 + $0xc0] sm:$0xff]
      %v721 = vld [vmem:[#allocation5 + $0xe0] sm:$0xff]
      %v722 = vld [vmem:[%s1] sm:$0xf]
      %v724 = vsel %vm360, %v714, 0
      %v727 = vsel %vm360, %v715, 0
      %v730 = vsel %vm360, %v716, 0
      %v733 = vsel %vm360, %v717, 0
      %v736 = vsel %vm360, %v718, 0
      %v739 = vsel %vm360, %v719, 0
      %v742 = vsel %vm360, %v720, 0
      %v745 = vsel %vm360, %v721, 0
      %vm747 = vcmask 1043456
      %v749 = vsel %vm747, %v722, 0
      %751 = vmatprep.subr.mxu0 0.0
      %752 = vmatpush1.msra.mxu0 0.0
      %753 = vmatprep.subr.mxu0 0.0
      %754 = vmatpush1.msra.mxu0 0.0
      %755 = vmatprep.subr.mxu0 0.0
      %756 = vmatpush1.msra.mxu0 0.0
      %757 = vmatprep.subr.mxu0 0.0
      %758 = vmatpush1.msra.mxu0 0.0
      %759 = vmatprep.subr.mxu0 0.0
      %760 = vmatpush1.msra.mxu0 0.0
      %761 = vmatprep.subr.mxu0 0.0
      %762 = vmatpush1.msra.mxu0 0.0
      %763 = vmatprep.subr.mxu0 0.0
      %764 = vmatpush1.msra.mxu0 0.0
      %765 = vmatprep.subr.mxu0 0.0
      %766 = vmatpush1.msra.mxu0 0.0
      %767 = vmatprep.subr.mxu0 0.0
      %768 = vmatpush1.msra.mxu0 0.0
      %769 = vmatprep.subr.mxu0 0.0
      %770 = vmatpush1.msra.mxu0 0.0
      %771 = vmatprep.subr.mxu0 0.0
      %772 = vmatpush1.msra.mxu0 0.0
      %773 = vmatprep.subr.mxu0 0.0
      %774 = vmatpush1.msra.mxu0 0.0
      %775 = vmatprep.subr.mxu0 0.0
      %776 = vmatpush1.msra.mxu0 0.0
      %777 = vmatprep.subr.mxu0 0.0
      %778 = vmatpush1.msra.mxu0 0.0
      %779 = vmatprep.subr.mxu0 0.0
      %780 = vmatpush1.msra.mxu0 0.0
      %781 = vmatprep.subr.mxu0 0.0
      %782 = vmatpush1.msra.mxu0 %v749
      %783 = vmatprep.subr.mxu0 0.0
      %784 = vmatpush2.msra.mxu0 0.0
      %785 = vmatprep.subr.mxu0 0.0
      %786 = vmatpush2.msra.mxu0 0.0
      %787 = vmatprep.subr.mxu0 0.0
      %788 = vmatpush2.msra.mxu0 0.0
      %789 = vmatprep.subr.mxu0 0.0
      %790 = vmatpush2.msra.mxu0 0.0
      %791 = vmatprep.subr.mxu0 0.0
      %792 = vmatpush2.msra.mxu0 0.0
      %793 = vmatprep.subr.mxu0 0.0
      %794 = vmatpush2.msra.mxu0 0.0
      %795 = vmatprep.subr.mxu0 0.0
      %796 = vmatpush2.msra.mxu0 0.0
      %797 = vmatprep.subr.mxu0 0.0
      %798 = vmatpush2.msra.mxu0 0.0
      %799 = vmatprep.subr.mxu0 0.0
      %800 = vmatpush2.msra.mxu0 0.0
      %801 = vmatprep.subr.mxu0 0.0
      %802 = vmatpush2.msra.mxu0 0.0
      %803 = vmatprep.subr.mxu0 0.0
      %804 = vmatpush2.msra.mxu0 0.0
      %805 = vmatprep.subr.mxu0 0.0
      %806 = vmatpush2.msra.mxu0 0.0
      %807 = vmatprep.subr.mxu0 0.0
      %808 = vmatpush2.msra.mxu0 0.0
      %809 = vmatprep.subr.mxu0 0.0
      %810 = vmatpush2.msra.mxu0 0.0
      %811 = vmatprep.subr.mxu0 0.0
      %812 = vmatpush2.msra.mxu0 0.0
      %813 = vmatprep.subr.mxu0 0.0
      %814 = vmatpush2.msra.mxu0 0.0
      %815 = vmatprep.mubr.f32.mxu0 0.0
      %816 = vmatmul.mubr.f32.gmra.mxu0 %v724
      %v817 = vpop.f32.mrf.mxu0
      %v818 = vadd.f32 0.0, %v817
      %v819 = vpop.f32.mrf.mxu0
      %820 = vmatprep.mubr.f32.mxu0 0.0
      %821 = vmatmul.mubr.f32.gmra.mxu0 %v727
      %v822 = vpop.f32.mrf.mxu0
      %v823 = vadd.f32 0.0, %v822
      %v824 = vpop.f32.mrf.mxu0
      %825 = vmatprep.mubr.f32.mxu0 0.0
      %826 = vmatmul.mubr.f32.gmra.mxu0 %v730
      %v827 = vpop.f32.mrf.mxu0
      %v828 = vadd.f32 0.0, %v827
      %v829 = vpop.f32.mrf.mxu0
      %830 = vmatprep.mubr.f32.mxu0 0.0
      %831 = vmatmul.mubr.f32.gmra.mxu0 %v733
      %v832 = vpop.f32.mrf.mxu0
      %v833 = vadd.f32 0.0, %v832
      %v834 = vpop.f32.mrf.mxu0
      %835 = vmatprep.mubr.f32.mxu0 0.0
      %836 = vmatmul.mubr.f32.gmra.mxu0 %v736
      %v837 = vpop.f32.mrf.mxu0
      %v838 = vadd.f32 0.0, %v837
      %v839 = vpop.f32.mrf.mxu0
      %840 = vmatprep.mubr.f32.mxu0 0.0
      %841 = vmatmul.mubr.f32.gmra.mxu0 %v739
      %v842 = vpop.f32.mrf.mxu0
      %v843 = vadd.f32 0.0, %v842
      %v844 = vpop.f32.mrf.mxu0
      %845 = vmatprep.mubr.f32.mxu0 0.0
      %846 = vmatmul.mubr.f32.gmra.mxu0 %v742
      %v847 = vpop.f32.mrf.mxu0
      %v848 = vadd.f32 0.0, %v847
      %v849 = vpop.f32.mrf.mxu0
      %850 = vmatprep.mubr.f32.mxu0 0.0
      %851 = vmatmul.mubr.f32.gmra.mxu0 %v745
      %v852 = vpop.f32.mrf.mxu0
      %v853 = vadd.f32 0.0, %v852
      %v854 = vpop.f32.mrf.mxu0
      %855 = vdwg.mxu0
      %856 = vst.msk [vmem:[#allocation4] sm:$0xff] %vm406, %v818
      %857 = vst.msk [vmem:[#allocation4 + $0x8] sm:$0xff] %vm406, %v823
      %858 = vst.msk [vmem:[#allocation4 + $0x10] sm:$0xff] %vm406, %v828
      %859 = vst.msk [vmem:[#allocation4 + $0x18] sm:$0xff] %vm406, %v833
      %860 = vst.msk [vmem:[#allocation4 + $0x20] sm:$0xff] %vm406, %v838
      %861 = vst.msk [vmem:[#allocation4 + $0x28] sm:$0xff] %vm406, %v843
      %862 = vst.msk [vmem:[#allocation4 + $0x30] sm:$0xff] %vm406, %v848
      %863 = vst.msk [vmem:[#allocation4 + $0x38] sm:$0xff] %vm406, %v853
      %v864 = vld [vmem:[#allocation6] sm:$0xff]
      %v865 = vld [vmem:[#allocation6 + $0x20] sm:$0xff]
      %v866 = vld [vmem:[#allocation6 + $0x40] sm:$0xff]
      %v867 = vld [vmem:[#allocation6 + $0x60] sm:$0xff]
      %v868 = vld [vmem:[#allocation6 + $0x80] sm:$0xff]
      %v869 = vld [vmem:[#allocation6 + $0xa0] sm:$0xff]
      %v870 = vld [vmem:[#allocation6 + $0xc0] sm:$0xff]
      %v871 = vld [vmem:[#allocation6 + $0xe0] sm:$0xff]
      %s872 = scalar_lea.vmem %s1, 4
      %v873 = vld [vmem:[%s872] sm:$0xf]
      %v875 = vsel %vm360, %v864, 0
      %v878 = vsel %vm360, %v865, 0
      %v881 = vsel %vm360, %v866, 0
      %v884 = vsel %vm360, %v867, 0
      %v887 = vsel %vm360, %v868, 0
      %v890 = vsel %vm360, %v869, 0
      %v893 = vsel %vm360, %v870, 0
      %v896 = vsel %vm360, %v871, 0
      %v899 = vsel %vm747, %v873, 0
      %901 = vmatprep.subr.mxu0 0.0
      %902 = vmatpush1.msra.mxu0 0.0
      %903 = vmatprep.subr.mxu0 0.0
      %904 = vmatpush1.msra.mxu0 0.0
      %905 = vmatprep.subr.mxu0 0.0
      %906 = vmatpush1.msra.mxu0 0.0
      %907 = vmatprep.subr.mxu0 0.0
      %908 = vmatpush1.msra.mxu0 0.0
      %909 = vmatprep.subr.mxu0 0.0
      %910 = vmatpush1.msra.mxu0 0.0
      %911 = vmatprep.subr.mxu0 0.0
      %912 = vmatpush1.msra.mxu0 0.0
      %913 = vmatprep.subr.mxu0 0.0
      %914 = vmatpush1.msra.mxu0 0.0
      %915 = vmatprep.subr.mxu0 0.0
      %916 = vmatpush1.msra.mxu0 0.0
      %917 = vmatprep.subr.mxu0 0.0
      %918 = vmatpush1.msra.mxu0 0.0
      %919 = vmatprep.subr.mxu0 0.0
      %920 = vmatpush1.msra.mxu0 0.0
      %921 = vmatprep.subr.mxu0 0.0
      %922 = vmatpush1.msra.mxu0 0.0
      %923 = vmatprep.subr.mxu0 0.0
      %924 = vmatpush1.msra.mxu0 0.0
      %925 = vmatprep.subr.mxu0 0.0
      %926 = vmatpush1.msra.mxu0 0.0
      %927 = vmatprep.subr.mxu0 0.0
      %928 = vmatpush1.msra.mxu0 0.0
      %929 = vmatprep.subr.mxu0 0.0
      %930 = vmatpush1.msra.mxu0 0.0
      %931 = vmatprep.subr.mxu0 0.0
      %932 = vmatpush1.msra.mxu0 %v899
      %933 = vmatprep.subr.mxu0 0.0
      %934 = vmatpush2.msra.mxu0 0.0
      %935 = vmatprep.subr.mxu0 0.0
      %936 = vmatpush2.msra.mxu0 0.0
      %937 = vmatprep.subr.mxu0 0.0
      %938 = vmatpush2.msra.mxu0 0.0
      %939 = vmatprep.subr.mxu0 0.0
      %940 = vmatpush2.msra.mxu0 0.0
      %941 = vmatprep.subr.mxu0 0.0
      %942 = vmatpush2.msra.mxu0 0.0
      %943 = vmatprep.subr.mxu0 0.0
      %944 = vmatpush2.msra.mxu0 0.0
      %945 = vmatprep.subr.mxu0 0.0
      %946 = vmatpush2.msra.mxu0 0.0
      %947 = vmatprep.subr.mxu0 0.0
      %948 = vmatpush2.msra.mxu0 0.0
      %949 = vmatprep.subr.mxu0 0.0
      %950 = vmatpush2.msra.mxu0 0.0
      %951 = vmatprep.subr.mxu0 0.0
      %952 = vmatpush2.msra.mxu0 0.0
      %953 = vmatprep.subr.mxu0 0.0
      %954 = vmatpush2.msra.mxu0 0.0
      %955 = vmatprep.subr.mxu0 0.0
      %956 = vmatpush2.msra.mxu0 0.0
      %957 = vmatprep.subr.mxu0 0.0
      %958 = vmatpush2.msra.mxu0 0.0
      %959 = vmatprep.subr.mxu0 0.0
      %960 = vmatpush2.msra.mxu0 0.0
      %961 = vmatprep.subr.mxu0 0.0
      %962 = vmatpush2.msra.mxu0 0.0
      %963 = vmatprep.subr.mxu0 0.0
      %964 = vmatpush2.msra.mxu0 0.0
      %965 = vmatprep.mubr.f32.mxu0 0.0
      %966 = vmatmul.mubr.f32.gmra.mxu0 %v875
      %v967 = vpop.f32.mrf.mxu0
      %v968 = vadd.f32 0.0, %v967
      %v969 = vpop.f32.mrf.mxu0
      %970 = vmatprep.mubr.f32.mxu0 0.0
      %971 = vmatmul.mubr.f32.gmra.mxu0 %v878
      %v972 = vpop.f32.mrf.mxu0
      %v973 = vadd.f32 0.0, %v972
      %v974 = vpop.f32.mrf.mxu0
      %975 = vmatprep.mubr.f32.mxu0 0.0
      %976 = vmatmul.mubr.f32.gmra.mxu0 %v881
      %v977 = vpop.f32.mrf.mxu0
      %v978 = vadd.f32 0.0, %v977
      %v979 = vpop.f32.mrf.mxu0
      %980 = vmatprep.mubr.f32.mxu0 0.0
      %981 = vmatmul.mubr.f32.gmra.mxu0 %v884
      %v982 = vpop.f32.mrf.mxu0
      %v983 = vadd.f32 0.0, %v982
      %v984 = vpop.f32.mrf.mxu0
      %985 = vmatprep.mubr.f32.mxu0 0.0
      %986 = vmatmul.mubr.f32.gmra.mxu0 %v887
      %v987 = vpop.f32.mrf.mxu0
      %v988 = vadd.f32 0.0, %v987
      %v989 = vpop.f32.mrf.mxu0
      %990 = vmatprep.mubr.f32.mxu0 0.0
      %991 = vmatmul.mubr.f32.gmra.mxu0 %v890
      %v992 = vpop.f32.mrf.mxu0
      %v993 = vadd.f32 0.0, %v992
      %v994 = vpop.f32.mrf.mxu0
      %995 = vmatprep.mubr.f32.mxu0 0.0
      %996 = vmatmul.mubr.f32.gmra.mxu0 %v893
      %v997 = vpop.f32.mrf.mxu0
      %v998 = vadd.f32 0.0, %v997
      %v999 = vpop.f32.mrf.mxu0
      %1000 = vmatprep.mubr.f32.mxu0 0.0
      %1001 = vmatmul.mubr.f32.gmra.mxu0 %v896
      %v1002 = vpop.f32.mrf.mxu0
      %v1003 = vadd.f32 0.0, %v1002
      %v1004 = vpop.f32.mrf.mxu0
      %1005 = vdwg.mxu0
      %v1006 = vld [vmem:[#allocation4] sm:$0xff]
      %v1007 = vld [vmem:[#allocation4 + $0x8] sm:$0xff]
      %v1008 = vld [vmem:[#allocation4 + $0x10] sm:$0xff]
      %v1009 = vld [vmem:[#allocation4 + $0x18] sm:$0xff]
      %v1010 = vld [vmem:[#allocation4 + $0x20] sm:$0xff]
      %v1011 = vld [vmem:[#allocation4 + $0x28] sm:$0xff]
      %v1012 = vld [vmem:[#allocation4 + $0x30] sm:$0xff]
      %v1013 = vld [vmem:[#allocation4 + $0x38] sm:$0xff]
      %v1014 = vadd.f32 %v1006, %v968
      %v1015 = vadd.f32 %v1007, %v973
      %v1016 = vadd.f32 %v1008, %v978
      %v1017 = vadd.f32 %v1009, %v983
      %v1018 = vadd.f32 %v1010, %v988
      %v1019 = vadd.f32 %v1011, %v993
      %v1020 = vadd.f32 %v1012, %v998
      %v1021 = vadd.f32 %v1013, %v1003
      %1022 = vst.msk [vmem:[#allocation4] sm:$0xff] %vm406, %v1014
      %1023 = vst.msk [vmem:[#allocation4 + $0x8] sm:$0xff] %vm406, %v1015
      %1024 = vst.msk [vmem:[#allocation4 + $0x10] sm:$0xff] %vm406, %v1016
      %1025 = vst.msk [vmem:[#allocation4 + $0x18] sm:$0xff] %vm406, %v1017
      %1026 = vst.msk [vmem:[#allocation4 + $0x20] sm:$0xff] %vm406, %v1018
      %1027 = vst.msk [vmem:[#allocation4 + $0x28] sm:$0xff] %vm406, %v1019
      %1028 = vst.msk [vmem:[#allocation4 + $0x30] sm:$0xff] %vm406, %v1020
      %1029 = vst.msk [vmem:[#allocation4 + $0x38] sm:$0xff] %vm406, %v1021
      %v1030 = vld [vmem:[#allocation5 + $0x1] sm:$0xff]
      %v1031 = vld [vmem:[#allocation5 + $0x21] sm:$0xff]
      %v1032 = vld [vmem:[#allocation5 + $0x41] sm:$0xff]
      %v1033 = vld [vmem:[#allocation5 + $0x61] sm:$0xff]
      %v1034 = vld [vmem:[#allocation5 + $0x81] sm:$0xff]
      %v1035 = vld [vmem:[#allocation5 + $0xa1] sm:$0xff]
      %v1036 = vld [vmem:[#allocation5 + $0xc1] sm:$0xff]
      %v1037 = vld [vmem:[#allocation5 + $0xe1] sm:$0xff]
      %s1038 = scalar_lea.vmem %s1, 8
      %v1039 = vld [vmem:[%s1038] sm:$0xf]
      %v1041 = vsel %vm360, %v1030, 0
      %v1044 = vsel %vm360, %v1031, 0
      %v1047 = vsel %vm360, %v1032, 0
      %v1050 = vsel %vm360, %v1033, 0
      %v1053 = vsel %vm360, %v1034, 0
      %v1056 = vsel %vm360, %v1035, 0
      %v1059 = vsel %vm360, %v1036, 0
      %v1062 = vsel %vm360, %v1037, 0
      %v1065 = vsel %vm747, %v1039, 0
      %1067 = vmatprep.subr.mxu0 0.0
      %1068 = vmatpush1.msra.mxu0 0.0
      %1069 = vmatprep.subr.mxu0 0.0
      %1070 = vmatpush1.msra.mxu0 0.0
      %1071 = vmatprep.subr.mxu0 0.0
      %1072 = vmatpush1.msra.mxu0 0.0
      %1073 = vmatprep.subr.mxu0 0.0
      %1074 = vmatpush1.msra.mxu0 0.0
      %1075 = vmatprep.subr.mxu0 0.0
      %1076 = vmatpush1.msra.mxu0 0.0
      %1077 = vmatprep.subr.mxu0 0.0
      %1078 = vmatpush1.msra.mxu0 0.0
      %1079 = vmatprep.subr.mxu0 0.0
      %1080 = vmatpush1.msra.mxu0 0.0
      %1081 = vmatprep.subr.mxu0 0.0
      %1082 = vmatpush1.msra.mxu0 0.0
      %1083 = vmatprep.subr.mxu0 0.0
      %1084 = vmatpush1.msra.mxu0 0.0
      %1085 = vmatprep.subr.mxu0 0.0
      %1086 = vmatpush1.msra.mxu0 0.0
      %1087 = vmatprep.subr.mxu0 0.0
      %1088 = vmatpush1.msra.mxu0 0.0
      %1089 = vmatprep.subr.mxu0 0.0
      %1090 = vmatpush1.msra.mxu0 0.0
      %1091 = vmatprep.subr.mxu0 0.0
      %1092 = vmatpush1.msra.mxu0 0.0
      %1093 = vmatprep.subr.mxu0 0.0
      %1094 = vmatpush1.msra.mxu0 0.0
      %1095 = vmatprep.subr.mxu0 0.0
      %1096 = vmatpush1.msra.mxu0 0.0
      %1097 = vmatprep.subr.mxu0 0.0
      %1098 = vmatpush1.msra.mxu0 %v1065
      %1099 = vmatprep.subr.mxu0 0.0
      %1100 = vmatpush2.msra.mxu0 0.0
      %1101 = vmatprep.subr.mxu0 0.0
      %1102 = vmatpush2.msra.mxu0 0.0
      %1103 = vmatprep.subr.mxu0 0.0
      %1104 = vmatpush2.msra.mxu0 0.0
      %1105 = vmatprep.subr.mxu0 0.0
      %1106 = vmatpush2.msra.mxu0 0.0
      %1107 = vmatprep.subr.mxu0 0.0
      %1108 = vmatpush2.msra.mxu0 0.0
      %1109 = vmatprep.subr.mxu0 0.0
      %1110 = vmatpush2.msra.mxu0 0.0
      %1111 = vmatprep.subr.mxu0 0.0
      %1112 = vmatpush2.msra.mxu0 0.0
      %1113 = vmatprep.subr.mxu0 0.0
      %1114 = vmatpush2.msra.mxu0 0.0
      %1115 = vmatprep.subr.mxu0 0.0
      %1116 = vmatpush2.msra.mxu0 0.0
      %1117 = vmatprep.subr.mxu0 0.0
      %1118 = vmatpush2.msra.mxu0 0.0
      %1119 = vmatprep.subr.mxu0 0.0
      %1120 = vmatpush2.msra.mxu0 0.0
      %1121 = vmatprep.subr.mxu0 0.0
      %1122 = vmatpush2.msra.mxu0 0.0
      %1123 = vmatprep.subr.mxu0 0.0
      %1124 = vmatpush2.msra.mxu0 0.0
      %1125 = vmatprep.subr.mxu0 0.0
      %1126 = vmatpush2.msra.mxu0 0.0
      %1127 = vmatprep.subr.mxu0 0.0
      %1128 = vmatpush2.msra.mxu0 0.0
      %1129 = vmatprep.subr.mxu0 0.0
      %1130 = vmatpush2.msra.mxu0 0.0
      %1131 = vmatprep.mubr.f32.mxu0 0.0
      %1132 = vmatmul.mubr.f32.gmra.mxu0 %v1041
      %v1133 = vpop.f32.mrf.mxu0
      %v1134 = vadd.f32 0.0, %v1133
      %v1135 = vpop.f32.mrf.mxu0
      %1136 = vmatprep.mubr.f32.mxu0 0.0
      %1137 = vmatmul.mubr.f32.gmra.mxu0 %v1044
      %v1138 = vpop.f32.mrf.mxu0
      %v1139 = vadd.f32 0.0, %v1138
      %v1140 = vpop.f32.mrf.mxu0
      %1141 = vmatprep.mubr.f32.mxu0 0.0
      %1142 = vmatmul.mubr.f32.gmra.mxu0 %v1047
      %v1143 = vpop.f32.mrf.mxu0
      %v1144 = vadd.f32 0.0, %v1143
      %v1145 = vpop.f32.mrf.mxu0
      %1146 = vmatprep.mubr.f32.mxu0 0.0
      %1147 = vmatmul.mubr.f32.gmra.mxu0 %v1050
      %v1148 = vpop.f32.mrf.mxu0
      %v1149 = vadd.f32 0.0, %v1148
      %v1150 = vpop.f32.mrf.mxu0
      %1151 = vmatprep.mubr.f32.mxu0 0.0
      %1152 = vmatmul.mubr.f32.gmra.mxu0 %v1053
      %v1153 = vpop.f32.mrf.mxu0
      %v1154 = vadd.f32 0.0, %v1153
      %v1155 = vpop.f32.mrf.mxu0
      %1156 = vmatprep.mubr.f32.mxu0 0.0
      %1157 = vmatmul.mubr.f32.gmra.mxu0 %v1056
      %v1158 = vpop.f32.mrf.mxu0
      %v1159 = vadd.f32 0.0, %v1158
      %v1160 = vpop.f32.mrf.mxu0
      %1161 = vmatprep.mubr.f32.mxu0 0.0
      %1162 = vmatmul.mubr.f32.gmra.mxu0 %v1059
      %v1163 = vpop.f32.mrf.mxu0
      %v1164 = vadd.f32 0.0, %v1163
      %v1165 = vpop.f32.mrf.mxu0
      %1166 = vmatprep.mubr.f32.mxu0 0.0
      %1167 = vmatmul.mubr.f32.gmra.mxu0 %v1062
      %v1168 = vpop.f32.mrf.mxu0
      %v1169 = vadd.f32 0.0, %v1168
      %v1170 = vpop.f32.mrf.mxu0
      %1171 = vdwg.mxu0
      %v1172 = vld [vmem:[#allocation4] sm:$0xff]
      %v1173 = vld [vmem:[#allocation4 + $0x8] sm:$0xff]
      %v1174 = vld [vmem:[#allocation4 + $0x10] sm:$0xff]
      %v1175 = vld [vmem:[#allocation4 + $0x18] sm:$0xff]
      %v1176 = vld [vmem:[#allocation4 + $0x20] sm:$0xff]
      %v1177 = vld [vmem:[#allocation4 + $0x28] sm:$0xff]
      %v1178 = vld [vmem:[#allocation4 + $0x30] sm:$0xff]
      %v1179 = vld [vmem:[#allocation4 + $0x38] sm:$0xff]
      %v1180 = vadd.f32 %v1172, %v1134
      %v1181 = vadd.f32 %v1173, %v1139
      %v1182 = vadd.f32 %v1174, %v1144
      %v1183 = vadd.f32 %v1175, %v1149
      %v1184 = vadd.f32 %v1176, %v1154
      %v1185 = vadd.f32 %v1177, %v1159
      %v1186 = vadd.f32 %v1178, %v1164
      %v1187 = vadd.f32 %v1179, %v1169
      %1188 = vst.msk [vmem:[#allocation4] sm:$0xff] %vm406, %v1180
      %1189 = vst.msk [vmem:[#allocation4 + $0x8] sm:$0xff] %vm406, %v1181
      %1190 = vst.msk [vmem:[#allocation4 + $0x10] sm:$0xff] %vm406, %v1182
      %1191 = vst.msk [vmem:[#allocation4 + $0x18] sm:$0xff] %vm406, %v1183
      %1192 = vst.msk [vmem:[#allocation4 + $0x20] sm:$0xff] %vm406, %v1184
      %1193 = vst.msk [vmem:[#allocation4 + $0x28] sm:$0xff] %vm406, %v1185
      %1194 = vst.msk [vmem:[#allocation4 + $0x30] sm:$0xff] %vm406, %v1186
      %1195 = vst.msk [vmem:[#allocation4 + $0x38] sm:$0xff] %vm406, %v1187
      %s1196 = scalar_lea.vmem [#allocation5], 16
      %v1197 = vld [vmem:[%s1196] sm:$0xff]
      %v1198 = vld [vmem:[%s1196 + $0x20] sm:$0xff]
      %v1199 = vld [vmem:[%s1196 + $0x40] sm:$0xff]
      %v1200 = vld [vmem:[%s1196 + $0x60] sm:$0xff]
      %v1201 = vld [vmem:[%s1196 + $0x80] sm:$0xff]
      %v1202 = vld [vmem:[%s1196 + $0xa0] sm:$0xff]
      %v1203 = vld [vmem:[%s1196 + $0xc0] sm:$0xff]
      %v1204 = vld [vmem:[%s1196 + $0xe0] sm:$0xff]
      %s1205 = scalar_lea.vmem %s1, 12
      %v1206 = vld [vmem:[%s1205] sm:$0xf]
      %v1208 = vsel %vm360, %v1197, 0
      %v1211 = vsel %vm360, %v1198, 0
      %v1214 = vsel %vm360, %v1199, 0
      %v1217 = vsel %vm360, %v1200, 0
      %v1220 = vsel %vm360, %v1201, 0
      %v1223 = vsel %vm360, %v1202, 0
      %v1226 = vsel %vm360, %v1203, 0
      %v1229 = vsel %vm360, %v1204, 0
      %v1232 = vsel %vm747, %v1206, 0
      %1234 = vmatprep.subr.mxu0 0.0
      %1235 = vmatpush1.msra.mxu0 0.0
      %1236 = vmatprep.subr.mxu0 0.0
      %1237 = vmatpush1.msra.mxu0 0.0
      %1238 = vmatprep.subr.mxu0 0.0
      %1239 = vmatpush1.msra.mxu0 0.0
      %1240 = vmatprep.subr.mxu0 0.0
      %1241 = vmatpush1.msra.mxu0 0.0
      %1242 = vmatprep.subr.mxu0 0.0
      %1243 = vmatpush1.msra.mxu0 0.0
      %1244 = vmatprep.subr.mxu0 0.0
      %1245 = vmatpush1.msra.mxu0 0.0
      %1246 = vmatprep.subr.mxu0 0.0
      %1247 = vmatpush1.msra.mxu0 0.0
      %1248 = vmatprep.subr.mxu0 0.0
      %1249 = vmatpush1.msra.mxu0 0.0
      %1250 = vmatprep.subr.mxu0 0.0
      %1251 = vmatpush1.msra.mxu0 0.0
      %1252 = vmatprep.subr.mxu0 0.0
      %1253 = vmatpush1.msra.mxu0 0.0
      %1254 = vmatprep.subr.mxu0 0.0
      %1255 = vmatpush1.msra.mxu0 0.0
      %1256 = vmatprep.subr.mxu0 0.0
      %1257 = vmatpush1.msra.mxu0 0.0
      %1258 = vmatprep.subr.mxu0 0.0
      %1259 = vmatpush1.msra.mxu0 0.0
      %1260 = vmatprep.subr.mxu0 0.0
      %1261 = vmatpush1.msra.mxu0 0.0
      %1262 = vmatprep.subr.mxu0 0.0
      %1263 = vmatpush1.msra.mxu0 0.0
      %1264 = vmatprep.subr.mxu0 0.0
      %1265 = vmatpush1.msra.mxu0 %v1232
      %1266 = vmatprep.subr.mxu0 0.0
      %1267 = vmatpush2.msra.mxu0 0.0
      %1268 = vmatprep.subr.mxu0 0.0
      %1269 = vmatpush2.msra.mxu0 0.0
      %1270 = vmatprep.subr.mxu0 0.0
      %1271 = vmatpush2.msra.mxu0 0.0
      %1272 = vmatprep.subr.mxu0 0.0
      %1273 = vmatpush2.msra.mxu0 0.0
      %1274 = vmatprep.subr.mxu0 0.0
      %1275 = vmatpush2.msra.mxu0 0.0
      %1276 = vmatprep.subr.mxu0 0.0
      %1277 = vmatpush2.msra.mxu0 0.0
      %1278 = vmatprep.subr.mxu0 0.0
      %1279 = vmatpush2.msra.mxu0 0.0
      %1280 = vmatprep.subr.mxu0 0.0
      %1281 = vmatpush2.msra.mxu0 0.0
      %1282 = vmatprep.subr.mxu0 0.0
      %1283 = vmatpush2.msra.mxu0 0.0
      %1284 = vmatprep.subr.mxu0 0.0
      %1285 = vmatpush2.msra.mxu0 0.0
      %1286 = vmatprep.subr.mxu0 0.0
      %1287 = vmatpush2.msra.mxu0 0.0
      %1288 = vmatprep.subr.mxu0 0.0
      %1289 = vmatpush2.msra.mxu0 0.0
      %1290 = vmatprep.subr.mxu0 0.0
      %1291 = vmatpush2.msra.mxu0 0.0
      %1292 = vmatprep.subr.mxu0 0.0
      %1293 = vmatpush2.msra.mxu0 0.0
      %1294 = vmatprep.subr.mxu0 0.0
      %1295 = vmatpush2.msra.mxu0 0.0
      %1296 = vmatprep.subr.mxu0 0.0
      %1297 = vmatpush2.msra.mxu0 0.0
      %1298 = vmatprep.mubr.f32.mxu0 0.0
      %1299 = vmatmul.mubr.f32.gmra.mxu0 %v1208
      %v1300 = vpop.f32.mrf.mxu0
      %v1301 = vadd.f32 0.0, %v1300
      %v1302 = vpop.f32.mrf.mxu0
      %1303 = vmatprep.mubr.f32.mxu0 0.0
      %1304 = vmatmul.mubr.f32.gmra.mxu0 %v1211
      %v1305 = vpop.f32.mrf.mxu0
      %v1306 = vadd.f32 0.0, %v1305
      %v1307 = vpop.f32.mrf.mxu0
      %1308 = vmatprep.mubr.f32.mxu0 0.0
      %1309 = vmatmul.mubr.f32.gmra.mxu0 %v1214
      %v1310 = vpop.f32.mrf.mxu0
      %v1311 = vadd.f32 0.0, %v1310
      %v1312 = vpop.f32.mrf.mxu0
      %1313 = vmatprep.mubr.f32.mxu0 0.0
      %1314 = vmatmul.mubr.f32.gmra.mxu0 %v1217
      %v1315 = vpop.f32.mrf.mxu0
      %v1316 = vadd.f32 0.0, %v1315
      %v1317 = vpop.f32.mrf.mxu0
      %1318 = vmatprep.mubr.f32.mxu0 0.0
      %1319 = vmatmul.mubr.f32.gmra.mxu0 %v1220
      %v1320 = vpop.f32.mrf.mxu0
      %v1321 = vadd.f32 0.0, %v1320
      %v1322 = vpop.f32.mrf.mxu0
      %1323 = vmatprep.mubr.f32.mxu0 0.0
      %1324 = vmatmul.mubr.f32.gmra.mxu0 %v1223
      %v1325 = vpop.f32.mrf.mxu0
      %v1326 = vadd.f32 0.0, %v1325
      %v1327 = vpop.f32.mrf.mxu0
      %1328 = vmatprep.mubr.f32.mxu0 0.0
      %1329 = vmatmul.mubr.f32.gmra.mxu0 %v1226
      %v1330 = vpop.f32.mrf.mxu0
      %v1331 = vadd.f32 0.0, %v1330
      %v1332 = vpop.f32.mrf.mxu0
      %1333 = vmatprep.mubr.f32.mxu0 0.0
      %1334 = vmatmul.mubr.f32.gmra.mxu0 %v1229
      %v1335 = vpop.f32.mrf.mxu0
      %v1336 = vadd.f32 0.0, %v1335
      %v1337 = vpop.f32.mrf.mxu0
      %1338 = vdwg.mxu0
      %v1339 = vld [vmem:[#allocation4] sm:$0xff]
      %v1340 = vld [vmem:[#allocation4 + $0x8] sm:$0xff]
      %v1341 = vld [vmem:[#allocation4 + $0x10] sm:$0xff]
      %v1342 = vld [vmem:[#allocation4 + $0x18] sm:$0xff]
      %v1343 = vld [vmem:[#allocation4 + $0x20] sm:$0xff]
      %v1344 = vld [vmem:[#allocation4 + $0x28] sm:$0xff]
      %v1345 = vld [vmem:[#allocation4 + $0x30] sm:$0xff]
      %v1346 = vld [vmem:[#allocation4 + $0x38] sm:$0xff]
      %v1347 = vadd.f32 %v1339, %v1301
      %v1348 = vadd.f32 %v1340, %v1306
      %v1349 = vadd.f32 %v1341, %v1311
      %v1350 = vadd.f32 %v1342, %v1316
      %v1351 = vadd.f32 %v1343, %v1321
      %v1352 = vadd.f32 %v1344, %v1326
      %v1353 = vadd.f32 %v1345, %v1331
      %v1354 = vadd.f32 %v1346, %v1336
      %1355 = vst.msk [vmem:[#allocation4] sm:$0xff] %vm406, %v1347
      %1356 = vst.msk [vmem:[#allocation4 + $0x8] sm:$0xff] %vm406, %v1348
      %1357 = vst.msk [vmem:[#allocation4 + $0x10] sm:$0xff] %vm406, %v1349
      %1358 = vst.msk [vmem:[#allocation4 + $0x18] sm:$0xff] %vm406, %v1350
      %1359 = vst.msk [vmem:[#allocation4 + $0x20] sm:$0xff] %vm406, %v1351
      %1360 = vst.msk [vmem:[#allocation4 + $0x28] sm:$0xff] %vm406, %v1352
      %1361 = vst.msk [vmem:[#allocation4 + $0x30] sm:$0xff] %vm406, %v1353
      %1362 = vst.msk [vmem:[#allocation4 + $0x38] sm:$0xff] %vm406, %v1354
      %s1363 = scalar_lea.vmem [#allocation6], 16
      %v1364 = vld [vmem:[%s1363] sm:$0xff]
      %v1365 = vld [vmem:[%s1363 + $0x20] sm:$0xff]
      %v1366 = vld [vmem:[%s1363 + $0x40] sm:$0xff]
      %v1367 = vld [vmem:[%s1363 + $0x60] sm:$0xff]
      %v1368 = vld [vmem:[%s1363 + $0x80] sm:$0xff]
      %v1369 = vld [vmem:[%s1363 + $0xa0] sm:$0xff]
      %v1370 = vld [vmem:[%s1363 + $0xc0] sm:$0xff]
      %v1371 = vld [vmem:[%s1363 + $0xe0] sm:$0xff]
      %s1372 = scalar_lea.vmem %s1, 16
      %v1373 = vld [vmem:[%s1372] sm:$0xf]
      %v1375 = vsel %vm360, %v1364, 0
      %v1378 = vsel %vm360, %v1365, 0
      %v1381 = vsel %vm360, %v1366, 0
      %v1384 = vsel %vm360, %v1367, 0
      %v1387 = vsel %vm360, %v1368, 0
      %v1390 = vsel %vm360, %v1369, 0
      %v1393 = vsel %vm360, %v1370, 0
      %v1396 = vsel %vm360, %v1371, 0
      %v1399 = vsel %vm747, %v1373, 0
      %1401 = vmatprep.subr.mxu0 0.0
      %1402 = vmatpush1.msra.mxu0 0.0
      %1403 = vmatprep.subr.mxu0 0.0
      %1404 = vmatpush1.msra.mxu0 0.0
      %1405 = vmatprep.subr.mxu0 0.0
      %1406 = vmatpush1.msra.mxu0 0.0
      %1407 = vmatprep.subr.mxu0 0.0
      %1408 = vmatpush1.msra.mxu0 0.0
      %1409 = vmatprep.subr.mxu0 0.0
      %1410 = vmatpush1.msra.mxu0 0.0
      %1411 = vmatprep.subr.mxu0 0.0
      %1412 = vmatpush1.msra.mxu0 0.0
      %1413 = vmatprep.subr.mxu0 0.0
      %1414 = vmatpush1.msra.mxu0 0.0
      %1415 = vmatprep.subr.mxu0 0.0
      %1416 = vmatpush1.msra.mxu0 0.0
      %1417 = vmatprep.subr.mxu0 0.0
      %1418 = vmatpush1.msra.mxu0 0.0
      %1419 = vmatprep.subr.mxu0 0.0
      %1420 = vmatpush1.msra.mxu0 0.0
      %1421 = vmatprep.subr.mxu0 0.0
      %1422 = vmatpush1.msra.mxu0 0.0
      %1423 = vmatprep.subr.mxu0 0.0
      %1424 = vmatpush1.msra.mxu0 0.0
      %1425 = vmatprep.subr.mxu0 0.0
      %1426 = vmatpush1.msra.mxu0 0.0
      %1427 = vmatprep.subr.mxu0 0.0
      %1428 = vmatpush1.msra.mxu0 0.0
      %1429 = vmatprep.subr.mxu0 0.0
      %1430 = vmatpush1.msra.mxu0 0.0
      %1431 = vmatprep.subr.mxu0 0.0
      %1432 = vmatpush1.msra.mxu0 %v1399
      %1433 = vmatprep.subr.mxu0 0.0
      %1434 = vmatpush2.msra.mxu0 0.0
      %1435 = vmatprep.subr.mxu0 0.0
      %1436 = vmatpush2.msra.mxu0 0.0
      %1437 = vmatprep.subr.mxu0 0.0
      %1438 = vmatpush2.msra.mxu0 0.0
      %1439 = vmatprep.subr.mxu0 0.0
      %1440 = vmatpush2.msra.mxu0 0.0
      %1441 = vmatprep.subr.mxu0 0.0
      %1442 = vmatpush2.msra.mxu0 0.0
      %1443 = vmatprep.subr.mxu0 0.0
      %1444 = vmatpush2.msra.mxu0 0.0
      %1445 = vmatprep.subr.mxu0 0.0
      %1446 = vmatpush2.msra.mxu0 0.0
      %1447 = vmatprep.subr.mxu0 0.0
      %1448 = vmatpush2.msra.mxu0 0.0
      %1449 = vmatprep.subr.mxu0 0.0
      %1450 = vmatpush2.msra.mxu0 0.0
      %1451 = vmatprep.subr.mxu0 0.0
      %1452 = vmatpush2.msra.mxu0 0.0
      %1453 = vmatprep.subr.mxu0 0.0
      %1454 = vmatpush2.msra.mxu0 0.0
      %1455 = vmatprep.subr.mxu0 0.0
      %1456 = vmatpush2.msra.mxu0 0.0
      %1457 = vmatprep.subr.mxu0 0.0
      %1458 = vmatpush2.msra.mxu0 0.0
      %1459 = vmatprep.subr.mxu0 0.0
      %1460 = vmatpush2.msra.mxu0 0.0
      %1461 = vmatprep.subr.mxu0 0.0
      %1462 = vmatpush2.msra.mxu0 0.0
      %1463 = vmatprep.subr.mxu0 0.0
      %1464 = vmatpush2.msra.mxu0 0.0
      %1465 = vmatprep.mubr.f32.mxu0 0.0
      %1466 = vmatmul.mubr.f32.gmra.mxu0 %v1375
      %v1467 = vpop.f32.mrf.mxu0
      %v1468 = vadd.f32 0.0, %v1467
      %v1469 = vpop.f32.mrf.mxu0
      %1470 = vmatprep.mubr.f32.mxu0 0.0
      %1471 = vmatmul.mubr.f32.gmra.mxu0 %v1378
      %v1472 = vpop.f32.mrf.mxu0
      %v1473 = vadd.f32 0.0, %v1472
      %v1474 = vpop.f32.mrf.mxu0
      %1475 = vmatprep.mubr.f32.mxu0 0.0
      %1476 = vmatmul.mubr.f32.gmra.mxu0 %v1381
      %v1477 = vpop.f32.mrf.mxu0
      %v1478 = vadd.f32 0.0, %v1477
      %v1479 = vpop.f32.mrf.mxu0
      %1480 = vmatprep.mubr.f32.mxu0 0.0
      %1481 = vmatmul.mubr.f32.gmra.mxu0 %v1384
      %v1482 = vpop.f32.mrf.mxu0
      %v1483 = vadd.f32 0.0, %v1482
      %v1484 = vpop.f32.mrf.mxu0
      %1485 = vmatprep.mubr.f32.mxu0 0.0
      %1486 = vmatmul.mubr.f32.gmra.mxu0 %v1387
      %v1487 = vpop.f32.mrf.mxu0
      %v1488 = vadd.f32 0.0, %v1487
      %v1489 = vpop.f32.mrf.mxu0
      %1490 = vmatprep.mubr.f32.mxu0 0.0
      %1491 = vmatmul.mubr.f32.gmra.mxu0 %v1390
      %v1492 = vpop.f32.mrf.mxu0
      %v1493 = vadd.f32 0.0, %v1492
      %v1494 = vpop.f32.mrf.mxu0
      %1495 = vmatprep.mubr.f32.mxu0 0.0
      %1496 = vmatmul.mubr.f32.gmra.mxu0 %v1393
      %v1497 = vpop.f32.mrf.mxu0
      %v1498 = vadd.f32 0.0, %v1497
      %v1499 = vpop.f32.mrf.mxu0
      %1500 = vmatprep.mubr.f32.mxu0 0.0
      %1501 = vmatmul.mubr.f32.gmra.mxu0 %v1396
      %v1502 = vpop.f32.mrf.mxu0
      %v1503 = vadd.f32 0.0, %v1502
      %v1504 = vpop.f32.mrf.mxu0
      %1505 = vdwg.mxu0
      %v1506 = vld [vmem:[#allocation4] sm:$0xff]
      %v1507 = vld [vmem:[#allocation4 + $0x8] sm:$0xff]
      %v1508 = vld [vmem:[#allocation4 + $0x10] sm:$0xff]
      %v1509 = vld [vmem:[#allocation4 + $0x18] sm:$0xff]
      %v1510 = vld [vmem:[#allocation4 + $0x20] sm:$0xff]
      %v1511 = vld [vmem:[#allocation4 + $0x28] sm:$0xff]
      %v1512 = vld [vmem:[#allocation4 + $0x30] sm:$0xff]
      %v1513 = vld [vmem:[#allocation4 + $0x38] sm:$0xff]
      %v1514 = vadd.f32 %v1506, %v1468
      %v1515 = vadd.f32 %v1507, %v1473
      %v1516 = vadd.f32 %v1508, %v1478
      %v1517 = vadd.f32 %v1509, %v1483
      %v1518 = vadd.f32 %v1510, %v1488
      %v1519 = vadd.f32 %v1511, %v1493
      %v1520 = vadd.f32 %v1512, %v1498
      %v1521 = vadd.f32 %v1513, %v1503
      %1522 = vst.msk [vmem:[#allocation4] sm:$0xff] %vm406, %v1514
      %1523 = vst.msk [vmem:[#allocation4 + $0x8] sm:$0xff] %vm406, %v1515
      %1524 = vst.msk [vmem:[#allocation4 + $0x10] sm:$0xff] %vm406, %v1516
      %1525 = vst.msk [vmem:[#allocation4 + $0x18] sm:$0xff] %vm406, %v1517
      %1526 = vst.msk [vmem:[#allocation4 + $0x20] sm:$0xff] %vm406, %v1518
      %1527 = vst.msk [vmem:[#allocation4 + $0x28] sm:$0xff] %vm406, %v1519
      %1528 = vst.msk [vmem:[#allocation4 + $0x30] sm:$0xff] %vm406, %v1520
      %1529 = vst.msk [vmem:[#allocation4 + $0x38] sm:$0xff] %vm406, %v1521
      %v1530 = vld [vmem:[%s1196 + $0x1] sm:$0xff]
      %v1531 = vld [vmem:[%s1196 + $0x21] sm:$0xff]
      %v1532 = vld [vmem:[%s1196 + $0x41] sm:$0xff]
      %v1533 = vld [vmem:[%s1196 + $0x61] sm:$0xff]
      %v1534 = vld [vmem:[%s1196 + $0x81] sm:$0xff]
      %v1535 = vld [vmem:[%s1196 + $0xa1] sm:$0xff]
      %v1536 = vld [vmem:[%s1196 + $0xc1] sm:$0xff]
      %v1537 = vld [vmem:[%s1196 + $0xe1] sm:$0xff]
      %s1538 = scalar_lea.vmem %s1, 20
      %v1539 = vld [vmem:[%s1538] sm:$0xf]
      %v1541 = vsel %vm360, %v1530, 0
      %v1544 = vsel %vm360, %v1531, 0
      %v1547 = vsel %vm360, %v1532, 0
      %v1550 = vsel %vm360, %v1533, 0
      %v1553 = vsel %vm360, %v1534, 0
      %v1556 = vsel %vm360, %v1535, 0
      %v1559 = vsel %vm360, %v1536, 0
      %v1562 = vsel %vm360, %v1537, 0
      %v1565 = vsel %vm747, %v1539, 0
      %1567 = vmatprep.subr.mxu0 0.0
      %1568 = vmatpush1.msra.mxu0 0.0
      %1569 = vmatprep.subr.mxu0 0.0
      %1570 = vmatpush1.msra.mxu0 0.0
      %1571 = vmatprep.subr.mxu0 0.0
      %1572 = vmatpush1.msra.mxu0 0.0
      %1573 = vmatprep.subr.mxu0 0.0
      %1574 = vmatpush1.msra.mxu0 0.0
      %1575 = vmatprep.subr.mxu0 0.0
      %1576 = vmatpush1.msra.mxu0 0.0
      %1577 = vmatprep.subr.mxu0 0.0
      %1578 = vmatpush1.msra.mxu0 0.0
      %1579 = vmatprep.subr.mxu0 0.0
      %1580 = vmatpush1.msra.mxu0 0.0
      %1581 = vmatprep.subr.mxu0 0.0
      %1582 = vmatpush1.msra.mxu0 0.0
      %1583 = vmatprep.subr.mxu0 0.0
      %1584 = vmatpush1.msra.mxu0 0.0
      %1585 = vmatprep.subr.mxu0 0.0
      %1586 = vmatpush1.msra.mxu0 0.0
      %1587 = vmatprep.subr.mxu0 0.0
      %1588 = vmatpush1.msra.mxu0 0.0
      %1589 = vmatprep.subr.mxu0 0.0
      %1590 = vmatpush1.msra.mxu0 0.0
      %1591 = vmatprep.subr.mxu0 0.0
      %1592 = vmatpush1.msra.mxu0 0.0
      %1593 = vmatprep.subr.mxu0 0.0
      %1594 = vmatpush1.msra.mxu0 0.0
      %1595 = vmatprep.subr.mxu0 0.0
      %1596 = vmatpush1.msra.mxu0 0.0
      %1597 = vmatprep.subr.mxu0 0.0
      %1598 = vmatpush1.msra.mxu0 %v1565
      %1599 = vmatprep.subr.mxu0 0.0
      %1600 = vmatpush2.msra.mxu0 0.0
      %1601 = vmatprep.subr.mxu0 0.0
      %1602 = vmatpush2.msra.mxu0 0.0
      %1603 = vmatprep.subr.mxu0 0.0
      %1604 = vmatpush2.msra.mxu0 0.0
      %1605 = vmatprep.subr.mxu0 0.0
      %1606 = vmatpush2.msra.mxu0 0.0
      %1607 = vmatprep.subr.mxu0 0.0
      %1608 = vmatpush2.msra.mxu0 0.0
      %1609 = vmatprep.subr.mxu0 0.0
      %1610 = vmatpush2.msra.mxu0 0.0
      %1611 = vmatprep.subr.mxu0 0.0
      %1612 = vmatpush2.msra.mxu0 0.0
      %1613 = vmatprep.subr.mxu0 0.0
      %1614 = vmatpush2.msra.mxu0 0.0
      %1615 = vmatprep.subr.mxu0 0.0
      %1616 = vmatpush2.msra.mxu0 0.0
      %1617 = vmatprep.subr.mxu0 0.0
      %1618 = vmatpush2.msra.mxu0 0.0
      %1619 = vmatprep.subr.mxu0 0.0
      %1620 = vmatpush2.msra.mxu0 0.0
      %1621 = vmatprep.subr.mxu0 0.0
      %1622 = vmatpush2.msra.mxu0 0.0
      %1623 = vmatprep.subr.mxu0 0.0
      %1624 = vmatpush2.msra.mxu0 0.0
      %1625 = vmatprep.subr.mxu0 0.0
      %1626 = vmatpush2.msra.mxu0 0.0
      %1627 = vmatprep.subr.mxu0 0.0
      %1628 = vmatpush2.msra.mxu0 0.0
      %1629 = vmatprep.subr.mxu0 0.0
      %1630 = vmatpush2.msra.mxu0 0.0
      %1631 = vmatprep.mubr.f32.mxu0 0.0
      %1632 = vmatmul.mubr.f32.gmra.mxu0 %v1541
      %v1633 = vpop.f32.mrf.mxu0
      %v1634 = vadd.f32 0.0, %v1633
      %v1635 = vpop.f32.mrf.mxu0
      %1636 = vmatprep.mubr.f32.mxu0 0.0
      %1637 = vmatmul.mubr.f32.gmra.mxu0 %v1544
      %v1638 = vpop.f32.mrf.mxu0
      %v1639 = vadd.f32 0.0, %v1638
      %v1640 = vpop.f32.mrf.mxu0
      %1641 = vmatprep.mubr.f32.mxu0 0.0
      %1642 = vmatmul.mubr.f32.gmra.mxu0 %v1547
      %v1643 = vpop.f32.mrf.mxu0
      %v1644 = vadd.f32 0.0, %v1643
      %v1645 = vpop.f32.mrf.mxu0
      %1646 = vmatprep.mubr.f32.mxu0 0.0
      %1647 = vmatmul.mubr.f32.gmra.mxu0 %v1550
      %v1648 = vpop.f32.mrf.mxu0
      %v1649 = vadd.f32 0.0, %v1648
      %v1650 = vpop.f32.mrf.mxu0
      %1651 = vmatprep.mubr.f32.mxu0 0.0
      %1652 = vmatmul.mubr.f32.gmra.mxu0 %v1553
      %v1653 = vpop.f32.mrf.mxu0
      %v1654 = vadd.f32 0.0, %v1653
      %v1655 = vpop.f32.mrf.mxu0
      %1656 = vmatprep.mubr.f32.mxu0 0.0
      %1657 = vmatmul.mubr.f32.gmra.mxu0 %v1556
      %v1658 = vpop.f32.mrf.mxu0
      %v1659 = vadd.f32 0.0, %v1658
      %v1660 = vpop.f32.mrf.mxu0
      %1661 = vmatprep.mubr.f32.mxu0 0.0
      %1662 = vmatmul.mubr.f32.gmra.mxu0 %v1559
      %v1663 = vpop.f32.mrf.mxu0
      %v1664 = vadd.f32 0.0, %v1663
      %v1665 = vpop.f32.mrf.mxu0
      %1666 = vmatprep.mubr.f32.mxu0 0.0
      %1667 = vmatmul.mubr.f32.gmra.mxu0 %v1562
      %v1668 = vpop.f32.mrf.mxu0
      %v1669 = vadd.f32 0.0, %v1668
      %v1670 = vpop.f32.mrf.mxu0
      %1671 = vdwg.mxu0
      %v1672 = vld [vmem:[#allocation4] sm:$0xff]
      %v1673 = vld [vmem:[#allocation4 + $0x8] sm:$0xff]
      %v1674 = vld [vmem:[#allocation4 + $0x10] sm:$0xff]
      %v1675 = vld [vmem:[#allocation4 + $0x18] sm:$0xff]
      %v1676 = vld [vmem:[#allocation4 + $0x20] sm:$0xff]
      %v1677 = vld [vmem:[#allocation4 + $0x28] sm:$0xff]
      %v1678 = vld [vmem:[#allocation4 + $0x30] sm:$0xff]
      %v1679 = vld [vmem:[#allocation4 + $0x38] sm:$0xff]
      %v1680 = vadd.f32 %v1672, %v1634
      %v1681 = vadd.f32 %v1673, %v1639
      %v1682 = vadd.f32 %v1674, %v1644
      %v1683 = vadd.f32 %v1675, %v1649
      %v1684 = vadd.f32 %v1676, %v1654
      %v1685 = vadd.f32 %v1677, %v1659
      %v1686 = vadd.f32 %v1678, %v1664
      %v1687 = vadd.f32 %v1679, %v1669
      %1688 = vst.msk [vmem:[#allocation4] sm:$0xff] %vm406, %v1680
      %1689 = vst.msk [vmem:[#allocation4 + $0x8] sm:$0xff] %vm406, %v1681
      %1690 = vst.msk [vmem:[#allocation4 + $0x10] sm:$0xff] %vm406, %v1682
      %1691 = vst.msk [vmem:[#allocation4 + $0x18] sm:$0xff] %vm406, %v1683
      %1692 = vst.msk [vmem:[#allocation4 + $0x20] sm:$0xff] %vm406, %v1684
      %1693 = vst.msk [vmem:[#allocation4 + $0x28] sm:$0xff] %vm406, %v1685
      %1694 = vst.msk [vmem:[#allocation4 + $0x30] sm:$0xff] %vm406, %v1686
      %1695 = vst.msk [vmem:[#allocation4 + $0x38] sm:$0xff] %vm406, %v1687
      %s1696 = scalar_lea.vmem [#allocation5], 32
      %v1697 = vld [vmem:[%s1696] sm:$0xff]
      %v1698 = vld [vmem:[%s1696 + $0x20] sm:$0xff]
      %v1699 = vld [vmem:[%s1696 + $0x40] sm:$0xff]
      %v1700 = vld [vmem:[%s1696 + $0x60] sm:$0xff]
      %v1701 = vld [vmem:[%s1696 + $0x80] sm:$0xff]
      %v1702 = vld [vmem:[%s1696 + $0xa0] sm:$0xff]
      %v1703 = vld [vmem:[%s1696 + $0xc0] sm:$0xff]
      %v1704 = vld [vmem:[%s1696 + $0xe0] sm:$0xff]
      %s1705 = scalar_lea.vmem %s1, 24
      %v1706 = vld [vmem:[%s1705] sm:$0xf]
      %v1708 = vsel %vm360, %v1697, 0
      %v1711 = vsel %vm360, %v1698, 0
      %v1714 = vsel %vm360, %v1699, 0
      %v1717 = vsel %vm360, %v1700, 0
      %v1720 = vsel %vm360, %v1701, 0
      %v1723 = vsel %vm360, %v1702, 0
      %v1726 = vsel %vm360, %v1703, 0
      %v1729 = vsel %vm360, %v1704, 0
      %v1732 = vsel %vm747, %v1706, 0
      %1734 = vmatprep.subr.mxu0 0.0
      %1735 = vmatpush1.msra.mxu0 0.0
      %1736 = vmatprep.subr.mxu0 0.0
      %1737 = vmatpush1.msra.mxu0 0.0
      %1738 = vmatprep.subr.mxu0 0.0
      %1739 = vmatpush1.msra.mxu0 0.0
      %1740 = vmatprep.subr.mxu0 0.0
      %1741 = vmatpush1.msra.mxu0 0.0
      %1742 = vmatprep.subr.mxu0 0.0
      %1743 = vmatpush1.msra.mxu0 0.0
      %1744 = vmatprep.subr.mxu0 0.0
      %1745 = vmatpush1.msra.mxu0 0.0
      %1746 = vmatprep.subr.mxu0 0.0
      %1747 = vmatpush1.msra.mxu0 0.0
      %1748 = vmatprep.subr.mxu0 0.0
      %1749 = vmatpush1.msra.mxu0 0.0
      %1750 = vmatprep.subr.mxu0 0.0
      %1751 = vmatpush1.msra.mxu0 0.0
      %1752 = vmatprep.subr.mxu0 0.0
      %1753 = vmatpush1.msra.mxu0 0.0
      %1754 = vmatprep.subr.mxu0 0.0
      %1755 = vmatpush1.msra.mxu0 0.0
      %1756 = vmatprep.subr.mxu0 0.0
      %1757 = vmatpush1.msra.mxu0 0.0
      %1758 = vmatprep.subr.mxu0 0.0
      %1759 = vmatpush1.msra.mxu0 0.0
      %1760 = vmatprep.subr.mxu0 0.0
      %1761 = vmatpush1.msra.mxu0 0.0
      %1762 = vmatprep.subr.mxu0 0.0
      %1763 = vmatpush1.msra.mxu0 0.0
      %1764 = vmatprep.subr.mxu0 0.0
      %1765 = vmatpush1.msra.mxu0 %v1732
      %1766 = vmatprep.subr.mxu0 0.0
      %1767 = vmatpush2.msra.mxu0 0.0
      %1768 = vmatprep.subr.mxu0 0.0
      %1769 = vmatpush2.msra.mxu0 0.0
      %1770 = vmatprep.subr.mxu0 0.0
      %1771 = vmatpush2.msra.mxu0 0.0
      %1772 = vmatprep.subr.mxu0 0.0
      %1773 = vmatpush2.msra.mxu0 0.0
      %1774 = vmatprep.subr.mxu0 0.0
      %1775 = vmatpush2.msra.mxu0 0.0
      %1776 = vmatprep.subr.mxu0 0.0
      %1777 = vmatpush2.msra.mxu0 0.0
      %1778 = vmatprep.subr.mxu0 0.0
      %1779 = vmatpush2.msra.mxu0 0.0
      %1780 = vmatprep.subr.mxu0 0.0
      %1781 = vmatpush2.msra.mxu0 0.0
      %1782 = vmatprep.subr.mxu0 0.0
      %1783 = vmatpush2.msra.mxu0 0.0
      %1784 = vmatprep.subr.mxu0 0.0
      %1785 = vmatpush2.msra.mxu0 0.0
      %1786 = vmatprep.subr.mxu0 0.0
      %1787 = vmatpush2.msra.mxu0 0.0
      %1788 = vmatprep.subr.mxu0 0.0
      %1789 = vmatpush2.msra.mxu0 0.0
      %1790 = vmatprep.subr.mxu0 0.0
      %1791 = vmatpush2.msra.mxu0 0.0
      %1792 = vmatprep.subr.mxu0 0.0
      %1793 = vmatpush2.msra.mxu0 0.0
      %1794 = vmatprep.subr.mxu0 0.0
      %1795 = vmatpush2.msra.mxu0 0.0
      %1796 = vmatprep.subr.mxu0 0.0
      %1797 = vmatpush2.msra.mxu0 0.0
      %1798 = vmatprep.mubr.f32.mxu0 0.0
      %1799 = vmatmul.mubr.f32.gmra.mxu0 %v1708
      %v1800 = vpop.f32.mrf.mxu0
      %v1801 = vadd.f32 0.0, %v1800
      %v1802 = vpop.f32.mrf.mxu0
      %1803 = vmatprep.mubr.f32.mxu0 0.0
      %1804 = vmatmul.mubr.f32.gmra.mxu0 %v1711
      %v1805 = vpop.f32.mrf.mxu0
      %v1806 = vadd.f32 0.0, %v1805
      %v1807 = vpop.f32.mrf.mxu0
      %1808 = vmatprep.mubr.f32.mxu0 0.0
      %1809 = vmatmul.mubr.f32.gmra.mxu0 %v1714
      %v1810 = vpop.f32.mrf.mxu0
      %v1811 = vadd.f32 0.0, %v1810
      %v1812 = vpop.f32.mrf.mxu0
      %1813 = vmatprep.mubr.f32.mxu0 0.0
      %1814 = vmatmul.mubr.f32.gmra.mxu0 %v1717
      %v1815 = vpop.f32.mrf.mxu0
      %v1816 = vadd.f32 0.0, %v1815
      %v1817 = vpop.f32.mrf.mxu0
      %1818 = vmatprep.mubr.f32.mxu0 0.0
      %1819 = vmatmul.mubr.f32.gmra.mxu0 %v1720
      %v1820 = vpop.f32.mrf.mxu0
      %v1821 = vadd.f32 0.0, %v1820
      %v1822 = vpop.f32.mrf.mxu0
      %1823 = vmatprep.mubr.f32.mxu0 0.0
      %1824 = vmatmul.mubr.f32.gmra.mxu0 %v1723
      %v1825 = vpop.f32.mrf.mxu0
      %v1826 = vadd.f32 0.0, %v1825
      %v1827 = vpop.f32.mrf.mxu0
      %1828 = vmatprep.mubr.f32.mxu0 0.0
      %1829 = vmatmul.mubr.f32.gmra.mxu0 %v1726
      %v1830 = vpop.f32.mrf.mxu0
      %v1831 = vadd.f32 0.0, %v1830
      %v1832 = vpop.f32.mrf.mxu0
      %1833 = vmatprep.mubr.f32.mxu0 0.0
      %1834 = vmatmul.mubr.f32.gmra.mxu0 %v1729
      %v1835 = vpop.f32.mrf.mxu0
      %v1836 = vadd.f32 0.0, %v1835
      %v1837 = vpop.f32.mrf.mxu0
      %1838 = vdwg.mxu0
      %v1839 = vld [vmem:[#allocation4] sm:$0xff]
      %v1840 = vld [vmem:[#allocation4 + $0x8] sm:$0xff]
      %v1841 = vld [vmem:[#allocation4 + $0x10] sm:$0xff]
      %v1842 = vld [vmem:[#allocation4 + $0x18] sm:$0xff]
      %v1843 = vld [vmem:[#allocation4 + $0x20] sm:$0xff]
      %v1844 = vld [vmem:[#allocation4 + $0x28] sm:$0xff]
      %v1845 = vld [vmem:[#allocation4 + $0x30] sm:$0xff]
      %v1846 = vld [vmem:[#allocation4 + $0x38] sm:$0xff]
      %v1847 = vadd.f32 %v1839, %v1801
      %v1848 = vadd.f32 %v1840, %v1806
      %v1849 = vadd.f32 %v1841, %v1811
      %v1850 = vadd.f32 %v1842, %v1816
      %v1851 = vadd.f32 %v1843, %v1821
      %v1852 = vadd.f32 %v1844, %v1826
      %v1853 = vadd.f32 %v1845, %v1831
      %v1854 = vadd.f32 %v1846, %v1836
      %1855 = vst.msk [vmem:[#allocation4] sm:$0xff] %vm406, %v1847
      %1856 = vst.msk [vmem:[#allocation4 + $0x8] sm:$0xff] %vm406, %v1848
      %1857 = vst.msk [vmem:[#allocation4 + $0x10] sm:$0xff] %vm406, %v1849
      %1858 = vst.msk [vmem:[#allocation4 + $0x18] sm:$0xff] %vm406, %v1850
      %1859 = vst.msk [vmem:[#allocation4 + $0x20] sm:$0xff] %vm406, %v1851
      %1860 = vst.msk [vmem:[#allocation4 + $0x28] sm:$0xff] %vm406, %v1852
      %1861 = vst.msk [vmem:[#allocation4 + $0x30] sm:$0xff] %vm406, %v1853
      %1862 = vst.msk [vmem:[#allocation4 + $0x38] sm:$0xff] %vm406, %v1854
      %s1863 = scalar_lea.vmem [#allocation6], 32
      %v1864 = vld [vmem:[%s1863] sm:$0xff]
      %v1865 = vld [vmem:[%s1863 + $0x20] sm:$0xff]
      %v1866 = vld [vmem:[%s1863 + $0x40] sm:$0xff]
      %v1867 = vld [vmem:[%s1863 + $0x60] sm:$0xff]
      %v1868 = vld [vmem:[%s1863 + $0x80] sm:$0xff]
      %v1869 = vld [vmem:[%s1863 + $0xa0] sm:$0xff]
      %v1870 = vld [vmem:[%s1863 + $0xc0] sm:$0xff]
      %v1871 = vld [vmem:[%s1863 + $0xe0] sm:$0xff]
      %s1872 = scalar_lea.vmem %s1, 28
      %v1873 = vld [vmem:[%s1872] sm:$0xf]
      %v1875 = vsel %vm360, %v1864, 0
      %v1878 = vsel %vm360, %v1865, 0
      %v1881 = vsel %vm360, %v1866, 0
      %v1884 = vsel %vm360, %v1867, 0
      %v1887 = vsel %vm360, %v1868, 0
      %v1890 = vsel %vm360, %v1869, 0
      %v1893 = vsel %vm360, %v1870, 0
      %v1896 = vsel %vm360, %v1871, 0
      %v1899 = vsel %vm747, %v1873, 0
      %1901 = vmatprep.subr.mxu0 0.0
      %1902 = vmatpush1.msra.mxu0 0.0
      %1903 = vmatprep.subr.mxu0 0.0
      %1904 = vmatpush1.msra.mxu0 0.0
      %1905 = vmatprep.subr.mxu0 0.0
      %1906 = vmatpush1.msra.mxu0 0.0
      %1907 = vmatprep.subr.mxu0 0.0
      %1908 = vmatpush1.msra.mxu0 0.0
      %1909 = vmatprep.subr.mxu0 0.0
      %1910 = vmatpush1.msra.mxu0 0.0
      %1911 = vmatprep.subr.mxu0 0.0
      %1912 = vmatpush1.msra.mxu0 0.0
      %1913 = vmatprep.subr.mxu0 0.0
      %1914 = vmatpush1.msra.mxu0 0.0
      %1915 = vmatprep.subr.mxu0 0.0
      %1916 = vmatpush1.msra.mxu0 0.0
      %1917 = vmatprep.subr.mxu0 0.0
      %1918 = vmatpush1.msra.mxu0 0.0
      %1919 = vmatprep.subr.mxu0 0.0
      %1920 = vmatpush1.msra.mxu0 0.0
      %1921 = vmatprep.subr.mxu0 0.0
      %1922 = vmatpush1.msra.mxu0 0.0
      %1923 = vmatprep.subr.mxu0 0.0
      %1924 = vmatpush1.msra.mxu0 0.0
      %1925 = vmatprep.subr.mxu0 0.0
      %1926 = vmatpush1.msra.mxu0 0.0
      %1927 = vmatprep.subr.mxu0 0.0
      %1928 = vmatpush1.msra.mxu0 0.0
      %1929 = vmatprep.subr.mxu0 0.0
      %1930 = vmatpush1.msra.mxu0 0.0
      %1931 = vmatprep.subr.mxu0 0.0
      %1932 = vmatpush1.msra.mxu0 %v1899
      %1933 = vmatprep.subr.mxu0 0.0
      %1934 = vmatpush2.msra.mxu0 0.0
      %1935 = vmatprep.subr.mxu0 0.0
      %1936 = vmatpush2.msra.mxu0 0.0
      %1937 = vmatprep.subr.mxu0 0.0
      %1938 = vmatpush2.msra.mxu0 0.0
      %1939 = vmatprep.subr.mxu0 0.0
      %1940 = vmatpush2.msra.mxu0 0.0
      %1941 = vmatprep.subr.mxu0 0.0
      %1942 = vmatpush2.msra.mxu0 0.0
      %1943 = vmatprep.subr.mxu0 0.0
      %1944 = vmatpush2.msra.mxu0 0.0
      %1945 = vmatprep.subr.mxu0 0.0
      %1946 = vmatpush2.msra.mxu0 0.0
      %1947 = vmatprep.subr.mxu0 0.0
      %1948 = vmatpush2.msra.mxu0 0.0
      %1949 = vmatprep.subr.mxu0 0.0
      %1950 = vmatpush2.msra.mxu0 0.0
      %1951 = vmatprep.subr.mxu0 0.0
      %1952 = vmatpush2.msra.mxu0 0.0
      %1953 = vmatprep.subr.mxu0 0.0
      %1954 = vmatpush2.msra.mxu0 0.0
      %1955 = vmatprep.subr.mxu0 0.0
      %1956 = vmatpush2.msra.mxu0 0.0
      %1957 = vmatprep.subr.mxu0 0.0
      %1958 = vmatpush2.msra.mxu0 0.0
      %1959 = vmatprep.subr.mxu0 0.0
      %1960 = vmatpush2.msra.mxu0 0.0
      %1961 = vmatprep.subr.mxu0 0.0
      %1962 = vmatpush2.msra.mxu0 0.0
      %1963 = vmatprep.subr.mxu0 0.0
      %1964 = vmatpush2.msra.mxu0 0.0
      %1965 = vmatprep.mubr.f32.mxu0 0.0
      %1966 = vmatmul.mubr.f32.gmra.mxu0 %v1875
      %v1967 = vpop.f32.mrf.mxu0
      %v1968 = vadd.f32 0.0, %v1967
      %v1969 = vpop.f32.mrf.mxu0
      %1970 = vmatprep.mubr.f32.mxu0 0.0
      %1971 = vmatmul.mubr.f32.gmra.mxu0 %v1878
      %v1972 = vpop.f32.mrf.mxu0
      %v1973 = vadd.f32 0.0, %v1972
      %v1974 = vpop.f32.mrf.mxu0
      %1975 = vmatprep.mubr.f32.mxu0 0.0
      %1976 = vmatmul.mubr.f32.gmra.mxu0 %v1881
      %v1977 = vpop.f32.mrf.mxu0
      %v1978 = vadd.f32 0.0, %v1977
      %v1979 = vpop.f32.mrf.mxu0
      %1980 = vmatprep.mubr.f32.mxu0 0.0
      %1981 = vmatmul.mubr.f32.gmra.mxu0 %v1884
      %v1982 = vpop.f32.mrf.mxu0
      %v1983 = vadd.f32 0.0, %v1982
      %v1984 = vpop.f32.mrf.mxu0
      %1985 = vmatprep.mubr.f32.mxu0 0.0
      %1986 = vmatmul.mubr.f32.gmra.mxu0 %v1887
      %v1987 = vpop.f32.mrf.mxu0
      %v1988 = vadd.f32 0.0, %v1987
      %v1989 = vpop.f32.mrf.mxu0
      %1990 = vmatprep.mubr.f32.mxu0 0.0
      %1991 = vmatmul.mubr.f32.gmra.mxu0 %v1890
      %v1992 = vpop.f32.mrf.mxu0
      %v1993 = vadd.f32 0.0, %v1992
      %v1994 = vpop.f32.mrf.mxu0
      %1995 = vmatprep.mubr.f32.mxu0 0.0
      %1996 = vmatmul.mubr.f32.gmra.mxu0 %v1893
      %v1997 = vpop.f32.mrf.mxu0
      %v1998 = vadd.f32 0.0, %v1997
      %v1999 = vpop.f32.mrf.mxu0
      %2000 = vmatprep.mubr.f32.mxu0 0.0
      %2001 = vmatmul.mubr.f32.gmra.mxu0 %v1896
      %v2002 = vpop.f32.mrf.mxu0
      %v2003 = vadd.f32 0.0, %v2002
      %v2004 = vpop.f32.mrf.mxu0
      %2005 = vdwg.mxu0
      %v2006 = vld [vmem:[#allocation4] sm:$0xff]
      %v2007 = vld [vmem:[#allocation4 + $0x8] sm:$0xff]
      %v2008 = vld [vmem:[#allocation4 + $0x10] sm:$0xff]
      %v2009 = vld [vmem:[#allocation4 + $0x18] sm:$0xff]
      %v2010 = vld [vmem:[#allocation4 + $0x20] sm:$0xff]
      %v2011 = vld [vmem:[#allocation4 + $0x28] sm:$0xff]
      %v2012 = vld [vmem:[#allocation4 + $0x30] sm:$0xff]
      %v2013 = vld [vmem:[#allocation4 + $0x38] sm:$0xff]
      %v2014 = vadd.f32 %v2006, %v1968
      %v2015 = vadd.f32 %v2007, %v1973
      %v2016 = vadd.f32 %v2008, %v1978
      %v2017 = vadd.f32 %v2009, %v1983
      %v2018 = vadd.f32 %v2010, %v1988
      %v2019 = vadd.f32 %v2011, %v1993
      %v2020 = vadd.f32 %v2012, %v1998
      %v2021 = vadd.f32 %v2013, %v2003
      %2022 = vst.msk [vmem:[#allocation4] sm:$0xff] %vm406, %v2014
      %2023 = vst.msk [vmem:[#allocation4 + $0x8] sm:$0xff] %vm406, %v2015
      %2024 = vst.msk [vmem:[#allocation4 + $0x10] sm:$0xff] %vm406, %v2016
      %2025 = vst.msk [vmem:[#allocation4 + $0x18] sm:$0xff] %vm406, %v2017
      %2026 = vst.msk [vmem:[#allocation4 + $0x20] sm:$0xff] %vm406, %v2018
      %2027 = vst.msk [vmem:[#allocation4 + $0x28] sm:$0xff] %vm406, %v2019
      %2028 = vst.msk [vmem:[#allocation4 + $0x30] sm:$0xff] %vm406, %v2020
      %2029 = vst.msk [vmem:[#allocation4 + $0x38] sm:$0xff] %vm406, %v2021
      %v2030 = vld [vmem:[%s1696 + $0x1] sm:$0xff]
      %v2031 = vld [vmem:[%s1696 + $0x21] sm:$0xff]
      %v2032 = vld [vmem:[%s1696 + $0x41] sm:$0xff]
      %v2033 = vld [vmem:[%s1696 + $0x61] sm:$0xff]
      %v2034 = vld [vmem:[%s1696 + $0x81] sm:$0xff]
      %v2035 = vld [vmem:[%s1696 + $0xa1] sm:$0xff]
      %v2036 = vld [vmem:[%s1696 + $0xc1] sm:$0xff]
      %v2037 = vld [vmem:[%s1696 + $0xe1] sm:$0xff]
      %s2038 = scalar_lea.vmem %s1, 32
      %v2039 = vld [vmem:[%s2038] sm:$0xf]
      %v2041 = vsel %vm360, %v2030, 0
      %v2044 = vsel %vm360, %v2031, 0
      %v2047 = vsel %vm360, %v2032, 0
      %v2050 = vsel %vm360, %v2033, 0
      %v2053 = vsel %vm360, %v2034, 0
      %v2056 = vsel %vm360, %v2035, 0
      %v2059 = vsel %vm360, %v2036, 0
      %v2062 = vsel %vm360, %v2037, 0
      %v2065 = vsel %vm747, %v2039, 0
      %2067 = vmatprep.subr.mxu0 0.0
      %2068 = vmatpush1.msra.mxu0 0.0
      %2069 = vmatprep.subr.mxu0 0.0
      %2070 = vmatpush1.msra.mxu0 0.0
      %2071 = vmatprep.subr.mxu0 0.0
      %2072 = vmatpush1.msra.mxu0 0.0
      %2073 = vmatprep.subr.mxu0 0.0
      %2074 = vmatpush1.msra.mxu0 0.0
      %2075 = vmatprep.subr.mxu0 0.0
      %2076 = vmatpush1.msra.mxu0 0.0
      %2077 = vmatprep.subr.mxu0 0.0
      %2078 = vmatpush1.msra.mxu0 0.0
      %2079 = vmatprep.subr.mxu0 0.0
      %2080 = vmatpush1.msra.mxu0 0.0
      %2081 = vmatprep.subr.mxu0 0.0
      %2082 = vmatpush1.msra.mxu0 0.0
      %2083 = vmatprep.subr.mxu0 0.0
      %2084 = vmatpush1.msra.mxu0 0.0
      %2085 = vmatprep.subr.mxu0 0.0
      %2086 = vmatpush1.msra.mxu0 0.0
      %2087 = vmatprep.subr.mxu0 0.0
      %2088 = vmatpush1.msra.mxu0 0.0
      %2089 = vmatprep.subr.mxu0 0.0
      %2090 = vmatpush1.msra.mxu0 0.0
      %2091 = vmatprep.subr.mxu0 0.0
      %2092 = vmatpush1.msra.mxu0 0.0
      %2093 = vmatprep.subr.mxu0 0.0
      %2094 = vmatpush1.msra.mxu0 0.0
      %2095 = vmatprep.subr.mxu0 0.0
      %2096 = vmatpush1.msra.mxu0 0.0
      %2097 = vmatprep.subr.mxu0 0.0
      %2098 = vmatpush1.msra.mxu0 %v2065
      %2099 = vmatprep.subr.mxu0 0.0
      %2100 = vmatpush2.msra.mxu0 0.0
      %2101 = vmatprep.subr.mxu0 0.0
      %2102 = vmatpush2.msra.mxu0 0.0
      %2103 = vmatprep.subr.mxu0 0.0
      %2104 = vmatpush2.msra.mxu0 0.0
      %2105 = vmatprep.subr.mxu0 0.0
      %2106 = vmatpush2.msra.mxu0 0.0
      %2107 = vmatprep.subr.mxu0 0.0
      %2108 = vmatpush2.msra.mxu0 0.0
      %2109 = vmatprep.subr.mxu0 0.0
      %2110 = vmatpush2.msra.mxu0 0.0
      %2111 = vmatprep.subr.mxu0 0.0
      %2112 = vmatpush2.msra.mxu0 0.0
      %2113 = vmatprep.subr.mxu0 0.0
      %2114 = vmatpush2.msra.mxu0 0.0
      %2115 = vmatprep.subr.mxu0 0.0
      %2116 = vmatpush2.msra.mxu0 0.0
      %2117 = vmatprep.subr.mxu0 0.0
      %2118 = vmatpush2.msra.mxu0 0.0
      %2119 = vmatprep.subr.mxu0 0.0
      %2120 = vmatpush2.msra.mxu0 0.0
      %2121 = vmatprep.subr.mxu0 0.0
      %2122 = vmatpush2.msra.mxu0 0.0
      %2123 = vmatprep.subr.mxu0 0.0
      %2124 = vmatpush2.msra.mxu0 0.0
      %2125 = vmatprep.subr.mxu0 0.0
      %2126 = vmatpush2.msra.mxu0 0.0
      %2127 = vmatprep.subr.mxu0 0.0
      %2128 = vmatpush2.msra.mxu0 0.0
      %2129 = vmatprep.subr.mxu0 0.0
      %2130 = vmatpush2.msra.mxu0 0.0
      %2131 = vmatprep.mubr.f32.mxu0 0.0
      %2132 = vmatmul.mubr.f32.gmra.mxu0 %v2041
      %v2133 = vpop.f32.mrf.mxu0
      %v2134 = vadd.f32 0.0, %v2133
      %v2135 = vpop.f32.mrf.mxu0
      %2136 = vmatprep.mubr.f32.mxu0 0.0
      %2137 = vmatmul.mubr.f32.gmra.mxu0 %v2044
      %v2138 = vpop.f32.mrf.mxu0
      %v2139 = vadd.f32 0.0, %v2138
      %v2140 = vpop.f32.mrf.mxu0
      %2141 = vmatprep.mubr.f32.mxu0 0.0
      %2142 = vmatmul.mubr.f32.gmra.mxu0 %v2047
      %v2143 = vpop.f32.mrf.mxu0
      %v2144 = vadd.f32 0.0, %v2143
      %v2145 = vpop.f32.mrf.mxu0
      %2146 = vmatprep.mubr.f32.mxu0 0.0
      %2147 = vmatmul.mubr.f32.gmra.mxu0 %v2050
      %v2148 = vpop.f32.mrf.mxu0
      %v2149 = vadd.f32 0.0, %v2148
      %v2150 = vpop.f32.mrf.mxu0
      %2151 = vmatprep.mubr.f32.mxu0 0.0
      %2152 = vmatmul.mubr.f32.gmra.mxu0 %v2053
      %v2153 = vpop.f32.mrf.mxu0
      %v2154 = vadd.f32 0.0, %v2153
      %v2155 = vpop.f32.mrf.mxu0
      %2156 = vmatprep.mubr.f32.mxu0 0.0
      %2157 = vmatmul.mubr.f32.gmra.mxu0 %v2056
      %v2158 = vpop.f32.mrf.mxu0
      %v2159 = vadd.f32 0.0, %v2158
      %v2160 = vpop.f32.mrf.mxu0
      %2161 = vmatprep.mubr.f32.mxu0 0.0
      %2162 = vmatmul.mubr.f32.gmra.mxu0 %v2059
      %v2163 = vpop.f32.mrf.mxu0
      %v2164 = vadd.f32 0.0, %v2163
      %v2165 = vpop.f32.mrf.mxu0
      %2166 = vmatprep.mubr.f32.mxu0 0.0
      %2167 = vmatmul.mubr.f32.gmra.mxu0 %v2062
      %v2168 = vpop.f32.mrf.mxu0
      %v2169 = vadd.f32 0.0, %v2168
      %v2170 = vpop.f32.mrf.mxu0
      %2171 = vdwg.mxu0
      %v2172 = vld [vmem:[#allocation4] sm:$0xff]
      %v2173 = vld [vmem:[#allocation4 + $0x8] sm:$0xff]
      %v2174 = vld [vmem:[#allocation4 + $0x10] sm:$0xff]
      %v2175 = vld [vmem:[#allocation4 + $0x18] sm:$0xff]
      %v2176 = vld [vmem:[#allocation4 + $0x20] sm:$0xff]
      %v2177 = vld [vmem:[#allocation4 + $0x28] sm:$0xff]
      %v2178 = vld [vmem:[#allocation4 + $0x30] sm:$0xff]
      %v2179 = vld [vmem:[#allocation4 + $0x38] sm:$0xff]
      %v2180 = vadd.f32 %v2172, %v2134
      %v2181 = vadd.f32 %v2173, %v2139
      %v2182 = vadd.f32 %v2174, %v2144
      %v2183 = vadd.f32 %v2175, %v2149
      %v2184 = vadd.f32 %v2176, %v2154
      %v2185 = vadd.f32 %v2177, %v2159
      %v2186 = vadd.f32 %v2178, %v2164
      %v2187 = vadd.f32 %v2179, %v2169
      %2188 = vst.msk [vmem:[#allocation4] sm:$0xff] %vm406, %v2180
      %2189 = vst.msk [vmem:[#allocation4 + $0x8] sm:$0xff] %vm406, %v2181
      %2190 = vst.msk [vmem:[#allocation4 + $0x10] sm:$0xff] %vm406, %v2182
      %2191 = vst.msk [vmem:[#allocation4 + $0x18] sm:$0xff] %vm406, %v2183
      %2192 = vst.msk [vmem:[#allocation4 + $0x20] sm:$0xff] %vm406, %v2184
      %2193 = vst.msk [vmem:[#allocation4 + $0x28] sm:$0xff] %vm406, %v2185
      %2194 = vst.msk [vmem:[#allocation4 + $0x30] sm:$0xff] %vm406, %v2186
      %2195 = vst.msk [vmem:[#allocation4 + $0x38] sm:$0xff] %vm406, %v2187
      %v2196 = vld [vmem:[#allocation4] sm:$0xff]
      %v2197 = vld [vmem:[#allocation4 + $0x8] sm:$0xff]
      %v2198 = vld [vmem:[#allocation4 + $0x10] sm:$0xff]
      %v2199 = vld [vmem:[#allocation4 + $0x18] sm:$0xff]
      %v2200 = vld [vmem:[#allocation4 + $0x20] sm:$0xff]
      %v2201 = vld [vmem:[#allocation4 + $0x28] sm:$0xff]
      %v2202 = vld [vmem:[#allocation4 + $0x30] sm:$0xff]
      %v2203 = vld [vmem:[#allocation4 + $0x38] sm:$0xff]
      %v2204 = vld [vmem:[%s2] sm:$0x1]
      %v2206 = vlaneseq
      %v2207 = vshrl.u32 %v2206, 7
      %v2208 = vsub.s32 0, %v2207
      %v2209 = vrot.slane %v2204, %v2208
      %v2211 = vmul.f32 %v2196, %v2209
      %v2212 = vmul.f32 %v2197, %v2209
      %v2213 = vmul.f32 %v2198, %v2209
      %v2214 = vmul.f32 %v2199, %v2209
      %v2215 = vmul.f32 %v2200, %v2209
      %v2216 = vmul.f32 %v2201, %v2209
      %v2217 = vmul.f32 %v2202, %v2209
      %v2218 = vmul.f32 %v2203, %v2209
      %v2219 = vld [vmem:[%s3] sm:$0x1]
      %v2221 = vlaneseq
      %v2222 = vshrl.u32 %v2221, 7
      %v2223 = vsub.s32 0, %v2222
      %v2224 = vrot.slane %v2219, %v2223
      %v2226 = vadd.f32 %v2211, %v2224
      %v2227 = vadd.f32 %v2212, %v2224
      %v2228 = vadd.f32 %v2213, %v2224
      %v2229 = vadd.f32 %v2214, %v2224
      %v2230 = vadd.f32 %v2215, %v2224
      %v2231 = vadd.f32 %v2216, %v2224
      %v2232 = vadd.f32 %v2217, %v2224
      %v2233 = vadd.f32 %v2218, %v2224
      %v2234 = vmax.f32 %v2226, 0.0
      %v2235 = vmax.f32 %v2227, 0.0
      %v2236 = vmax.f32 %v2228, 0.0
      %v2237 = vmax.f32 %v2229, 0.0
      %v2238 = vmax.f32 %v2230, 0.0
      %v2239 = vmax.f32 %v2231, 0.0
      %v2240 = vmax.f32 %v2232, 0.0
      %v2241 = vmax.f32 %v2233, 0.0
      %s2242 = scalar_lea.vmem [#allocation3], 16
      %2243 = vst.msk [vmem:[%s2242 + $0x1] sm:$0xff] %vm406, %v2234
      %2244 = vst.msk [vmem:[%s2242 + $0x11] sm:$0xff] %vm406, %v2235
      %2245 = vst.msk [vmem:[%s2242 + $0x21] sm:$0xff] %vm406, %v2236
      %2246 = vst.msk [vmem:[%s2242 + $0x31] sm:$0xff] %vm406, %v2237
      %2247 = vst.msk [vmem:[%s2242 + $0x41] sm:$0xff] %vm406, %v2238
      %2248 = vst.msk [vmem:[%s2242 + $0x51] sm:$0xff] %vm406, %v2239
      %2249 = vst.msk [vmem:[%s2242 + $0x61] sm:$0xff] %vm406, %v2240
      %2250 = vst.msk [vmem:[%s2242 + $0x71] sm:$0xff] %vm406, %v2241
      %v2251 = vld [vmem:[%s1363] sm:$0xff]
      %v2252 = vld [vmem:[%s1363 + $0x20] sm:$0xff]
      %v2253 = vld [vmem:[%s1363 + $0x40] sm:$0xff]
      %v2254 = vld [vmem:[%s1363 + $0x60] sm:$0xff]
      %v2255 = vld [vmem:[%s1363 + $0x80] sm:$0xff]
      %v2256 = vld [vmem:[%s1363 + $0xa0] sm:$0xff]
      %v2257 = vld [vmem:[%s1363 + $0xc0] sm:$0xff]
      %v2258 = vld [vmem:[%s1363 + $0xe0] sm:$0xff]
      %v2259 = vld [vmem:[%s7] sm:$0xf]
      %v2261 = vsel %vm360, %v2251, 0
      %v2264 = vsel %vm360, %v2252, 0
      %v2267 = vsel %vm360, %v2253, 0
      %v2270 = vsel %vm360, %v2254, 0
      %v2273 = vsel %vm360, %v2255, 0
      %v2276 = vsel %vm360, %v2256, 0
      %v2279 = vsel %vm360, %v2257, 0
      %v2282 = vsel %vm360, %v2258, 0
      %v2285 = vsel %vm747, %v2259, 0
      %2287 = vmatprep.subr.mxu0 0.0
      %2288 = vmatpush1.msra.mxu0 0.0
      %2289 = vmatprep.subr.mxu0 0.0
      %2290 = vmatpush1.msra.mxu0 0.0
      %2291 = vmatprep.subr.mxu0 0.0
      %2292 = vmatpush1.msra.mxu0 0.0
      %2293 = vmatprep.subr.mxu0 0.0
      %2294 = vmatpush1.msra.mxu0 0.0
      %2295 = vmatprep.subr.mxu0 0.0
      %2296 = vmatpush1.msra.mxu0 0.0
      %2297 = vmatprep.subr.mxu0 0.0
      %2298 = vmatpush1.msra.mxu0 0.0
      %2299 = vmatprep.subr.mxu0 0.0
      %2300 = vmatpush1.msra.mxu0 0.0
      %2301 = vmatprep.subr.mxu0 0.0
      %2302 = vmatpush1.msra.mxu0 0.0
      %2303 = vmatprep.subr.mxu0 0.0
      %2304 = vmatpush1.msra.mxu0 0.0
      %2305 = vmatprep.subr.mxu0 0.0
      %2306 = vmatpush1.msra.mxu0 0.0
      %2307 = vmatprep.subr.mxu0 0.0
      %2308 = vmatpush1.msra.mxu0 0.0
      %2309 = vmatprep.subr.mxu0 0.0
      %2310 = vmatpush1.msra.mxu0 0.0
      %2311 = vmatprep.subr.mxu0 0.0
      %2312 = vmatpush1.msra.mxu0 0.0
      %2313 = vmatprep.subr.mxu0 0.0
      %2314 = vmatpush1.msra.mxu0 0.0
      %2315 = vmatprep.subr.mxu0 0.0
      %2316 = vmatpush1.msra.mxu0 0.0
      %2317 = vmatprep.subr.mxu0 0.0
      %2318 = vmatpush1.msra.mxu0 %v2285
      %2319 = vmatprep.subr.mxu0 0.0
      %2320 = vmatpush2.msra.mxu0 0.0
      %2321 = vmatprep.subr.mxu0 0.0
      %2322 = vmatpush2.msra.mxu0 0.0
      %2323 = vmatprep.subr.mxu0 0.0
      %2324 = vmatpush2.msra.mxu0 0.0
      %2325 = vmatprep.subr.mxu0 0.0
      %2326 = vmatpush2.msra.mxu0 0.0
      %2327 = vmatprep.subr.mxu0 0.0
      %2328 = vmatpush2.msra.mxu0 0.0
      %2329 = vmatprep.subr.mxu0 0.0
      %2330 = vmatpush2.msra.mxu0 0.0
      %2331 = vmatprep.subr.mxu0 0.0
      %2332 = vmatpush2.msra.mxu0 0.0
      %2333 = vmatprep.subr.mxu0 0.0
      %2334 = vmatpush2.msra.mxu0 0.0
      %2335 = vmatprep.subr.mxu0 0.0
      %2336 = vmatpush2.msra.mxu0 0.0
      %2337 = vmatprep.subr.mxu0 0.0
      %2338 = vmatpush2.msra.mxu0 0.0
      %2339 = vmatprep.subr.mxu0 0.0
      %2340 = vmatpush2.msra.mxu0 0.0
      %2341 = vmatprep.subr.mxu0 0.0
      %2342 = vmatpush2.msra.mxu0 0.0
      %2343 = vmatprep.subr.mxu0 0.0
      %2344 = vmatpush2.msra.mxu0 0.0
      %2345 = vmatprep.subr.mxu0 0.0
      %2346 = vmatpush2.msra.mxu0 0.0
      %2347 = vmatprep.subr.mxu0 0.0
      %2348 = vmatpush2.msra.mxu0 0.0
      %2349 = vmatprep.subr.mxu0 0.0
      %2350 = vmatpush2.msra.mxu0 0.0
      %2351 = vmatprep.mubr.f32.mxu0 0.0
      %2352 = vmatmul.mubr.f32.gmra.mxu0 %v2261
      %v2353 = vpop.f32.mrf.mxu0
      %v2354 = vadd.f32 0.0, %v2353
      %v2355 = vpop.f32.mrf.mxu0
      %2356 = vmatprep.mubr.f32.mxu0 0.0
      %2357 = vmatmul.mubr.f32.gmra.mxu0 %v2264
      %v2358 = vpop.f32.mrf.mxu0
      %v2359 = vadd.f32 0.0, %v2358
      %v2360 = vpop.f32.mrf.mxu0
      %2361 = vmatprep.mubr.f32.mxu0 0.0
      %2362 = vmatmul.mubr.f32.gmra.mxu0 %v2267
      %v2363 = vpop.f32.mrf.mxu0
      %v2364 = vadd.f32 0.0, %v2363
      %v2365 = vpop.f32.mrf.mxu0
      %2366 = vmatprep.mubr.f32.mxu0 0.0
      %2367 = vmatmul.mubr.f32.gmra.mxu0 %v2270
      %v2368 = vpop.f32.mrf.mxu0
      %v2369 = vadd.f32 0.0, %v2368
      %v2370 = vpop.f32.mrf.mxu0
      %2371 = vmatprep.mubr.f32.mxu0 0.0
      %2372 = vmatmul.mubr.f32.gmra.mxu0 %v2273
      %v2373 = vpop.f32.mrf.mxu0
      %v2374 = vadd.f32 0.0, %v2373
      %v2375 = vpop.f32.mrf.mxu0
      %2376 = vmatprep.mubr.f32.mxu0 0.0
      %2377 = vmatmul.mubr.f32.gmra.mxu0 %v2276
      %v2378 = vpop.f32.mrf.mxu0
      %v2379 = vadd.f32 0.0, %v2378
      %v2380 = vpop.f32.mrf.mxu0
      %2381 = vmatprep.mubr.f32.mxu0 0.0
      %2382 = vmatmul.mubr.f32.gmra.mxu0 %v2279
      %v2383 = vpop.f32.mrf.mxu0
      %v2384 = vadd.f32 0.0, %v2383
      %v2385 = vpop.f32.mrf.mxu0
      %2386 = vmatprep.mubr.f32.mxu0 0.0
      %2387 = vmatmul.mubr.f32.gmra.mxu0 %v2282
      %v2388 = vpop.f32.mrf.mxu0
      %v2389 = vadd.f32 0.0, %v2388
      %v2390 = vpop.f32.mrf.mxu0
      %2391 = vdwg.mxu0
      %v2392 = vld [vmem:[%s8] sm:$0x1]
      %v2394 = vlaneseq
      %v2395 = vshrl.u32 %v2394, 7
      %v2396 = vsub.s32 0, %v2395
      %v2397 = vrot.slane %v2392, %v2396
      %v2399 = vmul.f32 %v2354, %v2397
      %v2400 = vmul.f32 %v2359, %v2397
      %v2401 = vmul.f32 %v2364, %v2397
      %v2402 = vmul.f32 %v2369, %v2397
      %v2403 = vmul.f32 %v2374, %v2397
      %v2404 = vmul.f32 %v2379, %v2397
      %v2405 = vmul.f32 %v2384, %v2397
      %v2406 = vmul.f32 %v2389, %v2397
      %v2407 = vld [vmem:[%s9] sm:$0x1]
      %v2409 = vlaneseq
      %v2410 = vshrl.u32 %v2409, 7
      %v2411 = vsub.s32 0, %v2410
      %v2412 = vrot.slane %v2407, %v2411
      %v2414 = vadd.f32 %v2399, %v2412
      %v2415 = vadd.f32 %v2400, %v2412
      %v2416 = vadd.f32 %v2401, %v2412
      %v2417 = vadd.f32 %v2402, %v2412
      %v2418 = vadd.f32 %v2403, %v2412
      %v2419 = vadd.f32 %v2404, %v2412
      %v2420 = vadd.f32 %v2405, %v2412
      %v2421 = vadd.f32 %v2406, %v2412
      %v2422 = vld [vmem:[#allocation3] sm:$0xff]
      %v2423 = vld [vmem:[#allocation3 + $0x10] sm:$0xff]
      %v2424 = vld [vmem:[#allocation3 + $0x20] sm:$0xff]
      %v2425 = vld [vmem:[#allocation3 + $0x30] sm:$0xff]
      %v2426 = vld [vmem:[#allocation3 + $0x40] sm:$0xff]
      %v2427 = vld [vmem:[#allocation3 + $0x50] sm:$0xff]
      %v2428 = vld [vmem:[#allocation3 + $0x60] sm:$0xff]
      %v2429 = vld [vmem:[#allocation3 + $0x70] sm:$0xff]
      %v2430 = vld [vmem:[%s4] sm:$0xff]
      %v2432 = vsel %vm406, %v2422, 0
      %v2435 = vsel %vm406, %v2423, 0
      %v2438 = vsel %vm406, %v2424, 0
      %v2441 = vsel %vm406, %v2425, 0
      %v2444 = vsel %vm406, %v2426, 0
      %v2447 = vsel %vm406, %v2427, 0
      %v2450 = vsel %vm406, %v2428, 0
      %v2453 = vsel %vm406, %v2429, 0
      %2455 = vmatprep.subr.mxu0 0.0
      %2456 = vmatpush1.msra.mxu0 0.0
      %2457 = vmatprep.subr.mxu0 0.0
      %2458 = vmatpush1.msra.mxu0 0.0
      %2459 = vmatprep.subr.mxu0 0.0
      %2460 = vmatpush1.msra.mxu0 0.0
      %2461 = vmatprep.subr.mxu0 0.0
      %2462 = vmatpush1.msra.mxu0 0.0
      %2463 = vmatprep.subr.mxu0 0.0
      %2464 = vmatpush1.msra.mxu0 0.0
      %2465 = vmatprep.subr.mxu0 0.0
      %2466 = vmatpush1.msra.mxu0 0.0
      %2467 = vmatprep.subr.mxu0 0.0
      %2468 = vmatpush1.msra.mxu0 0.0
      %2469 = vmatprep.subr.mxu0 0.0
      %2470 = vmatpush1.msra.mxu0 0.0
      %2471 = vmatprep.subr.mxu0 0.0
      %2472 = vmatpush1.msra.mxu0 0.0
      %2473 = vmatprep.subr.mxu0 0.0
      %2474 = vmatpush1.msra.mxu0 0.0
      %2475 = vmatprep.subr.mxu0 0.0
      %2476 = vmatpush1.msra.mxu0 0.0
      %2477 = vmatprep.subr.mxu0 0.0
      %2478 = vmatpush1.msra.mxu0 0.0
      %2479 = vmatprep.subr.mxu0 0.0
      %2480 = vmatpush1.msra.mxu0 0.0
      %2481 = vmatprep.subr.mxu0 0.0
      %2482 = vmatpush1.msra.mxu0 0.0
      %2483 = vmatprep.subr.mxu0 0.0
      %2484 = vmatpush1.msra.mxu0 0.0
      %2485 = vmatprep.subr.mxu0 0.0
      %2486 = vmatpush1.msra.mxu0 %v2430
      %2487 = vmatprep.subr.mxu0 0.0
      %2488 = vmatpush2.msra.mxu0 0.0
      %2489 = vmatprep.subr.mxu0 0.0
      %2490 = vmatpush2.msra.mxu0 0.0
      %2491 = vmatprep.subr.mxu0 0.0
      %2492 = vmatpush2.msra.mxu0 0.0
      %2493 = vmatprep.subr.mxu0 0.0
      %2494 = vmatpush2.msra.mxu0 0.0
      %2495 = vmatprep.subr.mxu0 0.0
      %2496 = vmatpush2.msra.mxu0 0.0
      %2497 = vmatprep.subr.mxu0 0.0
      %2498 = vmatpush2.msra.mxu0 0.0
      %2499 = vmatprep.subr.mxu0 0.0
      %2500 = vmatpush2.msra.mxu0 0.0
      %2501 = vmatprep.subr.mxu0 0.0
      %2502 = vmatpush2.msra.mxu0 0.0
      %2503 = vmatprep.subr.mxu0 0.0
      %2504 = vmatpush2.msra.mxu0 0.0
      %2505 = vmatprep.subr.mxu0 0.0
      %2506 = vmatpush2.msra.mxu0 0.0
      %2507 = vmatprep.subr.mxu0 0.0
      %2508 = vmatpush2.msra.mxu0 0.0
      %2509 = vmatprep.subr.mxu0 0.0
      %2510 = vmatpush2.msra.mxu0 0.0
      %2511 = vmatprep.subr.mxu0 0.0
      %2512 = vmatpush2.msra.mxu0 0.0
      %2513 = vmatprep.subr.mxu0 0.0
      %2514 = vmatpush2.msra.mxu0 0.0
      %2515 = vmatprep.subr.mxu0 0.0
      %2516 = vmatpush2.msra.mxu0 0.0
      %2517 = vmatprep.subr.mxu0 0.0
      %2518 = vmatpush2.msra.mxu0 0.0
      %2519 = vmatprep.mubr.f32.mxu0 0.0
      %2520 = vmatmul.mubr.f32.gmra.mxu0 %v2432
      %v2521 = vpop.f32.mrf.mxu0
      %v2522 = vadd.f32 0.0, %v2521
      %v2523 = vpop.f32.mrf.mxu0
      %2524 = vmatprep.mubr.f32.mxu0 0.0
      %2525 = vmatmul.mubr.f32.gmra.mxu0 %v2435
      %v2526 = vpop.f32.mrf.mxu0
      %v2527 = vadd.f32 0.0, %v2526
      %v2528 = vpop.f32.mrf.mxu0
      %2529 = vmatprep.mubr.f32.mxu0 0.0
      %2530 = vmatmul.mubr.f32.gmra.mxu0 %v2438
      %v2531 = vpop.f32.mrf.mxu0
      %v2532 = vadd.f32 0.0, %v2531
      %v2533 = vpop.f32.mrf.mxu0
      %2534 = vmatprep.mubr.f32.mxu0 0.0
      %2535 = vmatmul.mubr.f32.gmra.mxu0 %v2441
      %v2536 = vpop.f32.mrf.mxu0
      %v2537 = vadd.f32 0.0, %v2536
      %v2538 = vpop.f32.mrf.mxu0
      %2539 = vmatprep.mubr.f32.mxu0 0.0
      %2540 = vmatmul.mubr.f32.gmra.mxu0 %v2444
      %v2541 = vpop.f32.mrf.mxu0
      %v2542 = vadd.f32 0.0, %v2541
      %v2543 = vpop.f32.mrf.mxu0
      %2544 = vmatprep.mubr.f32.mxu0 0.0
      %2545 = vmatmul.mubr.f32.gmra.mxu0 %v2447
      %v2546 = vpop.f32.mrf.mxu0
      %v2547 = vadd.f32 0.0, %v2546
      %v2548 = vpop.f32.mrf.mxu0
      %2549 = vmatprep.mubr.f32.mxu0 0.0
      %2550 = vmatmul.mubr.f32.gmra.mxu0 %v2450
      %v2551 = vpop.f32.mrf.mxu0
      %v2552 = vadd.f32 0.0, %v2551
      %v2553 = vpop.f32.mrf.mxu0
      %2554 = vmatprep.mubr.f32.mxu0 0.0
      %2555 = vmatmul.mubr.f32.gmra.mxu0 %v2453
      %v2556 = vpop.f32.mrf.mxu0
      %v2557 = vadd.f32 0.0, %v2556
      %v2558 = vpop.f32.mrf.mxu0
      %2559 = vdwg.mxu0
      %2560 = vst.msk [vmem:[#allocation4] sm:$0xff] %vm406, %v2522
      %2561 = vst.msk [vmem:[#allocation4 + $0x8] sm:$0xff] %vm406, %v2527
      %2562 = vst.msk [vmem:[#allocation4 + $0x10] sm:$0xff] %vm406, %v2532
      %2563 = vst.msk [vmem:[#allocation4 + $0x18] sm:$0xff] %vm406, %v2537
      %2564 = vst.msk [vmem:[#allocation4 + $0x20] sm:$0xff] %vm406, %v2542
      %2565 = vst.msk [vmem:[#allocation4 + $0x28] sm:$0xff] %vm406, %v2547
      %2566 = vst.msk [vmem:[#allocation4 + $0x30] sm:$0xff] %vm406, %v2552
      %2567 = vst.msk [vmem:[#allocation4 + $0x38] sm:$0xff] %vm406, %v2557
      %v2568 = vld [vmem:[#allocation3 + $0x1] sm:$0xff]
      %v2569 = vld [vmem:[#allocation3 + $0x11] sm:$0xff]
      %v2570 = vld [vmem:[#allocation3 + $0x21] sm:$0xff]
      %v2571 = vld [vmem:[#allocation3 + $0x31] sm:$0xff]
      %v2572 = vld [vmem:[#allocation3 + $0x41] sm:$0xff]
      %v2573 = vld [vmem:[#allocation3 + $0x51] sm:$0xff]
      %v2574 = vld [vmem:[#allocation3 + $0x61] sm:$0xff]
      %v2575 = vld [vmem:[#allocation3 + $0x71] sm:$0xff]
      %s2576 = scalar_lea.vmem %s4, 8
      %v2577 = vld [vmem:[%s2576] sm:$0xff]
      %v2579 = vsel %vm406, %v2568, 0
      %v2582 = vsel %vm406, %v2569, 0
      %v2585 = vsel %vm406, %v2570, 0
      %v2588 = vsel %vm406, %v2571, 0
      %v2591 = vsel %vm406, %v2572, 0
      %v2594 = vsel %vm406, %v2573, 0
      %v2597 = vsel %vm406, %v2574, 0
      %v2600 = vsel %vm406, %v2575, 0
      %2602 = vmatprep.subr.mxu0 0.0
      %2603 = vmatpush1.msra.mxu0 0.0
      %2604 = vmatprep.subr.mxu0 0.0
      %2605 = vmatpush1.msra.mxu0 0.0
      %2606 = vmatprep.subr.mxu0 0.0
      %2607 = vmatpush1.msra.mxu0 0.0
      %2608 = vmatprep.subr.mxu0 0.0
      %2609 = vmatpush1.msra.mxu0 0.0
      %2610 = vmatprep.subr.mxu0 0.0
      %2611 = vmatpush1.msra.mxu0 0.0
      %2612 = vmatprep.subr.mxu0 0.0
      %2613 = vmatpush1.msra.mxu0 0.0
      %2614 = vmatprep.subr.mxu0 0.0
      %2615 = vmatpush1.msra.mxu0 0.0
      %2616 = vmatprep.subr.mxu0 0.0
      %2617 = vmatpush1.msra.mxu0 0.0
      %2618 = vmatprep.subr.mxu0 0.0
      %2619 = vmatpush1.msra.mxu0 0.0
      %2620 = vmatprep.subr.mxu0 0.0
      %2621 = vmatpush1.msra.mxu0 0.0
      %2622 = vmatprep.subr.mxu0 0.0
      %2623 = vmatpush1.msra.mxu0 0.0
      %2624 = vmatprep.subr.mxu0 0.0
      %2625 = vmatpush1.msra.mxu0 0.0
      %2626 = vmatprep.subr.mxu0 0.0
      %2627 = vmatpush1.msra.mxu0 0.0
      %2628 = vmatprep.subr.mxu0 0.0
      %2629 = vmatpush1.msra.mxu0 0.0
      %2630 = vmatprep.subr.mxu0 0.0
      %2631 = vmatpush1.msra.mxu0 0.0
      %2632 = vmatprep.subr.mxu0 0.0
      %2633 = vmatpush1.msra.mxu0 %v2577
      %2634 = vmatprep.subr.mxu0 0.0
      %2635 = vmatpush2.msra.mxu0 0.0
      %2636 = vmatprep.subr.mxu0 0.0
      %2637 = vmatpush2.msra.mxu0 0.0
      %2638 = vmatprep.subr.mxu0 0.0
      %2639 = vmatpush2.msra.mxu0 0.0
      %2640 = vmatprep.subr.mxu0 0.0
      %2641 = vmatpush2.msra.mxu0 0.0
      %2642 = vmatprep.subr.mxu0 0.0
      %2643 = vmatpush2.msra.mxu0 0.0
      %2644 = vmatprep.subr.mxu0 0.0
      %2645 = vmatpush2.msra.mxu0 0.0
      %2646 = vmatprep.subr.mxu0 0.0
      %2647 = vmatpush2.msra.mxu0 0.0
      %2648 = vmatprep.subr.mxu0 0.0
      %2649 = vmatpush2.msra.mxu0 0.0
      %2650 = vmatprep.subr.mxu0 0.0
      %2651 = vmatpush2.msra.mxu0 0.0
      %2652 = vmatprep.subr.mxu0 0.0
      %2653 = vmatpush2.msra.mxu0 0.0
      %2654 = vmatprep.subr.mxu0 0.0
      %2655 = vmatpush2.msra.mxu0 0.0
      %2656 = vmatprep.subr.mxu0 0.0
      %2657 = vmatpush2.msra.mxu0 0.0
      %2658 = vmatprep.subr.mxu0 0.0
      %2659 = vmatpush2.msra.mxu0 0.0
      %2660 = vmatprep.subr.mxu0 0.0
      %2661 = vmatpush2.msra.mxu0 0.0
      %2662 = vmatprep.subr.mxu0 0.0
      %2663 = vmatpush2.msra.mxu0 0.0
      %2664 = vmatprep.subr.mxu0 0.0
      %2665 = vmatpush2.msra.mxu0 0.0
      %2666 = vmatprep.mubr.f32.mxu0 0.0
      %2667 = vmatmul.mubr.f32.gmra.mxu0 %v2579
      %v2668 = vpop.f32.mrf.mxu0
      %v2669 = vadd.f32 0.0, %v2668
      %v2670 = vpop.f32.mrf.mxu0
      %2671 = vmatprep.mubr.f32.mxu0 0.0
      %2672 = vmatmul.mubr.f32.gmra.mxu0 %v2582
      %v2673 = vpop.f32.mrf.mxu0
      %v2674 = vadd.f32 0.0, %v2673
      %v2675 = vpop.f32.mrf.mxu0
      %2676 = vmatprep.mubr.f32.mxu0 0.0
      %2677 = vmatmul.mubr.f32.gmra.mxu0 %v2585
      %v2678 = vpop.f32.mrf.mxu0
      %v2679 = vadd.f32 0.0, %v2678
      %v2680 = vpop.f32.mrf.mxu0
      %2681 = vmatprep.mubr.f32.mxu0 0.0
      %2682 = vmatmul.mubr.f32.gmra.mxu0 %v2588
      %v2683 = vpop.f32.mrf.mxu0
      %v2684 = vadd.f32 0.0, %v2683
      %v2685 = vpop.f32.mrf.mxu0
      %2686 = vmatprep.mubr.f32.mxu0 0.0
      %2687 = vmatmul.mubr.f32.gmra.mxu0 %v2591
      %v2688 = vpop.f32.mrf.mxu0
      %v2689 = vadd.f32 0.0, %v2688
      %v2690 = vpop.f32.mrf.mxu0
      %2691 = vmatprep.mubr.f32.mxu0 0.0
      %2692 = vmatmul.mubr.f32.gmra.mxu0 %v2594
      %v2693 = vpop.f32.mrf.mxu0
      %v2694 = vadd.f32 0.0, %v2693
      %v2695 = vpop.f32.mrf.mxu0
      %2696 = vmatprep.mubr.f32.mxu0 0.0
      %2697 = vmatmul.mubr.f32.gmra.mxu0 %v2597
      %v2698 = vpop.f32.mrf.mxu0
      %v2699 = vadd.f32 0.0, %v2698
      %v2700 = vpop.f32.mrf.mxu0
      %2701 = vmatprep.mubr.f32.mxu0 0.0
      %2702 = vmatmul.mubr.f32.gmra.mxu0 %v2600
      %v2703 = vpop.f32.mrf.mxu0
      %v2704 = vadd.f32 0.0, %v2703
      %v2705 = vpop.f32.mrf.mxu0
      %2706 = vdwg.mxu0
      %v2707 = vld [vmem:[#allocation4] sm:$0xff]
      %v2708 = vld [vmem:[#allocation4 + $0x8] sm:$0xff]
      %v2709 = vld [vmem:[#allocation4 + $0x10] sm:$0xff]
      %v2710 = vld [vmem:[#allocation4 + $0x18] sm:$0xff]
      %v2711 = vld [vmem:[#allocation4 + $0x20] sm:$0xff]
      %v2712 = vld [vmem:[#allocation4 + $0x28] sm:$0xff]
      %v2713 = vld [vmem:[#allocation4 + $0x30] sm:$0xff]
      %v2714 = vld [vmem:[#allocation4 + $0x38] sm:$0xff]
      %v2715 = vadd.f32 %v2707, %v2669
      %v2716 = vadd.f32 %v2708, %v2674
      %v2717 = vadd.f32 %v2709, %v2679
      %v2718 = vadd.f32 %v2710, %v2684
      %v2719 = vadd.f32 %v2711, %v2689
      %v2720 = vadd.f32 %v2712, %v2694
      %v2721 = vadd.f32 %v2713, %v2699
      %v2722 = vadd.f32 %v2714, %v2704
      %2723 = vst.msk [vmem:[#allocation4] sm:$0xff] %vm406, %v2715
      %2724 = vst.msk [vmem:[#allocation4 + $0x8] sm:$0xff] %vm406, %v2716
      %2725 = vst.msk [vmem:[#allocation4 + $0x10] sm:$0xff] %vm406, %v2717
      %2726 = vst.msk [vmem:[#allocation4 + $0x18] sm:$0xff] %vm406, %v2718
      %2727 = vst.msk [vmem:[#allocation4 + $0x20] sm:$0xff] %vm406, %v2719
      %2728 = vst.msk [vmem:[#allocation4 + $0x28] sm:$0xff] %vm406, %v2720
      %2729 = vst.msk [vmem:[#allocation4 + $0x30] sm:$0xff] %vm406, %v2721
      %2730 = vst.msk [vmem:[#allocation4 + $0x38] sm:$0xff] %vm406, %v2722
      %v2731 = vld [vmem:[#allocation3 + $0x2] sm:$0xff]
      %v2732 = vld [vmem:[#allocation3 + $0x12] sm:$0xff]
      %v2733 = vld [vmem:[#allocation3 + $0x22] sm:$0xff]
      %v2734 = vld [vmem:[#allocation3 + $0x32] sm:$0xff]
      %v2735 = vld [vmem:[#allocation3 + $0x42] sm:$0xff]
      %v2736 = vld [vmem:[#allocation3 + $0x52] sm:$0xff]
      %v2737 = vld [vmem:[#allocation3 + $0x62] sm:$0xff]
      %v2738 = vld [vmem:[#allocation3 + $0x72] sm:$0xff]
      %s2739 = scalar_lea.vmem %s4, 16
      %v2740 = vld [vmem:[%s2739] sm:$0xff]
      %v2742 = vsel %vm406, %v2731, 0
      %v2745 = vsel %vm406, %v2732, 0
      %v2748 = vsel %vm406, %v2733, 0
      %v2751 = vsel %vm406, %v2734, 0
      %v2754 = vsel %vm406, %v2735, 0
      %v2757 = vsel %vm406, %v2736, 0
      %v2760 = vsel %vm406, %v2737, 0
      %v2763 = vsel %vm406, %v2738, 0
      %2765 = vmatprep.subr.mxu0 0.0
      %2766 = vmatpush1.msra.mxu0 0.0
      %2767 = vmatprep.subr.mxu0 0.0
      %2768 = vmatpush1.msra.mxu0 0.0
      %2769 = vmatprep.subr.mxu0 0.0
      %2770 = vmatpush1.msra.mxu0 0.0
      %2771 = vmatprep.subr.mxu0 0.0
      %2772 = vmatpush1.msra.mxu0 0.0
      %2773 = vmatprep.subr.mxu0 0.0
      %2774 = vmatpush1.msra.mxu0 0.0
      %2775 = vmatprep.subr.mxu0 0.0
      %2776 = vmatpush1.msra.mxu0 0.0
      %2777 = vmatprep.subr.mxu0 0.0
      %2778 = vmatpush1.msra.mxu0 0.0
      %2779 = vmatprep.subr.mxu0 0.0
      %2780 = vmatpush1.msra.mxu0 0.0
      %2781 = vmatprep.subr.mxu0 0.0
      %2782 = vmatpush1.msra.mxu0 0.0
      %2783 = vmatprep.subr.mxu0 0.0
      %2784 = vmatpush1.msra.mxu0 0.0
      %2785 = vmatprep.subr.mxu0 0.0
      %2786 = vmatpush1.msra.mxu0 0.0
      %2787 = vmatprep.subr.mxu0 0.0
      %2788 = vmatpush1.msra.mxu0 0.0
      %2789 = vmatprep.subr.mxu0 0.0
      %2790 = vmatpush1.msra.mxu0 0.0
      %2791 = vmatprep.subr.mxu0 0.0
      %2792 = vmatpush1.msra.mxu0 0.0
      %2793 = vmatprep.subr.mxu0 0.0
      %2794 = vmatpush1.msra.mxu0 0.0
      %2795 = vmatprep.subr.mxu0 0.0
      %2796 = vmatpush1.msra.mxu0 %v2740
      %2797 = vmatprep.subr.mxu0 0.0
      %2798 = vmatpush2.msra.mxu0 0.0
      %2799 = vmatprep.subr.mxu0 0.0
      %2800 = vmatpush2.msra.mxu0 0.0
      %2801 = vmatprep.subr.mxu0 0.0
      %2802 = vmatpush2.msra.mxu0 0.0
      %2803 = vmatprep.subr.mxu0 0.0
      %2804 = vmatpush2.msra.mxu0 0.0
      %2805 = vmatprep.subr.mxu0 0.0
      %2806 = vmatpush2.msra.mxu0 0.0
      %2807 = vmatprep.subr.mxu0 0.0
      %2808 = vmatpush2.msra.mxu0 0.0
      %2809 = vmatprep.subr.mxu0 0.0
      %2810 = vmatpush2.msra.mxu0 0.0
      %2811 = vmatprep.subr.mxu0 0.0
      %2812 = vmatpush2.msra.mxu0 0.0
      %2813 = vmatprep.subr.mxu0 0.0
      %2814 = vmatpush2.msra.mxu0 0.0
      %2815 = vmatprep.subr.mxu0 0.0
      %2816 = vmatpush2.msra.mxu0 0.0
      %2817 = vmatprep.subr.mxu0 0.0
      %2818 = vmatpush2.msra.mxu0 0.0
      %2819 = vmatprep.subr.mxu0 0.0
      %2820 = vmatpush2.msra.mxu0 0.0
      %2821 = vmatprep.subr.mxu0 0.0
      %2822 = vmatpush2.msra.mxu0 0.0
      %2823 = vmatprep.subr.mxu0 0.0
      %2824 = vmatpush2.msra.mxu0 0.0
      %2825 = vmatprep.subr.mxu0 0.0
      %2826 = vmatpush2.msra.mxu0 0.0
      %2827 = vmatprep.subr.mxu0 0.0
      %2828 = vmatpush2.msra.mxu0 0.0
      %2829 = vmatprep.mubr.f32.mxu0 0.0
      %2830 = vmatmul.mubr.f32.gmra.mxu0 %v2742
      %v2831 = vpop.f32.mrf.mxu0
      %v2832 = vadd.f32 0.0, %v2831
      %v2833 = vpop.f32.mrf.mxu0
      %2834 = vmatprep.mubr.f32.mxu0 0.0
      %2835 = vmatmul.mubr.f32.gmra.mxu0 %v2745
      %v2836 = vpop.f32.mrf.mxu0
      %v2837 = vadd.f32 0.0, %v2836
      %v2838 = vpop.f32.mrf.mxu0
      %2839 = vmatprep.mubr.f32.mxu0 0.0
      %2840 = vmatmul.mubr.f32.gmra.mxu0 %v2748
      %v2841 = vpop.f32.mrf.mxu0
      %v2842 = vadd.f32 0.0, %v2841
      %v2843 = vpop.f32.mrf.mxu0
      %2844 = vmatprep.mubr.f32.mxu0 0.0
      %2845 = vmatmul.mubr.f32.gmra.mxu0 %v2751
      %v2846 = vpop.f32.mrf.mxu0
      %v2847 = vadd.f32 0.0, %v2846
      %v2848 = vpop.f32.mrf.mxu0
      %2849 = vmatprep.mubr.f32.mxu0 0.0
      %2850 = vmatmul.mubr.f32.gmra.mxu0 %v2754
      %v2851 = vpop.f32.mrf.mxu0
      %v2852 = vadd.f32 0.0, %v2851
      %v2853 = vpop.f32.mrf.mxu0
      %2854 = vmatprep.mubr.f32.mxu0 0.0
      %2855 = vmatmul.mubr.f32.gmra.mxu0 %v2757
      %v2856 = vpop.f32.mrf.mxu0
      %v2857 = vadd.f32 0.0, %v2856
      %v2858 = vpop.f32.mrf.mxu0
      %2859 = vmatprep.mubr.f32.mxu0 0.0
      %2860 = vmatmul.mubr.f32.gmra.mxu0 %v2760
      %v2861 = vpop.f32.mrf.mxu0
      %v2862 = vadd.f32 0.0, %v2861
      %v2863 = vpop.f32.mrf.mxu0
      %2864 = vmatprep.mubr.f32.mxu0 0.0
      %2865 = vmatmul.mubr.f32.gmra.mxu0 %v2763
      %v2866 = vpop.f32.mrf.mxu0
      %v2867 = vadd.f32 0.0, %v2866
      %v2868 = vpop.f32.mrf.mxu0
      %2869 = vdwg.mxu0
      %v2870 = vld [vmem:[#allocation4] sm:$0xff]
      %v2871 = vld [vmem:[#allocation4 + $0x8] sm:$0xff]
      %v2872 = vld [vmem:[#allocation4 + $0x10] sm:$0xff]
      %v2873 = vld [vmem:[#allocation4 + $0x18] sm:$0xff]
      %v2874 = vld [vmem:[#allocation4 + $0x20] sm:$0xff]
      %v2875 = vld [vmem:[#allocation4 + $0x28] sm:$0xff]
      %v2876 = vld [vmem:[#allocation4 + $0x30] sm:$0xff]
      %v2877 = vld [vmem:[#allocation4 + $0x38] sm:$0xff]
      %v2878 = vadd.f32 %v2870, %v2832
      %v2879 = vadd.f32 %v2871, %v2837
      %v2880 = vadd.f32 %v2872, %v2842
      %v2881 = vadd.f32 %v2873, %v2847
      %v2882 = vadd.f32 %v2874, %v2852
      %v2883 = vadd.f32 %v2875, %v2857
      %v2884 = vadd.f32 %v2876, %v2862
      %v2885 = vadd.f32 %v2877, %v2867
      %2886 = vst.msk [vmem:[#allocation4] sm:$0xff] %vm406, %v2878
      %2887 = vst.msk [vmem:[#allocation4 + $0x8] sm:$0xff] %vm406, %v2879
      %2888 = vst.msk [vmem:[#allocation4 + $0x10] sm:$0xff] %vm406, %v2880
      %2889 = vst.msk [vmem:[#allocation4 + $0x18] sm:$0xff] %vm406, %v2881
      %2890 = vst.msk [vmem:[#allocation4 + $0x20] sm:$0xff] %vm406, %v2882
      %2891 = vst.msk [vmem:[#allocation4 + $0x28] sm:$0xff] %vm406, %v2883
      %2892 = vst.msk [vmem:[#allocation4 + $0x30] sm:$0xff] %vm406, %v2884
      %2893 = vst.msk [vmem:[#allocation4 + $0x38] sm:$0xff] %vm406, %v2885
      %v2894 = vld [vmem:[%s2242] sm:$0xff]
      %v2895 = vld [vmem:[%s2242 + $0x10] sm:$0xff]
      %v2896 = vld [vmem:[%s2242 + $0x20] sm:$0xff]
      %v2897 = vld [vmem:[%s2242 + $0x30] sm:$0xff]
      %v2898 = vld [vmem:[%s2242 + $0x40] sm:$0xff]
      %v2899 = vld [vmem:[%s2242 + $0x50] sm:$0xff]
      %v2900 = vld [vmem:[%s2242 + $0x60] sm:$0xff]
      %v2901 = vld [vmem:[%s2242 + $0x70] sm:$0xff]
      %s2902 = scalar_lea.vmem %s4, 24
      %v2903 = vld [vmem:[%s2902] sm:$0xff]
      %v2905 = vsel %vm406, %v2894, 0
      %v2908 = vsel %vm406, %v2895, 0
      %v2911 = vsel %vm406, %v2896, 0
      %v2914 = vsel %vm406, %v2897, 0
      %v2917 = vsel %vm406, %v2898, 0
      %v2920 = vsel %vm406, %v2899, 0
      %v2923 = vsel %vm406, %v2900, 0
      %v2926 = vsel %vm406, %v2901, 0
      %2928 = vmatprep.subr.mxu0 0.0
      %2929 = vmatpush1.msra.mxu0 0.0
      %2930 = vmatprep.subr.mxu0 0.0
      %2931 = vmatpush1.msra.mxu0 0.0
      %2932 = vmatprep.subr.mxu0 0.0
      %2933 = vmatpush1.msra.mxu0 0.0
      %2934 = vmatprep.subr.mxu0 0.0
      %2935 = vmatpush1.msra.mxu0 0.0
      %2936 = vmatprep.subr.mxu0 0.0
      %2937 = vmatpush1.msra.mxu0 0.0
      %2938 = vmatprep.subr.mxu0 0.0
      %2939 = vmatpush1.msra.mxu0 0.0
      %2940 = vmatprep.subr.mxu0 0.0
      %2941 = vmatpush1.msra.mxu0 0.0
      %2942 = vmatprep.subr.mxu0 0.0
      %2943 = vmatpush1.msra.mxu0 0.0
      %2944 = vmatprep.subr.mxu0 0.0
      %2945 = vmatpush1.msra.mxu0 0.0
      %2946 = vmatprep.subr.mxu0 0.0
      %2947 = vmatpush1.msra.mxu0 0.0
      %2948 = vmatprep.subr.mxu0 0.0
      %2949 = vmatpush1.msra.mxu0 0.0
      %2950 = vmatprep.subr.mxu0 0.0
      %2951 = vmatpush1.msra.mxu0 0.0
      %2952 = vmatprep.subr.mxu0 0.0
      %2953 = vmatpush1.msra.mxu0 0.0
      %2954 = vmatprep.subr.mxu0 0.0
      %2955 = vmatpush1.msra.mxu0 0.0
      %2956 = vmatprep.subr.mxu0 0.0
      %2957 = vmatpush1.msra.mxu0 0.0
      %2958 = vmatprep.subr.mxu0 0.0
      %2959 = vmatpush1.msra.mxu0 %v2903
      %2960 = vmatprep.subr.mxu0 0.0
      %2961 = vmatpush2.msra.mxu0 0.0
      %2962 = vmatprep.subr.mxu0 0.0
      %2963 = vmatpush2.msra.mxu0 0.0
      %2964 = vmatprep.subr.mxu0 0.0
      %2965 = vmatpush2.msra.mxu0 0.0
      %2966 = vmatprep.subr.mxu0 0.0
      %2967 = vmatpush2.msra.mxu0 0.0
      %2968 = vmatprep.subr.mxu0 0.0
      %2969 = vmatpush2.msra.mxu0 0.0
      %2970 = vmatprep.subr.mxu0 0.0
      %2971 = vmatpush2.msra.mxu0 0.0
      %2972 = vmatprep.subr.mxu0 0.0
      %2973 = vmatpush2.msra.mxu0 0.0
      %2974 = vmatprep.subr.mxu0 0.0
      %2975 = vmatpush2.msra.mxu0 0.0
      %2976 = vmatprep.subr.mxu0 0.0
      %2977 = vmatpush2.msra.mxu0 0.0
      %2978 = vmatprep.subr.mxu0 0.0
      %2979 = vmatpush2.msra.mxu0 0.0
      %2980 = vmatprep.subr.mxu0 0.0
      %2981 = vmatpush2.msra.mxu0 0.0
      %2982 = vmatprep.subr.mxu0 0.0
      %2983 = vmatpush2.msra.mxu0 0.0
      %2984 = vmatprep.subr.mxu0 0.0
      %2985 = vmatpush2.msra.mxu0 0.0
      %2986 = vmatprep.subr.mxu0 0.0
      %2987 = vmatpush2.msra.mxu0 0.0
      %2988 = vmatprep.subr.mxu0 0.0
      %2989 = vmatpush2.msra.mxu0 0.0
      %2990 = vmatprep.subr.mxu0 0.0
      %2991 = vmatpush2.msra.mxu0 0.0
      %2992 = vmatprep.mubr.f32.mxu0 0.0
      %2993 = vmatmul.mubr.f32.gmra.mxu0 %v2905
      %v2994 = vpop.f32.mrf.mxu0
      %v2995 = vadd.f32 0.0, %v2994
      %v2996 = vpop.f32.mrf.mxu0
      %2997 = vmatprep.mubr.f32.mxu0 0.0
      %2998 = vmatmul.mubr.f32.gmra.mxu0 %v2908
      %v2999 = vpop.f32.mrf.mxu0
      %v3000 = vadd.f32 0.0, %v2999
      %v3001 = vpop.f32.mrf.mxu0
      %3002 = vmatprep.mubr.f32.mxu0 0.0
      %3003 = vmatmul.mubr.f32.gmra.mxu0 %v2911
      %v3004 = vpop.f32.mrf.mxu0
      %v3005 = vadd.f32 0.0, %v3004
      %v3006 = vpop.f32.mrf.mxu0
      %3007 = vmatprep.mubr.f32.mxu0 0.0
      %3008 = vmatmul.mubr.f32.gmra.mxu0 %v2914
      %v3009 = vpop.f32.mrf.mxu0
      %v3010 = vadd.f32 0.0, %v3009
      %v3011 = vpop.f32.mrf.mxu0
      %3012 = vmatprep.mubr.f32.mxu0 0.0
      %3013 = vmatmul.mubr.f32.gmra.mxu0 %v2917
      %v3014 = vpop.f32.mrf.mxu0
      %v3015 = vadd.f32 0.0, %v3014
      %v3016 = vpop.f32.mrf.mxu0
      %3017 = vmatprep.mubr.f32.mxu0 0.0
      %3018 = vmatmul.mubr.f32.gmra.mxu0 %v2920
      %v3019 = vpop.f32.mrf.mxu0
      %v3020 = vadd.f32 0.0, %v3019
      %v3021 = vpop.f32.mrf.mxu0
      %3022 = vmatprep.mubr.f32.mxu0 0.0
      %3023 = vmatmul.mubr.f32.gmra.mxu0 %v2923
      %v3024 = vpop.f32.mrf.mxu0
      %v3025 = vadd.f32 0.0, %v3024
      %v3026 = vpop.f32.mrf.mxu0
      %3027 = vmatprep.mubr.f32.mxu0 0.0
      %3028 = vmatmul.mubr.f32.gmra.mxu0 %v2926
      %v3029 = vpop.f32.mrf.mxu0
      %v3030 = vadd.f32 0.0, %v3029
      %v3031 = vpop.f32.mrf.mxu0
      %3032 = vdwg.mxu0
      %v3033 = vld [vmem:[#allocation4] sm:$0xff]
      %v3034 = vld [vmem:[#allocation4 + $0x8] sm:$0xff]
      %v3035 = vld [vmem:[#allocation4 + $0x10] sm:$0xff]
      %v3036 = vld [vmem:[#allocation4 + $0x18] sm:$0xff]
      %v3037 = vld [vmem:[#allocation4 + $0x20] sm:$0xff]
      %v3038 = vld [vmem:[#allocation4 + $0x28] sm:$0xff]
      %v3039 = vld [vmem:[#allocation4 + $0x30] sm:$0xff]
      %v3040 = vld [vmem:[#allocation4 + $0x38] sm:$0xff]
      %v3041 = vadd.f32 %v3033, %v2995
      %v3042 = vadd.f32 %v3034, %v3000
      %v3043 = vadd.f32 %v3035, %v3005
      %v3044 = vadd.f32 %v3036, %v3010
      %v3045 = vadd.f32 %v3037, %v3015
      %v3046 = vadd.f32 %v3038, %v3020
      %v3047 = vadd.f32 %v3039, %v3025
      %v3048 = vadd.f32 %v3040, %v3030
      %3049 = vst.msk [vmem:[#allocation4] sm:$0xff] %vm406, %v3041
      %3050 = vst.msk [vmem:[#allocation4 + $0x8] sm:$0xff] %vm406, %v3042
      %3051 = vst.msk [vmem:[#allocation4 + $0x10] sm:$0xff] %vm406, %v3043
      %3052 = vst.msk [vmem:[#allocation4 + $0x18] sm:$0xff] %vm406, %v3044
      %3053 = vst.msk [vmem:[#allocation4 + $0x20] sm:$0xff] %vm406, %v3045
      %3054 = vst.msk [vmem:[#allocation4 + $0x28] sm:$0xff] %vm406, %v3046
      %3055 = vst.msk [vmem:[#allocation4 + $0x30] sm:$0xff] %vm406, %v3047
      %3056 = vst.msk [vmem:[#allocation4 + $0x38] sm:$0xff] %vm406, %v3048
      %v3057 = vld [vmem:[%s2242 + $0x1] sm:$0xff]
      %v3058 = vld [vmem:[%s2242 + $0x11] sm:$0xff]
      %v3059 = vld [vmem:[%s2242 + $0x21] sm:$0xff]
      %v3060 = vld [vmem:[%s2242 + $0x31] sm:$0xff]
      %v3061 = vld [vmem:[%s2242 + $0x41] sm:$0xff]
      %v3062 = vld [vmem:[%s2242 + $0x51] sm:$0xff]
      %v3063 = vld [vmem:[%s2242 + $0x61] sm:$0xff]
      %v3064 = vld [vmem:[%s2242 + $0x71] sm:$0xff]
      %s3065 = scalar_lea.vmem %s4, 32
      %v3066 = vld [vmem:[%s3065] sm:$0xff]
      %v3068 = vsel %vm406, %v3057, 0
      %v3071 = vsel %vm406, %v3058, 0
      %v3074 = vsel %vm406, %v3059, 0
      %v3077 = vsel %vm406, %v3060, 0
      %v3080 = vsel %vm406, %v3061, 0
      %v3083 = vsel %vm406, %v3062, 0
      %v3086 = vsel %vm406, %v3063, 0
      %v3089 = vsel %vm406, %v3064, 0
      %3091 = vmatprep.subr.mxu0 0.0
      %3092 = vmatpush1.msra.mxu0 0.0
      %3093 = vmatprep.subr.mxu0 0.0
      %3094 = vmatpush1.msra.mxu0 0.0
      %3095 = vmatprep.subr.mxu0 0.0
      %3096 = vmatpush1.msra.mxu0 0.0
      %3097 = vmatprep.subr.mxu0 0.0
      %3098 = vmatpush1.msra.mxu0 0.0
      %3099 = vmatprep.subr.mxu0 0.0
      %3100 = vmatpush1.msra.mxu0 0.0
      %3101 = vmatprep.subr.mxu0 0.0
      %3102 = vmatpush1.msra.mxu0 0.0
      %3103 = vmatprep.subr.mxu0 0.0
      %3104 = vmatpush1.msra.mxu0 0.0
      %3105 = vmatprep.subr.mxu0 0.0
      %3106 = vmatpush1.msra.mxu0 0.0
      %3107 = vmatprep.subr.mxu0 0.0
      %3108 = vmatpush1.msra.mxu0 0.0
      %3109 = vmatprep.subr.mxu0 0.0
      %3110 = vmatpush1.msra.mxu0 0.0
      %3111 = vmatprep.subr.mxu0 0.0
      %3112 = vmatpush1.msra.mxu0 0.0
      %3113 = vmatprep.subr.mxu0 0.0
      %3114 = vmatpush1.msra.mxu0 0.0
      %3115 = vmatprep.subr.mxu0 0.0
      %3116 = vmatpush1.msra.mxu0 0.0
      %3117 = vmatprep.subr.mxu0 0.0
      %3118 = vmatpush1.msra.mxu0 0.0
      %3119 = vmatprep.subr.mxu0 0.0
      %3120 = vmatpush1.msra.mxu0 0.0
      %3121 = vmatprep.subr.mxu0 0.0
      %3122 = vmatpush1.msra.mxu0 %v3066
      %3123 = vmatprep.subr.mxu0 0.0
      %3124 = vmatpush2.msra.mxu0 0.0
      %3125 = vmatprep.subr.mxu0 0.0
      %3126 = vmatpush2.msra.mxu0 0.0
      %3127 = vmatprep.subr.mxu0 0.0
      %3128 = vmatpush2.msra.mxu0 0.0
      %3129 = vmatprep.subr.mxu0 0.0
      %3130 = vmatpush2.msra.mxu0 0.0
      %3131 = vmatprep.subr.mxu0 0.0
      %3132 = vmatpush2.msra.mxu0 0.0
      %3133 = vmatprep.subr.mxu0 0.0
      %3134 = vmatpush2.msra.mxu0 0.0
      %3135 = vmatprep.subr.mxu0 0.0
      %3136 = vmatpush2.msra.mxu0 0.0
      %3137 = vmatprep.subr.mxu0 0.0
      %3138 = vmatpush2.msra.mxu0 0.0
      %3139 = vmatprep.subr.mxu0 0.0
      %3140 = vmatpush2.msra.mxu0 0.0
      %3141 = vmatprep.subr.mxu0 0.0
      %3142 = vmatpush2.msra.mxu0 0.0
      %3143 = vmatprep.subr.mxu0 0.0
      %3144 = vmatpush2.msra.mxu0 0.0
      %3145 = vmatprep.subr.mxu0 0.0
      %3146 = vmatpush2.msra.mxu0 0.0
      %3147 = vmatprep.subr.mxu0 0.0
      %3148 = vmatpush2.msra.mxu0 0.0
      %3149 = vmatprep.subr.mxu0 0.0
      %3150 = vmatpush2.msra.mxu0 0.0
      %3151 = vmatprep.subr.mxu0 0.0
      %3152 = vmatpush2.msra.mxu0 0.0
      %3153 = vmatprep.subr.mxu0 0.0
      %3154 = vmatpush2.msra.mxu0 0.0
      %3155 = vmatprep.mubr.f32.mxu0 0.0
      %3156 = vmatmul.mubr.f32.gmra.mxu0 %v3068
      %v3157 = vpop.f32.mrf.mxu0
      %v3158 = vadd.f32 0.0, %v3157
      %v3159 = vpop.f32.mrf.mxu0
      %3160 = vmatprep.mubr.f32.mxu0 0.0
      %3161 = vmatmul.mubr.f32.gmra.mxu0 %v3071
      %v3162 = vpop.f32.mrf.mxu0
      %v3163 = vadd.f32 0.0, %v3162
      %v3164 = vpop.f32.mrf.mxu0
      %3165 = vmatprep.mubr.f32.mxu0 0.0
      %3166 = vmatmul.mubr.f32.gmra.mxu0 %v3074
      %v3167 = vpop.f32.mrf.mxu0
      %v3168 = vadd.f32 0.0, %v3167
      %v3169 = vpop.f32.mrf.mxu0
      %3170 = vmatprep.mubr.f32.mxu0 0.0
      %3171 = vmatmul.mubr.f32.gmra.mxu0 %v3077
      %v3172 = vpop.f32.mrf.mxu0
      %v3173 = vadd.f32 0.0, %v3172
      %v3174 = vpop.f32.mrf.mxu0
      %3175 = vmatprep.mubr.f32.mxu0 0.0
      %3176 = vmatmul.mubr.f32.gmra.mxu0 %v3080
      %v3177 = vpop.f32.mrf.mxu0
      %v3178 = vadd.f32 0.0, %v3177
      %v3179 = vpop.f32.mrf.mxu0
      %3180 = vmatprep.mubr.f32.mxu0 0.0
      %3181 = vmatmul.mubr.f32.gmra.mxu0 %v3083
      %v3182 = vpop.f32.mrf.mxu0
      %v3183 = vadd.f32 0.0, %v3182
      %v3184 = vpop.f32.mrf.mxu0
      %3185 = vmatprep.mubr.f32.mxu0 0.0
      %3186 = vmatmul.mubr.f32.gmra.mxu0 %v3086
      %v3187 = vpop.f32.mrf.mxu0
      %v3188 = vadd.f32 0.0, %v3187
      %v3189 = vpop.f32.mrf.mxu0
      %3190 = vmatprep.mubr.f32.mxu0 0.0
      %3191 = vmatmul.mubr.f32.gmra.mxu0 %v3089
      %v3192 = vpop.f32.mrf.mxu0
      %v3193 = vadd.f32 0.0, %v3192
      %v3194 = vpop.f32.mrf.mxu0
      %3195 = vdwg.mxu0
      %v3196 = vld [vmem:[#allocation4] sm:$0xff]
      %v3197 = vld [vmem:[#allocation4 + $0x8] sm:$0xff]
      %v3198 = vld [vmem:[#allocation4 + $0x10] sm:$0xff]
      %v3199 = vld [vmem:[#allocation4 + $0x18] sm:$0xff]
      %v3200 = vld [vmem:[#allocation4 + $0x20] sm:$0xff]
      %v3201 = vld [vmem:[#allocation4 + $0x28] sm:$0xff]
      %v3202 = vld [vmem:[#allocation4 + $0x30] sm:$0xff]
      %v3203 = vld [vmem:[#allocation4 + $0x38] sm:$0xff]
      %v3204 = vadd.f32 %v3196, %v3158
      %v3205 = vadd.f32 %v3197, %v3163
      %v3206 = vadd.f32 %v3198, %v3168
      %v3207 = vadd.f32 %v3199, %v3173
      %v3208 = vadd.f32 %v3200, %v3178
      %v3209 = vadd.f32 %v3201, %v3183
      %v3210 = vadd.f32 %v3202, %v3188
      %v3211 = vadd.f32 %v3203, %v3193
      %3212 = vst.msk [vmem:[#allocation4] sm:$0xff] %vm406, %v3204
      %3213 = vst.msk [vmem:[#allocation4 + $0x8] sm:$0xff] %vm406, %v3205
      %3214 = vst.msk [vmem:[#allocation4 + $0x10] sm:$0xff] %vm406, %v3206
      %3215 = vst.msk [vmem:[#allocation4 + $0x18] sm:$0xff] %vm406, %v3207
      %3216 = vst.msk [vmem:[#allocation4 + $0x20] sm:$0xff] %vm406, %v3208
      %3217 = vst.msk [vmem:[#allocation4 + $0x28] sm:$0xff] %vm406, %v3209
      %3218 = vst.msk [vmem:[#allocation4 + $0x30] sm:$0xff] %vm406, %v3210
      %3219 = vst.msk [vmem:[#allocation4 + $0x38] sm:$0xff] %vm406, %v3211
      %v3220 = vld [vmem:[%s2242 + $0x2] sm:$0xff]
      %v3221 = vld [vmem:[%s2242 + $0x12] sm:$0xff]
      %v3222 = vld [vmem:[%s2242 + $0x22] sm:$0xff]
      %v3223 = vld [vmem:[%s2242 + $0x32] sm:$0xff]
      %v3224 = vld [vmem:[%s2242 + $0x42] sm:$0xff]
      %v3225 = vld [vmem:[%s2242 + $0x52] sm:$0xff]
      %v3226 = vld [vmem:[%s2242 + $0x62] sm:$0xff]
      %v3227 = vld [vmem:[%s2242 + $0x72] sm:$0xff]
      %s3228 = scalar_lea.vmem %s4, 40
      %v3229 = vld [vmem:[%s3228] sm:$0xff]
      %v3231 = vsel %vm406, %v3220, 0
      %v3234 = vsel %vm406, %v3221, 0
      %v3237 = vsel %vm406, %v3222, 0
      %v3240 = vsel %vm406, %v3223, 0
      %v3243 = vsel %vm406, %v3224, 0
      %v3246 = vsel %vm406, %v3225, 0
      %v3249 = vsel %vm406, %v3226, 0
      %v3252 = vsel %vm406, %v3227, 0
      %3254 = vmatprep.subr.mxu0 0.0
      %3255 = vmatpush1.msra.mxu0 0.0
      %3256 = vmatprep.subr.mxu0 0.0
      %3257 = vmatpush1.msra.mxu0 0.0
      %3258 = vmatprep.subr.mxu0 0.0
      %3259 = vmatpush1.msra.mxu0 0.0
      %3260 = vmatprep.subr.mxu0 0.0
      %3261 = vmatpush1.msra.mxu0 0.0
      %3262 = vmatprep.subr.mxu0 0.0
      %3263 = vmatpush1.msra.mxu0 0.0
      %3264 = vmatprep.subr.mxu0 0.0
      %3265 = vmatpush1.msra.mxu0 0.0
      %3266 = vmatprep.subr.mxu0 0.0
      %3267 = vmatpush1.msra.mxu0 0.0
      %3268 = vmatprep.subr.mxu0 0.0
      %3269 = vmatpush1.msra.mxu0 0.0
      %3270 = vmatprep.subr.mxu0 0.0
      %3271 = vmatpush1.msra.mxu0 0.0
      %3272 = vmatprep.subr.mxu0 0.0
      %3273 = vmatpush1.msra.mxu0 0.0
      %3274 = vmatprep.subr.mxu0 0.0
      %3275 = vmatpush1.msra.mxu0 0.0
      %3276 = vmatprep.subr.mxu0 0.0
      %3277 = vmatpush1.msra.mxu0 0.0
      %3278 = vmatprep.subr.mxu0 0.0
      %3279 = vmatpush1.msra.mxu0 0.0
      %3280 = vmatprep.subr.mxu0 0.0
      %3281 = vmatpush1.msra.mxu0 0.0
      %3282 = vmatprep.subr.mxu0 0.0
      %3283 = vmatpush1.msra.mxu0 0.0
      %3284 = vmatprep.subr.mxu0 0.0
      %3285 = vmatpush1.msra.mxu0 %v3229
      %3286 = vmatprep.subr.mxu0 0.0
      %3287 = vmatpush2.msra.mxu0 0.0
      %3288 = vmatprep.subr.mxu0 0.0
      %3289 = vmatpush2.msra.mxu0 0.0
      %3290 = vmatprep.subr.mxu0 0.0
      %3291 = vmatpush2.msra.mxu0 0.0
      %3292 = vmatprep.subr.mxu0 0.0
      %3293 = vmatpush2.msra.mxu0 0.0
      %3294 = vmatprep.subr.mxu0 0.0
      %3295 = vmatpush2.msra.mxu0 0.0
      %3296 = vmatprep.subr.mxu0 0.0
      %3297 = vmatpush2.msra.mxu0 0.0
      %3298 = vmatprep.subr.mxu0 0.0
      %3299 = vmatpush2.msra.mxu0 0.0
      %3300 = vmatprep.subr.mxu0 0.0
      %3301 = vmatpush2.msra.mxu0 0.0
      %3302 = vmatprep.subr.mxu0 0.0
      %3303 = vmatpush2.msra.mxu0 0.0
      %3304 = vmatprep.subr.mxu0 0.0
      %3305 = vmatpush2.msra.mxu0 0.0
      %3306 = vmatprep.subr.mxu0 0.0
      %3307 = vmatpush2.msra.mxu0 0.0
      %3308 = vmatprep.subr.mxu0 0.0
      %3309 = vmatpush2.msra.mxu0 0.0
      %3310 = vmatprep.subr.mxu0 0.0
      %3311 = vmatpush2.msra.mxu0 0.0
      %3312 = vmatprep.subr.mxu0 0.0
      %3313 = vmatpush2.msra.mxu0 0.0
      %3314 = vmatprep.subr.mxu0 0.0
      %3315 = vmatpush2.msra.mxu0 0.0
      %3316 = vmatprep.subr.mxu0 0.0
      %3317 = vmatpush2.msra.mxu0 0.0
      %3318 = vmatprep.mubr.f32.mxu0 0.0
      %3319 = vmatmul.mubr.f32.gmra.mxu0 %v3231
      %v3320 = vpop.f32.mrf.mxu0
      %v3321 = vadd.f32 0.0, %v3320
      %v3322 = vpop.f32.mrf.mxu0
      %3323 = vmatprep.mubr.f32.mxu0 0.0
      %3324 = vmatmul.mubr.f32.gmra.mxu0 %v3234
      %v3325 = vpop.f32.mrf.mxu0
      %v3326 = vadd.f32 0.0, %v3325
      %v3327 = vpop.f32.mrf.mxu0
      %3328 = vmatprep.mubr.f32.mxu0 0.0
      %3329 = vmatmul.mubr.f32.gmra.mxu0 %v3237
      %v3330 = vpop.f32.mrf.mxu0
      %v3331 = vadd.f32 0.0, %v3330
      %v3332 = vpop.f32.mrf.mxu0
      %3333 = vmatprep.mubr.f32.mxu0 0.0
      %3334 = vmatmul.mubr.f32.gmra.mxu0 %v3240
      %v3335 = vpop.f32.mrf.mxu0
      %v3336 = vadd.f32 0.0, %v3335
      %v3337 = vpop.f32.mrf.mxu0
      %3338 = vmatprep.mubr.f32.mxu0 0.0
      %3339 = vmatmul.mubr.f32.gmra.mxu0 %v3243
      %v3340 = vpop.f32.mrf.mxu0
      %v3341 = vadd.f32 0.0, %v3340
      %v3342 = vpop.f32.mrf.mxu0
      %3343 = vmatprep.mubr.f32.mxu0 0.0
      %3344 = vmatmul.mubr.f32.gmra.mxu0 %v3246
      %v3345 = vpop.f32.mrf.mxu0
      %v3346 = vadd.f32 0.0, %v3345
      %v3347 = vpop.f32.mrf.mxu0
      %3348 = vmatprep.mubr.f32.mxu0 0.0
      %3349 = vmatmul.mubr.f32.gmra.mxu0 %v3249
      %v3350 = vpop.f32.mrf.mxu0
      %v3351 = vadd.f32 0.0, %v3350
      %v3352 = vpop.f32.mrf.mxu0
      %3353 = vmatprep.mubr.f32.mxu0 0.0
      %3354 = vmatmul.mubr.f32.gmra.mxu0 %v3252
      %v3355 = vpop.f32.mrf.mxu0
      %v3356 = vadd.f32 0.0, %v3355
      %v3357 = vpop.f32.mrf.mxu0
      %3358 = vdwg.mxu0
      %v3359 = vld [vmem:[#allocation4] sm:$0xff]
      %v3360 = vld [vmem:[#allocation4 + $0x8] sm:$0xff]
      %v3361 = vld [vmem:[#allocation4 + $0x10] sm:$0xff]
      %v3362 = vld [vmem:[#allocation4 + $0x18] sm:$0xff]
      %v3363 = vld [vmem:[#allocation4 + $0x20] sm:$0xff]
      %v3364 = vld [vmem:[#allocation4 + $0x28] sm:$0xff]
      %v3365 = vld [vmem:[#allocation4 + $0x30] sm:$0xff]
      %v3366 = vld [vmem:[#allocation4 + $0x38] sm:$0xff]
      %v3367 = vadd.f32 %v3359, %v3321
      %v3368 = vadd.f32 %v3360, %v3326
      %v3369 = vadd.f32 %v3361, %v3331
      %v3370 = vadd.f32 %v3362, %v3336
      %v3371 = vadd.f32 %v3363, %v3341
      %v3372 = vadd.f32 %v3364, %v3346
      %v3373 = vadd.f32 %v3365, %v3351
      %v3374 = vadd.f32 %v3366, %v3356
      %3375 = vst.msk [vmem:[#allocation4] sm:$0xff] %vm406, %v3367
      %3376 = vst.msk [vmem:[#allocation4 + $0x8] sm:$0xff] %vm406, %v3368
      %3377 = vst.msk [vmem:[#allocation4 + $0x10] sm:$0xff] %vm406, %v3369
      %3378 = vst.msk [vmem:[#allocation4 + $0x18] sm:$0xff] %vm406, %v3370
      %3379 = vst.msk [vmem:[#allocation4 + $0x20] sm:$0xff] %vm406, %v3371
      %3380 = vst.msk [vmem:[#allocation4 + $0x28] sm:$0xff] %vm406, %v3372
      %3381 = vst.msk [vmem:[#allocation4 + $0x30] sm:$0xff] %vm406, %v3373
      %3382 = vst.msk [vmem:[#allocation4 + $0x38] sm:$0xff] %vm406, %v3374
      %s3383 = scalar_lea.vmem [#allocation3], 32
      %v3384 = vld [vmem:[%s3383] sm:$0xff]
      %v3385 = vld [vmem:[%s3383 + $0x10] sm:$0xff]
      %v3386 = vld [vmem:[%s3383 + $0x20] sm:$0xff]
      %v3387 = vld [vmem:[%s3383 + $0x30] sm:$0xff]
      %v3388 = vld [vmem:[%s3383 + $0x40] sm:$0xff]
      %v3389 = vld [vmem:[%s3383 + $0x50] sm:$0xff]
      %v3390 = vld [vmem:[%s3383 + $0x60] sm:$0xff]
      %v3391 = vld [vmem:[%s3383 + $0x70] sm:$0xff]
      %s3392 = scalar_lea.vmem %s4, 48
      %v3393 = vld [vmem:[%s3392] sm:$0xff]
      %v3395 = vsel %vm406, %v3384, 0
      %v3398 = vsel %vm406, %v3385, 0
      %v3401 = vsel %vm406, %v3386, 0
      %v3404 = vsel %vm406, %v3387, 0
      %v3407 = vsel %vm406, %v3388, 0
      %v3410 = vsel %vm406, %v3389, 0
      %v3413 = vsel %vm406, %v3390, 0
      %v3416 = vsel %vm406, %v3391, 0
      %3418 = vmatprep.subr.mxu0 0.0
      %3419 = vmatpush1.msra.mxu0 0.0
      %3420 = vmatprep.subr.mxu0 0.0
      %3421 = vmatpush1.msra.mxu0 0.0
      %3422 = vmatprep.subr.mxu0 0.0
      %3423 = vmatpush1.msra.mxu0 0.0
      %3424 = vmatprep.subr.mxu0 0.0
      %3425 = vmatpush1.msra.mxu0 0.0
      %3426 = vmatprep.subr.mxu0 0.0
      %3427 = vmatpush1.msra.mxu0 0.0
      %3428 = vmatprep.subr.mxu0 0.0
      %3429 = vmatpush1.msra.mxu0 0.0
      %3430 = vmatprep.subr.mxu0 0.0
      %3431 = vmatpush1.msra.mxu0 0.0
      %3432 = vmatprep.subr.mxu0 0.0
      %3433 = vmatpush1.msra.mxu0 0.0
      %3434 = vmatprep.subr.mxu0 0.0
      %3435 = vmatpush1.msra.mxu0 0.0
      %3436 = vmatprep.subr.mxu0 0.0
      %3437 = vmatpush1.msra.mxu0 0.0
      %3438 = vmatprep.subr.mxu0 0.0
      %3439 = vmatpush1.msra.mxu0 0.0
      %3440 = vmatprep.subr.mxu0 0.0
      %3441 = vmatpush1.msra.mxu0 0.0
      %3442 = vmatprep.subr.mxu0 0.0
      %3443 = vmatpush1.msra.mxu0 0.0
      %3444 = vmatprep.subr.mxu0 0.0
      %3445 = vmatpush1.msra.mxu0 0.0
      %3446 = vmatprep.subr.mxu0 0.0
      %3447 = vmatpush1.msra.mxu0 0.0
      %3448 = vmatprep.subr.mxu0 0.0
      %3449 = vmatpush1.msra.mxu0 %v3393
      %3450 = vmatprep.subr.mxu0 0.0
      %3451 = vmatpush2.msra.mxu0 0.0
      %3452 = vmatprep.subr.mxu0 0.0
      %3453 = vmatpush2.msra.mxu0 0.0
      %3454 = vmatprep.subr.mxu0 0.0
      %3455 = vmatpush2.msra.mxu0 0.0
      %3456 = vmatprep.subr.mxu0 0.0
      %3457 = vmatpush2.msra.mxu0 0.0
      %3458 = vmatprep.subr.mxu0 0.0
      %3459 = vmatpush2.msra.mxu0 0.0
      %3460 = vmatprep.subr.mxu0 0.0
      %3461 = vmatpush2.msra.mxu0 0.0
      %3462 = vmatprep.subr.mxu0 0.0
      %3463 = vmatpush2.msra.mxu0 0.0
      %3464 = vmatprep.subr.mxu0 0.0
      %3465 = vmatpush2.msra.mxu0 0.0
      %3466 = vmatprep.subr.mxu0 0.0
      %3467 = vmatpush2.msra.mxu0 0.0
      %3468 = vmatprep.subr.mxu0 0.0
      %3469 = vmatpush2.msra.mxu0 0.0
      %3470 = vmatprep.subr.mxu0 0.0
      %3471 = vmatpush2.msra.mxu0 0.0
      %3472 = vmatprep.subr.mxu0 0.0
      %3473 = vmatpush2.msra.mxu0 0.0
      %3474 = vmatprep.subr.mxu0 0.0
      %3475 = vmatpush2.msra.mxu0 0.0
      %3476 = vmatprep.subr.mxu0 0.0
      %3477 = vmatpush2.msra.mxu0 0.0
      %3478 = vmatprep.subr.mxu0 0.0
      %3479 = vmatpush2.msra.mxu0 0.0
      %3480 = vmatprep.subr.mxu0 0.0
      %3481 = vmatpush2.msra.mxu0 0.0
      %3482 = vmatprep.mubr.f32.mxu0 0.0
      %3483 = vmatmul.mubr.f32.gmra.mxu0 %v3395
      %v3484 = vpop.f32.mrf.mxu0
      %v3485 = vadd.f32 0.0, %v3484
      %v3486 = vpop.f32.mrf.mxu0
      %3487 = vmatprep.mubr.f32.mxu0 0.0
      %3488 = vmatmul.mubr.f32.gmra.mxu0 %v3398
      %v3489 = vpop.f32.mrf.mxu0
      %v3490 = vadd.f32 0.0, %v3489
      %v3491 = vpop.f32.mrf.mxu0
      %3492 = vmatprep.mubr.f32.mxu0 0.0
      %3493 = vmatmul.mubr.f32.gmra.mxu0 %v3401
      %v3494 = vpop.f32.mrf.mxu0
      %v3495 = vadd.f32 0.0, %v3494
      %v3496 = vpop.f32.mrf.mxu0
      %3497 = vmatprep.mubr.f32.mxu0 0.0
      %3498 = vmatmul.mubr.f32.gmra.mxu0 %v3404
      %v3499 = vpop.f32.mrf.mxu0
      %v3500 = vadd.f32 0.0, %v3499
      %v3501 = vpop.f32.mrf.mxu0
      %3502 = vmatprep.mubr.f32.mxu0 0.0
      %3503 = vmatmul.mubr.f32.gmra.mxu0 %v3407
      %v3504 = vpop.f32.mrf.mxu0
      %v3505 = vadd.f32 0.0, %v3504
      %v3506 = vpop.f32.mrf.mxu0
      %3507 = vmatprep.mubr.f32.mxu0 0.0
      %3508 = vmatmul.mubr.f32.gmra.mxu0 %v3410
      %v3509 = vpop.f32.mrf.mxu0
      %v3510 = vadd.f32 0.0, %v3509
      %v3511 = vpop.f32.mrf.mxu0
      %3512 = vmatprep.mubr.f32.mxu0 0.0
      %3513 = vmatmul.mubr.f32.gmra.mxu0 %v3413
      %v3514 = vpop.f32.mrf.mxu0
      %v3515 = vadd.f32 0.0, %v3514
      %v3516 = vpop.f32.mrf.mxu0
      %3517 = vmatprep.mubr.f32.mxu0 0.0
      %3518 = vmatmul.mubr.f32.gmra.mxu0 %v3416
      %v3519 = vpop.f32.mrf.mxu0
      %v3520 = vadd.f32 0.0, %v3519
      %v3521 = vpop.f32.mrf.mxu0
      %3522 = vdwg.mxu0
      %v3523 = vld [vmem:[#allocation4] sm:$0xff]
      %v3524 = vld [vmem:[#allocation4 + $0x8] sm:$0xff]
      %v3525 = vld [vmem:[#allocation4 + $0x10] sm:$0xff]
      %v3526 = vld [vmem:[#allocation4 + $0x18] sm:$0xff]
      %v3527 = vld [vmem:[#allocation4 + $0x20] sm:$0xff]
      %v3528 = vld [vmem:[#allocation4 + $0x28] sm:$0xff]
      %v3529 = vld [vmem:[#allocation4 + $0x30] sm:$0xff]
      %v3530 = vld [vmem:[#allocation4 + $0x38] sm:$0xff]
      %v3531 = vadd.f32 %v3523, %v3485
      %v3532 = vadd.f32 %v3524, %v3490
      %v3533 = vadd.f32 %v3525, %v3495
      %v3534 = vadd.f32 %v3526, %v3500
      %v3535 = vadd.f32 %v3527, %v3505
      %v3536 = vadd.f32 %v3528, %v3510
      %v3537 = vadd.f32 %v3529, %v3515
      %v3538 = vadd.f32 %v3530, %v3520
      %3539 = vst.msk [vmem:[#allocation4] sm:$0xff] %vm406, %v3531
      %3540 = vst.msk [vmem:[#allocation4 + $0x8] sm:$0xff] %vm406, %v3532
      %3541 = vst.msk [vmem:[#allocation4 + $0x10] sm:$0xff] %vm406, %v3533
      %3542 = vst.msk [vmem:[#allocation4 + $0x18] sm:$0xff] %vm406, %v3534
      %3543 = vst.msk [vmem:[#allocation4 + $0x20] sm:$0xff] %vm406, %v3535
      %3544 = vst.msk [vmem:[#allocation4 + $0x28] sm:$0xff] %vm406, %v3536
      %3545 = vst.msk [vmem:[#allocation4 + $0x30] sm:$0xff] %vm406, %v3537
      %3546 = vst.msk [vmem:[#allocation4 + $0x38] sm:$0xff] %vm406, %v3538
      %v3547 = vld [vmem:[%s3383 + $0x1] sm:$0xff]
      %v3548 = vld [vmem:[%s3383 + $0x11] sm:$0xff]
      %v3549 = vld [vmem:[%s3383 + $0x21] sm:$0xff]
      %v3550 = vld [vmem:[%s3383 + $0x31] sm:$0xff]
      %v3551 = vld [vmem:[%s3383 + $0x41] sm:$0xff]
      %v3552 = vld [vmem:[%s3383 + $0x51] sm:$0xff]
      %v3553 = vld [vmem:[%s3383 + $0x61] sm:$0xff]
      %v3554 = vld [vmem:[%s3383 + $0x71] sm:$0xff]
      %s3555 = scalar_lea.vmem %s4, 56
      %v3556 = vld [vmem:[%s3555] sm:$0xff]
      %v3558 = vsel %vm406, %v3547, 0
      %v3561 = vsel %vm406, %v3548, 0
      %v3564 = vsel %vm406, %v3549, 0
      %v3567 = vsel %vm406, %v3550, 0
      %v3570 = vsel %vm406, %v3551, 0
      %v3573 = vsel %vm406, %v3552, 0
      %v3576 = vsel %vm406, %v3553, 0
      %v3579 = vsel %vm406, %v3554, 0
      %3581 = vmatprep.subr.mxu0 0.0
      %3582 = vmatpush1.msra.mxu0 0.0
      %3583 = vmatprep.subr.mxu0 0.0
      %3584 = vmatpush1.msra.mxu0 0.0
      %3585 = vmatprep.subr.mxu0 0.0
      %3586 = vmatpush1.msra.mxu0 0.0
      %3587 = vmatprep.subr.mxu0 0.0
      %3588 = vmatpush1.msra.mxu0 0.0
      %3589 = vmatprep.subr.mxu0 0.0
      %3590 = vmatpush1.msra.mxu0 0.0
      %3591 = vmatprep.subr.mxu0 0.0
      %3592 = vmatpush1.msra.mxu0 0.0
      %3593 = vmatprep.subr.mxu0 0.0
      %3594 = vmatpush1.msra.mxu0 0.0
      %3595 = vmatprep.subr.mxu0 0.0
      %3596 = vmatpush1.msra.mxu0 0.0
      %3597 = vmatprep.subr.mxu0 0.0
      %3598 = vmatpush1.msra.mxu0 0.0
      %3599 = vmatprep.subr.mxu0 0.0
      %3600 = vmatpush1.msra.mxu0 0.0
      %3601 = vmatprep.subr.mxu0 0.0
      %3602 = vmatpush1.msra.mxu0 0.0
      %3603 = vmatprep.subr.mxu0 0.0
      %3604 = vmatpush1.msra.mxu0 0.0
      %3605 = vmatprep.subr.mxu0 0.0
      %3606 = vmatpush1.msra.mxu0 0.0
      %3607 = vmatprep.subr.mxu0 0.0
      %3608 = vmatpush1.msra.mxu0 0.0
      %3609 = vmatprep.subr.mxu0 0.0
      %3610 = vmatpush1.msra.mxu0 0.0
      %3611 = vmatprep.subr.mxu0 0.0
      %3612 = vmatpush1.msra.mxu0 %v3556
      %3613 = vmatprep.subr.mxu0 0.0
      %3614 = vmatpush2.msra.mxu0 0.0
      %3615 = vmatprep.subr.mxu0 0.0
      %3616 = vmatpush2.msra.mxu0 0.0
      %3617 = vmatprep.subr.mxu0 0.0
      %3618 = vmatpush2.msra.mxu0 0.0
      %3619 = vmatprep.subr.mxu0 0.0
      %3620 = vmatpush2.msra.mxu0 0.0
      %3621 = vmatprep.subr.mxu0 0.0
      %3622 = vmatpush2.msra.mxu0 0.0
      %3623 = vmatprep.subr.mxu0 0.0
      %3624 = vmatpush2.msra.mxu0 0.0
      %3625 = vmatprep.subr.mxu0 0.0
      %3626 = vmatpush2.msra.mxu0 0.0
      %3627 = vmatprep.subr.mxu0 0.0
      %3628 = vmatpush2.msra.mxu0 0.0
      %3629 = vmatprep.subr.mxu0 0.0
      %3630 = vmatpush2.msra.mxu0 0.0
      %3631 = vmatprep.subr.mxu0 0.0
      %3632 = vmatpush2.msra.mxu0 0.0
      %3633 = vmatprep.subr.mxu0 0.0
      %3634 = vmatpush2.msra.mxu0 0.0
      %3635 = vmatprep.subr.mxu0 0.0
      %3636 = vmatpush2.msra.mxu0 0.0
      %3637 = vmatprep.subr.mxu0 0.0
      %3638 = vmatpush2.msra.mxu0 0.0
      %3639 = vmatprep.subr.mxu0 0.0
      %3640 = vmatpush2.msra.mxu0 0.0
      %3641 = vmatprep.subr.mxu0 0.0
      %3642 = vmatpush2.msra.mxu0 0.0
      %3643 = vmatprep.subr.mxu0 0.0
      %3644 = vmatpush2.msra.mxu0 0.0
      %3645 = vmatprep.mubr.f32.mxu0 0.0
      %3646 = vmatmul.mubr.f32.gmra.mxu0 %v3558
      %v3647 = vpop.f32.mrf.mxu0
      %v3648 = vadd.f32 0.0, %v3647
      %v3649 = vpop.f32.mrf.mxu0
      %3650 = vmatprep.mubr.f32.mxu0 0.0
      %3651 = vmatmul.mubr.f32.gmra.mxu0 %v3561
      %v3652 = vpop.f32.mrf.mxu0
      %v3653 = vadd.f32 0.0, %v3652
      %v3654 = vpop.f32.mrf.mxu0
      %3655 = vmatprep.mubr.f32.mxu0 0.0
      %3656 = vmatmul.mubr.f32.gmra.mxu0 %v3564
      %v3657 = vpop.f32.mrf.mxu0
      %v3658 = vadd.f32 0.0, %v3657
      %v3659 = vpop.f32.mrf.mxu0
      %3660 = vmatprep.mubr.f32.mxu0 0.0
      %3661 = vmatmul.mubr.f32.gmra.mxu0 %v3567
      %v3662 = vpop.f32.mrf.mxu0
      %v3663 = vadd.f32 0.0, %v3662
      %v3664 = vpop.f32.mrf.mxu0
      %3665 = vmatprep.mubr.f32.mxu0 0.0
      %3666 = vmatmul.mubr.f32.gmra.mxu0 %v3570
      %v3667 = vpop.f32.mrf.mxu0
      %v3668 = vadd.f32 0.0, %v3667
      %v3669 = vpop.f32.mrf.mxu0
      %3670 = vmatprep.mubr.f32.mxu0 0.0
      %3671 = vmatmul.mubr.f32.gmra.mxu0 %v3573
      %v3672 = vpop.f32.mrf.mxu0
      %v3673 = vadd.f32 0.0, %v3672
      %v3674 = vpop.f32.mrf.mxu0
      %3675 = vmatprep.mubr.f32.mxu0 0.0
      %3676 = vmatmul.mubr.f32.gmra.mxu0 %v3576
      %v3677 = vpop.f32.mrf.mxu0
      %v3678 = vadd.f32 0.0, %v3677
      %v3679 = vpop.f32.mrf.mxu0
      %3680 = vmatprep.mubr.f32.mxu0 0.0
      %3681 = vmatmul.mubr.f32.gmra.mxu0 %v3579
      %v3682 = vpop.f32.mrf.mxu0
      %v3683 = vadd.f32 0.0, %v3682
      %v3684 = vpop.f32.mrf.mxu0
      %3685 = vdwg.mxu0
      %v3686 = vld [vmem:[#allocation4] sm:$0xff]
      %v3687 = vld [vmem:[#allocation4 + $0x8] sm:$0xff]
      %v3688 = vld [vmem:[#allocation4 + $0x10] sm:$0xff]
      %v3689 = vld [vmem:[#allocation4 + $0x18] sm:$0xff]
      %v3690 = vld [vmem:[#allocation4 + $0x20] sm:$0xff]
      %v3691 = vld [vmem:[#allocation4 + $0x28] sm:$0xff]
      %v3692 = vld [vmem:[#allocation4 + $0x30] sm:$0xff]
      %v3693 = vld [vmem:[#allocation4 + $0x38] sm:$0xff]
      %v3694 = vadd.f32 %v3686, %v3648
      %v3695 = vadd.f32 %v3687, %v3653
      %v3696 = vadd.f32 %v3688, %v3658
      %v3697 = vadd.f32 %v3689, %v3663
      %v3698 = vadd.f32 %v3690, %v3668
      %v3699 = vadd.f32 %v3691, %v3673
      %v3700 = vadd.f32 %v3692, %v3678
      %v3701 = vadd.f32 %v3693, %v3683
      %3702 = vst.msk [vmem:[#allocation4] sm:$0xff] %vm406, %v3694
      %3703 = vst.msk [vmem:[#allocation4 + $0x8] sm:$0xff] %vm406, %v3695
      %3704 = vst.msk [vmem:[#allocation4 + $0x10] sm:$0xff] %vm406, %v3696
      %3705 = vst.msk [vmem:[#allocation4 + $0x18] sm:$0xff] %vm406, %v3697
      %3706 = vst.msk [vmem:[#allocation4 + $0x20] sm:$0xff] %vm406, %v3698
      %3707 = vst.msk [vmem:[#allocation4 + $0x28] sm:$0xff] %vm406, %v3699
      %3708 = vst.msk [vmem:[#allocation4 + $0x30] sm:$0xff] %vm406, %v3700
      %3709 = vst.msk [vmem:[#allocation4 + $0x38] sm:$0xff] %vm406, %v3701
      %v3710 = vld [vmem:[%s3383 + $0x2] sm:$0xff]
      %v3711 = vld [vmem:[%s3383 + $0x12] sm:$0xff]
      %v3712 = vld [vmem:[%s3383 + $0x22] sm:$0xff]
      %v3713 = vld [vmem:[%s3383 + $0x32] sm:$0xff]
      %v3714 = vld [vmem:[%s3383 + $0x42] sm:$0xff]
      %v3715 = vld [vmem:[%s3383 + $0x52] sm:$0xff]
      %v3716 = vld [vmem:[%s3383 + $0x62] sm:$0xff]
      %v3717 = vld [vmem:[%s3383 + $0x72] sm:$0xff]
      %s3718 = scalar_lea.vmem %s4, 64
      %v3719 = vld [vmem:[%s3718] sm:$0xff]
      %v3721 = vsel %vm406, %v3710, 0
      %v3724 = vsel %vm406, %v3711, 0
      %v3727 = vsel %vm406, %v3712, 0
      %v3730 = vsel %vm406, %v3713, 0
      %v3733 = vsel %vm406, %v3714, 0
      %v3736 = vsel %vm406, %v3715, 0
      %v3739 = vsel %vm406, %v3716, 0
      %v3742 = vsel %vm406, %v3717, 0
      %3744 = vmatprep.subr.mxu0 0.0
      %3745 = vmatpush1.msra.mxu0 0.0
      %3746 = vmatprep.subr.mxu0 0.0
      %3747 = vmatpush1.msra.mxu0 0.0
      %3748 = vmatprep.subr.mxu0 0.0
      %3749 = vmatpush1.msra.mxu0 0.0
      %3750 = vmatprep.subr.mxu0 0.0
      %3751 = vmatpush1.msra.mxu0 0.0
      %3752 = vmatprep.subr.mxu0 0.0
      %3753 = vmatpush1.msra.mxu0 0.0
      %3754 = vmatprep.subr.mxu0 0.0
      %3755 = vmatpush1.msra.mxu0 0.0
      %3756 = vmatprep.subr.mxu0 0.0
      %3757 = vmatpush1.msra.mxu0 0.0
      %3758 = vmatprep.subr.mxu0 0.0
      %3759 = vmatpush1.msra.mxu0 0.0
      %3760 = vmatprep.subr.mxu0 0.0
      %3761 = vmatpush1.msra.mxu0 0.0
      %3762 = vmatprep.subr.mxu0 0.0
      %3763 = vmatpush1.msra.mxu0 0.0
      %3764 = vmatprep.subr.mxu0 0.0
      %3765 = vmatpush1.msra.mxu0 0.0
      %3766 = vmatprep.subr.mxu0 0.0
      %3767 = vmatpush1.msra.mxu0 0.0
      %3768 = vmatprep.subr.mxu0 0.0
      %3769 = vmatpush1.msra.mxu0 0.0
      %3770 = vmatprep.subr.mxu0 0.0
      %3771 = vmatpush1.msra.mxu0 0.0
      %3772 = vmatprep.subr.mxu0 0.0
      %3773 = vmatpush1.msra.mxu0 0.0
      %3774 = vmatprep.subr.mxu0 0.0
      %3775 = vmatpush1.msra.mxu0 %v3719
      %3776 = vmatprep.subr.mxu0 0.0
      %3777 = vmatpush2.msra.mxu0 0.0
      %3778 = vmatprep.subr.mxu0 0.0
      %3779 = vmatpush2.msra.mxu0 0.0
      %3780 = vmatprep.subr.mxu0 0.0
      %3781 = vmatpush2.msra.mxu0 0.0
      %3782 = vmatprep.subr.mxu0 0.0
      %3783 = vmatpush2.msra.mxu0 0.0
      %3784 = vmatprep.subr.mxu0 0.0
      %3785 = vmatpush2.msra.mxu0 0.0
      %3786 = vmatprep.subr.mxu0 0.0
      %3787 = vmatpush2.msra.mxu0 0.0
      %3788 = vmatprep.subr.mxu0 0.0
      %3789 = vmatpush2.msra.mxu0 0.0
      %3790 = vmatprep.subr.mxu0 0.0
      %3791 = vmatpush2.msra.mxu0 0.0
      %3792 = vmatprep.subr.mxu0 0.0
      %3793 = vmatpush2.msra.mxu0 0.0
      %3794 = vmatprep.subr.mxu0 0.0
      %3795 = vmatpush2.msra.mxu0 0.0
      %3796 = vmatprep.subr.mxu0 0.0
      %3797 = vmatpush2.msra.mxu0 0.0
      %3798 = vmatprep.subr.mxu0 0.0
      %3799 = vmatpush2.msra.mxu0 0.0
      %3800 = vmatprep.subr.mxu0 0.0
      %3801 = vmatpush2.msra.mxu0 0.0
      %3802 = vmatprep.subr.mxu0 0.0
      %3803 = vmatpush2.msra.mxu0 0.0
      %3804 = vmatprep.subr.mxu0 0.0
      %3805 = vmatpush2.msra.mxu0 0.0
      %3806 = vmatprep.subr.mxu0 0.0
      %3807 = vmatpush2.msra.mxu0 0.0
      %3808 = vmatprep.mubr.f32.mxu0 0.0
      %3809 = vmatmul.mubr.f32.gmra.mxu0 %v3721
      %v3810 = vpop.f32.mrf.mxu0
      %v3811 = vadd.f32 0.0, %v3810
      %v3812 = vpop.f32.mrf.mxu0
      %3813 = vmatprep.mubr.f32.mxu0 0.0
      %3814 = vmatmul.mubr.f32.gmra.mxu0 %v3724
      %v3815 = vpop.f32.mrf.mxu0
      %v3816 = vadd.f32 0.0, %v3815
      %v3817 = vpop.f32.mrf.mxu0
      %3818 = vmatprep.mubr.f32.mxu0 0.0
      %3819 = vmatmul.mubr.f32.gmra.mxu0 %v3727
      %v3820 = vpop.f32.mrf.mxu0
      %v3821 = vadd.f32 0.0, %v3820
      %v3822 = vpop.f32.mrf.mxu0
      %3823 = vmatprep.mubr.f32.mxu0 0.0
      %3824 = vmatmul.mubr.f32.gmra.mxu0 %v3730
      %v3825 = vpop.f32.mrf.mxu0
      %v3826 = vadd.f32 0.0, %v3825
      %v3827 = vpop.f32.mrf.mxu0
      %3828 = vmatprep.mubr.f32.mxu0 0.0
      %3829 = vmatmul.mubr.f32.gmra.mxu0 %v3733
      %v3830 = vpop.f32.mrf.mxu0
      %v3831 = vadd.f32 0.0, %v3830
      %v3832 = vpop.f32.mrf.mxu0
      %3833 = vmatprep.mubr.f32.mxu0 0.0
      %3834 = vmatmul.mubr.f32.gmra.mxu0 %v3736
      %v3835 = vpop.f32.mrf.mxu0
      %v3836 = vadd.f32 0.0, %v3835
      %v3837 = vpop.f32.mrf.mxu0
      %3838 = vmatprep.mubr.f32.mxu0 0.0
      %3839 = vmatmul.mubr.f32.gmra.mxu0 %v3739
      %v3840 = vpop.f32.mrf.mxu0
      %v3841 = vadd.f32 0.0, %v3840
      %v3842 = vpop.f32.mrf.mxu0
      %3843 = vmatprep.mubr.f32.mxu0 0.0
      %3844 = vmatmul.mubr.f32.gmra.mxu0 %v3742
      %v3845 = vpop.f32.mrf.mxu0
      %v3846 = vadd.f32 0.0, %v3845
      %v3847 = vpop.f32.mrf.mxu0
      %3848 = vdwg.mxu0
      %v3849 = vld [vmem:[#allocation4] sm:$0xff]
      %v3850 = vld [vmem:[#allocation4 + $0x8] sm:$0xff]
      %v3851 = vld [vmem:[#allocation4 + $0x10] sm:$0xff]
      %v3852 = vld [vmem:[#allocation4 + $0x18] sm:$0xff]
      %v3853 = vld [vmem:[#allocation4 + $0x20] sm:$0xff]
      %v3854 = vld [vmem:[#allocation4 + $0x28] sm:$0xff]
      %v3855 = vld [vmem:[#allocation4 + $0x30] sm:$0xff]
      %v3856 = vld [vmem:[#allocation4 + $0x38] sm:$0xff]
      %v3857 = vadd.f32 %v3849, %v3811
      %v3858 = vadd.f32 %v3850, %v3816
      %v3859 = vadd.f32 %v3851, %v3821
      %v3860 = vadd.f32 %v3852, %v3826
      %v3861 = vadd.f32 %v3853, %v3831
      %v3862 = vadd.f32 %v3854, %v3836
      %v3863 = vadd.f32 %v3855, %v3841
      %v3864 = vadd.f32 %v3856, %v3846
      %3865 = vst.msk [vmem:[#allocation4] sm:$0xff] %vm406, %v3857
      %3866 = vst.msk [vmem:[#allocation4 + $0x8] sm:$0xff] %vm406, %v3858
      %3867 = vst.msk [vmem:[#allocation4 + $0x10] sm:$0xff] %vm406, %v3859
      %3868 = vst.msk [vmem:[#allocation4 + $0x18] sm:$0xff] %vm406, %v3860
      %3869 = vst.msk [vmem:[#allocation4 + $0x20] sm:$0xff] %vm406, %v3861
      %3870 = vst.msk [vmem:[#allocation4 + $0x28] sm:$0xff] %vm406, %v3862
      %3871 = vst.msk [vmem:[#allocation4 + $0x30] sm:$0xff] %vm406, %v3863
      %3872 = vst.msk [vmem:[#allocation4 + $0x38] sm:$0xff] %vm406, %v3864
      %v3873 = vld [vmem:[#allocation4] sm:$0xff]
      %v3874 = vld [vmem:[#allocation4 + $0x8] sm:$0xff]
      %v3875 = vld [vmem:[#allocation4 + $0x10] sm:$0xff]
      %v3876 = vld [vmem:[#allocation4 + $0x18] sm:$0xff]
      %v3877 = vld [vmem:[#allocation4 + $0x20] sm:$0xff]
      %v3878 = vld [vmem:[#allocation4 + $0x28] sm:$0xff]
      %v3879 = vld [vmem:[#allocation4 + $0x30] sm:$0xff]
      %v3880 = vld [vmem:[#allocation4 + $0x38] sm:$0xff]
      %v3881 = vld [vmem:[%s5] sm:$0x1]
      %v3883 = vlaneseq
      %v3884 = vshrl.u32 %v3883, 7
      %v3885 = vsub.s32 0, %v3884
      %v3886 = vrot.slane %v3881, %v3885
      %v3888 = vmul.f32 %v3873, %v3886
      %v3889 = vmul.f32 %v3874, %v3886
      %v3890 = vmul.f32 %v3875, %v3886
      %v3891 = vmul.f32 %v3876, %v3886
      %v3892 = vmul.f32 %v3877, %v3886
      %v3893 = vmul.f32 %v3878, %v3886
      %v3894 = vmul.f32 %v3879, %v3886
      %v3895 = vmul.f32 %v3880, %v3886
      %v3896 = vld [vmem:[%s6] sm:$0x1]
      %v3898 = vlaneseq
      %v3899 = vshrl.u32 %v3898, 7
      %v3900 = vsub.s32 0, %v3899
      %v3901 = vrot.slane %v3896, %v3900
      %v3903 = vadd.f32 %v3888, %v3901
      %v3904 = vadd.f32 %v3889, %v3901
      %v3905 = vadd.f32 %v3890, %v3901
      %v3906 = vadd.f32 %v3891, %v3901
      %v3907 = vadd.f32 %v3892, %v3901
      %v3908 = vadd.f32 %v3893, %v3901
      %v3909 = vadd.f32 %v3894, %v3901
      %v3910 = vadd.f32 %v3895, %v3901
      %v3911 = vadd.f32 %v3903, %v2414
      %v3912 = vadd.f32 %v3904, %v2415
      %v3913 = vadd.f32 %v3905, %v2416
      %v3914 = vadd.f32 %v3906, %v2417
      %v3915 = vadd.f32 %v3907, %v2418
      %v3916 = vadd.f32 %v3908, %v2419
      %v3917 = vadd.f32 %v3909, %v2420
      %v3918 = vadd.f32 %v3910, %v2421
      %v3919 = vmax.f32 %v3911, 0.0
      %v3920 = vmax.f32 %v3912, 0.0
      %v3921 = vmax.f32 %v3913, 0.0
      %v3922 = vmax.f32 %v3914, 0.0
      %v3923 = vmax.f32 %v3915, 0.0
      %v3924 = vmax.f32 %v3916, 0.0
      %v3925 = vmax.f32 %v3917, 0.0
      %v3926 = vmax.f32 %v3918, 0.0
      %3927 = vst.msk [vmem:[%s359] sm:$0xff] %vm406, %v3919
      %3928 = vst.msk [vmem:[%s359 + $0x8] sm:$0xff] %vm406, %v3920
      %3929 = vst.msk [vmem:[%s359 + $0x10] sm:$0xff] %vm406, %v3921
      %3930 = vst.msk [vmem:[%s359 + $0x18] sm:$0xff] %vm406, %v3922
      %3931 = vst.msk [vmem:[%s359 + $0x20] sm:$0xff] %vm406, %v3923
      %3932 = vst.msk [vmem:[%s359 + $0x28] sm:$0xff] %vm406, %v3924
      %3933 = vst.msk [vmem:[%s359 + $0x30] sm:$0xff] %vm406, %v3925
      %3934 = vst.msk [vmem:[%s359 + $0x38] sm:$0xff] %vm406, %v3926
      %p3935 = scmp.lt.s32.totalorder %s21, 1
      %s3936 = scalar_select %p3935, %s21, 1
      %s3937 = smul.addr %s3936, 8
      %s3938 = smul.addr %s3937, 8
      %s3939 = scalar_lea.vmem %s10, %s3938
      // Predicated region
      $region61: #{tpu_custom_call.1} parent=59 // pred_check
        %p3940 = pneg %p254
      $region62: #{tpu_custom_call.1} parent=59 // pred_check_branch
        %3942 = sbr.rel (%p3940) target = $region64
      $region63: #{tpu_custom_call.1} parent=59 // pred_region
        _
      $region64: #{tpu_custom_call.1} parent=59 // pred_fallthru
        _
    $region60: #{tpu_custom_call.1} parent=5 // pred_fallthru
      _
    %p3943 = scmp.le.s32.totalorder 2, %s16
    // Predicated region
    $region65: #{tpu_custom_call.1} parent=5 // pred_check
      %p3944 = pneg %p3943
    $region66: #{tpu_custom_call.1} parent=5 // pred_check_branch
      %3946 = sbr.rel (%p3944) target = $region68
    $region67: #{tpu_custom_call.1} parent=5 // pred_region
      %s3947 = ssub.s32 %s16, 2
      // Predicated region
      $region69: #{tpu_custom_call.1} parent=67 // pred_check
        %p3948 = pneg %p260
      $region70: #{tpu_custom_call.1} parent=67 // pred_check_branch
        %3950 = sbr.rel (%p3948) target = $region72
      $region71: #{tpu_custom_call.1} parent=67 // pred_region
        %p3951 = scmp.lt.s32.totalorder %s22, 1
        %s3952 = scalar_select %p3951, %s22, 1
        %s3953 = smul.addr %s3952, 8
        %s3954 = smul.addr %s3953, 8
        %s3955 = scalar_lea.vmem %s10, %s3954
      $region72: #{tpu_custom_call.1} parent=67 // pred_fallthru
        _
    $region68: #{tpu_custom_call.1} parent=5 // pred_fallthru
      _
  $region6: #{tpu_custom_call.1} parent=0 // loop_footer
    %s20 = sadd.s32 1, %s16
  $region7: #{tpu_custom_call.1} parent=0 // loop_footer_branch
    %15 = sbr.rel target = $region3
  $region8: #{tpu_custom_call.1} parent=0 // loop_exit
    _

</llo_original>
